<compile_context>
chip_gen: v7x
topology: tpu7x:2x2x1
jax: 0.10.0
libtpu: 0.0.40
codegen_flags: <defaults>
</compile_context>

<pallas_src>
import jax
import jax.numpy as jnp
from jax.experimental import pallas as pl
from jax.experimental.pallas import tpu as pltpu


def bottleneck_kernel(x_ref, w1_ref, w2_ref, w3_ref,
                      b1_ref, b2_ref, b3_ref,
                      o_ref, a1pad_ref):
    """One batch tile per grid step.

    x_ref    : (B, H, W, Cin) f32   -- input block
    w1_ref   : (Cin, P)       bf16  -- 1x1 conv, BN1 scale folded in
    w2_ref   : (9P, P)        bf16  -- 3x3 conv, (dy,dx,cin) fused along K,
                                       BN2 scale folded in
    w3_ref   : (P, Cout)      bf16  -- 1x1 conv, BN3 scale folded in
    b*_ref   : (1, C)         f32   -- folded BN biases
    o_ref    : (B, H, W, Cout) f32
    a1pad_ref: (B, H+2, W+2, P) f32 VMEM scratch (zero halo for the 3x3 conv)
    """
    B, H, W, Cin = x_ref.shape
    P = w1_ref.shape[1]
    Cout = w3_ref.shape[1]

    x = x_ref[...]                                  # (B, H, W, Cin) f32
    xf = x.reshape(B * H * W, Cin)

    # --- conv1 (1x1, BN1 scale folded) + bias + relu, bf16 MXU / f32 acc ----
    a1 = jnp.dot(xf.astype(jnp.bfloat16), w1_ref[...],
                 preferred_element_type=jnp.float32)           # (M, P)
    a1 = jnp.maximum(a1 + b1_ref[...], 0.0)

    # --- halo-only zeroing (cheap; interior fully overwritten below) -------
    a1pad_ref[:, 0:1, :, :] = jnp.zeros((B, 1, W + 2, P), jnp.float32)
    a1pad_ref[:, H + 1:H + 2, :, :] = jnp.zeros((B, 1, W + 2, P), jnp.float32)
    a1pad_ref[:, :, 0:1, :] = jnp.zeros((B, H + 2, 1, P), jnp.float32)
    a1pad_ref[:, :, W + 1:W + 2, :] = jnp.zeros((B, H + 2, 1, P), jnp.float32)
    a1pad_ref[:, 1:H + 1, 1:W + 1, :] = a1.reshape(B, H, W, P)

    # --- conv2 (3x3, stride=1, dil=1, pad=1): single matmul with K = 9P ----
    windows = []
    for dy in range(3):                                        # unrolled
        rows = a1pad_ref[:, dy:dy + H, :, :]                   # (B, H, W+2, P)
        for dx in range(3):
            windows.append(rows[:, :, dx:dx + W, :])           # (B, H, W, P)
    patch = jnp.concatenate(windows, axis=-1)                  # (B, H, W, 9P)
    patch = patch.reshape(B * H * W, 9 * P).astype(jnp.bfloat16)
    a2 = jnp.dot(patch, w2_ref[...],
                 preferred_element_type=jnp.float32)           # (M, P)
    a2 = jnp.maximum(a2 + b2_ref[...], 0.0)

    # --- conv3 (1x1, BN3 scale folded) + bias --------------------------------
    a3 = jnp.dot(a2.astype(jnp.bfloat16), w3_ref[...],
                 preferred_element_type=jnp.float32)           # (M, Cout)
    a3 = a3 + b3_ref[...]

    # --- residual add (downsample=None) + final relu, f32 --------------------
    out = jnp.maximum(a3 + xf, 0.0)
    o_ref[...] = out.reshape(B, H, W, Cout).astype(o_ref.dtype)


def _pick_b_tile(N, H, W, C, P, Cout):
    """Largest divisor of N such that the per-step block stays small and the
    matmul M dim (b_tile*H*W) is big enough to fill the MXU pipeline."""
    per_b = (H * W * C * 4 + H * W * Cout * 4
             + (H + 2) * (W + 2) * P * 4 + H * W * 9 * P * 2)
    budget = 12 * 1024 * 1024
    best = 1
    for d in range(1, N + 1):
        if N % d != 0:
            continue
        if d * per_b > budget:
            break
        best = d
        if d * H * W >= 512:
            break
    return best


def bottleneck_forward(x_nchw, w1, w2, w3, s1, b1, s2, b2, s3, b3, b_tile=None):
    """x_nchw: (N, Cin, H, W) f32; w1 (Cin,P); w2 (3,3,P,P) HWIO; w3 (P,Cout);
    s*/b*: 1-D folded BN scale/bias.  Returns (N, Cout, H, W) f32."""
    N, C, H, W = x_nchw.shape
    P = w1.shape[1]
    Cout = w3.shape[1]
    assert Cout == C, "downsample=None requires inplanes == planes * expansion"

    x = jnp.transpose(x_nchw, (0, 2, 3, 1))        # -> NHWC (no host-side pad)

    # Fold BN scale into the conv output channels (f32), then one bf16 cast.
    w1b = (w1 * s1[None, :]).astype(jnp.bfloat16)                     # (Cin, P)
    w2b = (w2 * s2[None, None, None, :]).reshape(9 * P, P).astype(jnp.bfloat16)
    w3b = (w3 * s3[None, :]).astype(jnp.bfloat16)                     # (P, Cout)
    b1k = b1.reshape(1, P).astype(jnp.float32)
    b2k = b2.reshape(1, P).astype(jnp.float32)
    b3k = b3.reshape(1, Cout).astype(jnp.float32)

    if b_tile is None:
        b_tile = _pick_b_tile(N, H, W, C, P, Cout)
    assert N % b_tile == 0
    grid = (N // b_tile,)

    # Advisory cost estimate for the XLA scheduler.
    flops = 2 * N * H * W * (C * P + 9 * P * P + P * Cout)
    bytes_accessed = (x.size * 4 + N * H * W * Cout * 4
                      + (w1b.size + w2b.size + w3b.size) * 2
                      + (2 * P + Cout) * 4)
    cost = pl.CostEstimate(flops=flops, transcendentals=0,
                           bytes_accessed=bytes_accessed)

    # Explicit VMEM budget sized from the per-step block footprint (with
    # slack), capped at 48 MiB so v7x (64 MiB/core) keeps pipelining headroom.
    block_bytes = (b_tile * (H * W * C * 4 + H * W * Cout * 4
                             + (H + 2) * (W + 2) * P * 4 + H * W * 9 * P * 2)
                   + (w1b.size + w2b.size + w3b.size) * 2)
    vmem_limit = int(min(48 * 1024 * 1024,
                         max(32 * 1024 * 1024, 6 * block_bytes)))

    def const_spec(shape):
        nd = len(shape)
        return pl.BlockSpec(shape, lambda n, _nd=nd: (0,) * _nd)

    out = pl.pallas_call(
        bottleneck_kernel,
        out_shape=jax.ShapeDtypeStruct((N, H, W, Cout), x.dtype),
        grid_spec=pltpu.PrefetchScalarGridSpec(
            num_scalar_prefetch=0,
            grid=grid,
            in_specs=[
                pl.BlockSpec((b_tile, H, W, C), lambda n: (n, 0, 0, 0)),
                const_spec(w1b.shape),
                const_spec(w2b.shape),
                const_spec(w3b.shape),
                const_spec(b1k.shape),
                const_spec(b2k.shape),
                const_spec(b3k.shape),
            ],
            out_specs=pl.BlockSpec((b_tile, H, W, Cout),
                                   lambda n: (n, 0, 0, 0)),
            scratch_shapes=[pltpu.VMEM((b_tile, H + 2, W + 2, P), jnp.float32)],
        ),
        compiler_params=pltpu.CompilerParams(
            dimension_semantics=("parallel",),
            vmem_limit_bytes=vmem_limit,
        ),
        cost_estimate=cost,
    )(x, w1b, w2b, w3b, b1k, b2k, b3k)
    return jnp.transpose(out, (0, 3, 1, 2))        # -> NCHW


# ---------------------------- pure-JAX reference -----------------------------
def bottleneck_reference(x_nchw, w1, w2, w3, s1, b1, s2, b2, s3, b3):
    def conv(x, w_hwio, pad):
        return jax.lax.conv_general_dilated(
            x, w_hwio, window_strides=(1, 1), padding=pad,
            dimension_numbers=('NCHW', 'HWIO', 'NCHW'),
            precision=jax.lax.Precision.HIGHEST)

    def bn(x, s, b):
        return x * s.reshape(1, -1, 1, 1) + b.reshape(1, -1, 1, 1)

    relu = lambda v: jnp.maximum(v, 0.0)
    out = relu(bn(conv(x_nchw, w1[None, None], 'VALID'), s1, b1))
    out = relu(bn(conv(out, w2, [(1, 1), (1, 1)]), s2, b2))
    out = bn(conv(out, w3[None, None], 'VALID'), s3, b3)
    return relu(out + x_nchw)


def fold_bn(gamma, beta, mean, var, eps=1e-5):
    scale = gamma / jnp.sqrt(var + eps)
    bias = beta - mean * scale
    return scale, bias


if __name__ == "__main__":
    key = jax.random.PRNGKey(0)
    N, planes = 2, 4
    inplanes = planes * 4          # expansion = 4; downsample=None requires this
    H = W = 16

    ks = jax.random.split(key, 16)
    x = jax.random.normal(ks[0], (N, inplanes, H, W), jnp.float32)

    # conv weights (HWIO for 3x3; (Cin, Cout) for 1x1)
    w1 = 0.1 * jax.random.normal(ks[1], (inplanes, planes), jnp.float32)
    w2 = 0.1 * jax.random.normal(ks[2], (3, 3, planes, planes), jnp.float32)
    w3 = 0.1 * jax.random.normal(ks[3], (planes, inplanes), jnp.float32)

    # BatchNorm params (inference mode), folded to scale/bias
    def make_bn(kg, kb, km, kv, c):
        gamma = 0.5 + jax.random.uniform(kg, (c,), jnp.float32)
        beta = 0.1 * jax.random.normal(kb, (c,), jnp.float32)
        mean = 0.1 * jax.random.normal(km, (c,), jnp.float32)
        var = 0.5 + jax.random.uniform(kv, (c,), jnp.float32)
        return fold_bn(gamma, beta, mean, var)

    s1, b1 = make_bn(ks[4], ks[5], ks[6], ks[7], planes)
    s2, b2 = make_bn(ks[8], ks[9], ks[10], ks[11], planes)
    s3, b3 = make_bn(ks[12], ks[13], ks[14], ks[15], inplanes)

    out = bottleneck_forward(x, w1, w2, w3, s1, b1, s2, b2, s3, b3)
    out = jax.block_until_ready(out)

    ref = bottleneck_reference(x, w1, w2, w3, s1, b1, s2, b2, s3, b3)
    ref = jax.block_until_ready(ref)

    assert out.shape == (N, inplanes, H, W)
    # bf16 MXU operands (BN scale folded into bf16 weights) with f32
    # accumulation vs. a HIGHEST-precision f32 reference -> bf16-level tolerance.
    assert jnp.allclose(out, ref, atol=3e-2, rtol=3e-2), \
        f"max abs err {jnp.max(jnp.abs(out - ref))}"

    # NOTE(perf): the P=4 / C=16 demo shapes are for correctness only; real
    # ResNet stages have channel counts that are multiples of 128, which is
    # where the lane-dense output / single K=9P matmul pay off.
    print("KERNEL_OK")
</pallas_src>

<mosaic_0001>
module attributes {stable_mosaic.version = 11 : i64} {
  func.func @bottleneck_kernel(%arg0: i32, %arg1: memref<2x16x16x16xf32, #tpu.memory_space<vmem>>, %arg2: memref<16x4xbf16, #tpu.memory_space<vmem>>, %arg3: memref<36x4xbf16, #tpu.memory_space<vmem>>, %arg4: memref<4x16xbf16, #tpu.memory_space<vmem>>, %arg5: memref<1x4xf32, #tpu.memory_space<vmem>>, %arg6: memref<1x4xf32, #tpu.memory_space<vmem>>, %arg7: memref<1x16xf32, #tpu.memory_space<vmem>>, %arg8: memref<2x16x16x16xf32, #tpu.memory_space<vmem>>, %arg9: memref<2x18x18x4xf32, #tpu.memory_space<vmem>>) attributes {dimension_semantics = [#tpu.dimension_semantics<parallel>], iteration_bounds = array<i64: 1>, scalar_prefetch = 0 : i64, scratch_operands = 1 : i64, tpu.core_type = #tpu.core_type<tc>, window_params = [{transform_indices = @transform_0, window_bounds = array<i64: 2, 16, 16, 16>}, {pipeline_mode = #tpu.pipeline_mode<synchronous>, transform_indices = @transform_1, window_bounds = array<i64: 16, 4>}, {pipeline_mode = #tpu.pipeline_mode<synchronous>, transform_indices = @transform_2, window_bounds = array<i64: 36, 4>}, {pipeline_mode = #tpu.pipeline_mode<synchronous>, transform_indices = @transform_3, window_bounds = array<i64: 4, 16>}, {pipeline_mode = #tpu.pipeline_mode<synchronous>, transform_indices = @transform_4, window_bounds = array<i64: 1, 4>}, {pipeline_mode = #tpu.pipeline_mode<synchronous>, transform_indices = @transform_5, window_bounds = array<i64: 1, 4>}, {pipeline_mode = #tpu.pipeline_mode<synchronous>, transform_indices = @transform_6, window_bounds = array<i64: 1, 16>}, {transform_indices = @transform_7, window_bounds = array<i64: 2, 16, 16, 16>}]} {
    %c0 = arith.constant 0 : index
    %c0_0 = arith.constant 0 : index
    %c0_1 = arith.constant 0 : index
    %c0_2 = arith.constant 0 : index
    %0 = vector.load %arg1[%c0, %c0_0, %c0_1, %c0_2] : memref<2x16x16x16xf32, #tpu.memory_space<vmem>>, vector<2x16x16x16xf32>
    %1 = vector.shape_cast %0 : vector<2x16x16x16xf32> to vector<512x16xf32>
    %2 = arith.truncf %1 : vector<512x16xf32> to vector<512x16xbf16>
    %c0_3 = arith.constant 0 : index
    %c0_4 = arith.constant 0 : index
    %3 = vector.load %arg2[%c0_3, %c0_4] : memref<16x4xbf16, #tpu.memory_space<vmem>>, vector<16x4xbf16>
    %cst = arith.constant dense<0.000000e+00> : vector<512x4xf32>
    %4 = tpu.matmul %2, %3, %cst {dimension_numbers = #tpu.dot_dimension_numbers<[1], [0], [0], [1], [0, 0, 1, 1], [], []>} : vector<512x16xbf16>, vector<16x4xbf16>, vector<512x4xf32> -> vector<512x4xf32>
    %c0_5 = arith.constant 0 : index
    %c0_6 = arith.constant 0 : index
    %5 = vector.load %arg5[%c0_5, %c0_6] : memref<1x4xf32, #tpu.memory_space<vmem>>, vector<1x4xf32>
    %6 = vector.broadcast %5 : vector<1x4xf32> to vector<512x4xf32>
    %7 = arith.addf %4, %6 : vector<512x4xf32>
    %cst_7 = arith.constant 0.000000e+00 : f32
    %8 = vector.broadcast %cst_7 : f32 to vector<512x4xf32>
    %9 = arith.maximumf %7, %8 : vector<512x4xf32>
    %cst_8 = arith.constant 0.000000e+00 : f32
    %10 = vector.broadcast %cst_8 : f32 to vector<2x1x18x4xf32>
    %c0_9 = arith.constant 0 : index
    %c0_10 = arith.constant 0 : index
    %c0_11 = arith.constant 0 : index
    %c0_12 = arith.constant 0 : index
    %11 = vector.load %arg9[%c0_9, %c0_10, %c0_11, %c0_12] : memref<2x18x18x4xf32, #tpu.memory_space<vmem>>, vector<2x1x18x4xf32>
    tpu.vector_store %arg9[%c0_9, %c0_10, %c0_11, %c0_12], %10 {strides = array<i32>} : memref<2x18x18x4xf32, #tpu.memory_space<vmem>>, vector<2x1x18x4xf32>,
    %cst_13 = arith.constant 0.000000e+00 : f32
    %12 = vector.broadcast %cst_13 : f32 to vector<2x1x18x4xf32>
    %c0_14 = arith.constant 0 : index
    %c17 = arith.constant 17 : index
    %c0_15 = arith.constant 0 : index
    %c0_16 = arith.constant 0 : index
    %13 = vector.load %arg9[%c0_14, %c17, %c0_15, %c0_16] : memref<2x18x18x4xf32, #tpu.memory_space<vmem>>, vector<2x1x18x4xf32>
    tpu.vector_store %arg9[%c0_14, %c17, %c0_15, %c0_16], %12 {strides = array<i32>} : memref<2x18x18x4xf32, #tpu.memory_space<vmem>>, vector<2x1x18x4xf32>,
    %cst_17 = arith.constant 0.000000e+00 : f32
    %14 = vector.broadcast %cst_17 : f32 to vector<2x18x1x4xf32>
    %c0_18 = arith.constant 0 : index
    %c0_19 = arith.constant 0 : index
    %c0_20 = arith.constant 0 : index
    %c0_21 = arith.constant 0 : index
    %15 = vector.load %arg9[%c0_18, %c0_19, %c0_20, %c0_21] : memref<2x18x18x4xf32, #tpu.memory_space<vmem>>, vector<2x18x1x4xf32>
    tpu.vector_store %arg9[%c0_18, %c0_19, %c0_20, %c0_21], %14 {strides = array<i32>} : memref<2x18x18x4xf32, #tpu.memory_space<vmem>>, vector<2x18x1x4xf32>,
    %cst_22 = arith.constant 0.000000e+00 : f32
    %16 = vector.broadcast %cst_22 : f32 to vector<2x18x1x4xf32>
    %c0_23 = arith.constant 0 : index
    %c0_24 = arith.constant 0 : index
    %c17_25 = arith.constant 17 : index
    %c0_26 = arith.constant 0 : index
    %17 = vector.load %arg9[%c0_23, %c0_24, %c17_25, %c0_26] : memref<2x18x18x4xf32, #tpu.memory_space<vmem>>, vector<2x18x1x4xf32>
    tpu.vector_store %arg9[%c0_23, %c0_24, %c17_25, %c0_26], %16 {strides = array<i32>} : memref<2x18x18x4xf32, #tpu.memory_space<vmem>>, vector<2x18x1x4xf32>,
    %18 = vector.shape_cast %9 : vector<512x4xf32> to vector<2x16x16x4xf32>
    %c0_27 = arith.constant 0 : index
    %c1 = arith.constant 1 : index
    %c1_28 = arith.constant 1 : index
    %c0_29 = arith.constant 0 : index
    %19 = vector.load %arg9[%c0_27, %c1, %c1_28, %c0_29] : memref<2x18x18x4xf32, #tpu.memory_space<vmem>>, vector<2x16x16x4xf32>
    tpu.vector_store %arg9[%c0_27, %c1, %c1_28, %c0_29], %18 {strides = array<i32>} : memref<2x18x18x4xf32, #tpu.memory_space<vmem>>, vector<2x16x16x4xf32>,
    %c0_30 = arith.constant 0 : index
    %c0_31 = arith.constant 0 : index
    %c0_32 = arith.constant 0 : index
    %c0_33 = arith.constant 0 : index
    %20 = vector.load %arg9[%c0_30, %c0_31, %c0_32, %c0_33] : memref<2x18x18x4xf32, #tpu.memory_space<vmem>>, vector<2x16x18x4xf32>
    %21 = vector.extract_strided_slice %20 {offsets = [0, 0, 0, 0], sizes = [2, 16, 16, 4], strides = [1, 1, 1, 1]} : vector<2x16x18x4xf32> to vector<2x16x16x4xf32>
    %22 = vector.extract_strided_slice %20 {offsets = [0, 0, 1, 0], sizes = [2, 16, 16, 4], strides = [1, 1, 1, 1]} : vector<2x16x18x4xf32> to vector<2x16x16x4xf32>
    %23 = vector.extract_strided_slice %20 {offsets = [0, 0, 2, 0], sizes = [2, 16, 16, 4], strides = [1, 1, 1, 1]} : vector<2x16x18x4xf32> to vector<2x16x16x4xf32>
    %c0_34 = arith.constant 0 : index
    %c1_35 = arith.constant 1 : index
    %c0_36 = arith.constant 0 : index
    %c0_37 = arith.constant 0 : index
    %24 = vector.load %arg9[%c0_34, %c1_35, %c0_36, %c0_37] : memref<2x18x18x4xf32, #tpu.memory_space<vmem>>, vector<2x16x18x4xf32>
    %25 = vector.extract_strided_slice %24 {offsets = [0, 0, 0, 0], sizes = [2, 16, 16, 4], strides = [1, 1, 1, 1]} : vector<2x16x18x4xf32> to vector<2x16x16x4xf32>
    %26 = vector.extract_strided_slice %24 {offsets = [0, 0, 1, 0], sizes = [2, 16, 16, 4], strides = [1, 1, 1, 1]} : vector<2x16x18x4xf32> to vector<2x16x16x4xf32>
    %27 = vector.extract_strided_slice %24 {offsets = [0, 0, 2, 0], sizes = [2, 16, 16, 4], strides = [1, 1, 1, 1]} : vector<2x16x18x4xf32> to vector<2x16x16x4xf32>
    %c0_38 = arith.constant 0 : index
    %c2 = arith.constant 2 : index
    %c0_39 = arith.constant 0 : index
    %c0_40 = arith.constant 0 : index
    %28 = vector.load %arg9[%c0_38, %c2, %c0_39, %c0_40] : memref<2x18x18x4xf32, #tpu.memory_space<vmem>>, vector<2x16x18x4xf32>
    %29 = vector.extract_strided_slice %28 {offsets = [0, 0, 0, 0], sizes = [2, 16, 16, 4], strides = [1, 1, 1, 1]} : vector<2x16x18x4xf32> to vector<2x16x16x4xf32>
    %30 = vector.extract_strided_slice %28 {offsets = [0, 0, 1, 0], sizes = [2, 16, 16, 4], strides = [1, 1, 1, 1]} : vector<2x16x18x4xf32> to vector<2x16x16x4xf32>
    %31 = vector.extract_strided_slice %28 {offsets = [0, 0, 2, 0], sizes = [2, 16, 16, 4], strides = [1, 1, 1, 1]} : vector<2x16x18x4xf32> to vector<2x16x16x4xf32>
    %32 = tpu.concatenate %21, %22, %23, %25, %26, %27, %29, %30, %31 in 3 : vector<2x16x16x4xf32>, vector<2x16x16x4xf32>, vector<2x16x16x4xf32>, vector<2x16x16x4xf32>, vector<2x16x16x4xf32>, vector<2x16x16x4xf32>, vector<2x16x16x4xf32>, vector<2x16x16x4xf32>, vector<2x16x16x4xf32> -> vector<2x16x16x36xf32>
    %33 = vector.shape_cast %32 : vector<2x16x16x36xf32> to vector<512x36xf32>
    %34 = arith.truncf %33 : vector<512x36xf32> to vector<512x36xbf16>
    %c0_41 = arith.constant 0 : index
    %c0_42 = arith.constant 0 : index
    %35 = vector.load %arg3[%c0_41, %c0_42] : memref<36x4xbf16, #tpu.memory_space<vmem>>, vector<36x4xbf16>
    %cst_43 = arith.constant dense<0.000000e+00> : vector<512x4xf32>
    %36 = tpu.matmul %34, %35, %cst_43 {dimension_numbers = #tpu.dot_dimension_numbers<[1], [0], [0], [1], [0, 0, 1, 1], [], []>} : vector<512x36xbf16>, vector<36x4xbf16>, vector<512x4xf32> -> vector<512x4xf32>
    %c0_44 = arith.constant 0 : index
    %c0_45 = arith.constant 0 : index
    %37 = vector.load %arg6[%c0_44, %c0_45] : memref<1x4xf32, #tpu.memory_space<vmem>>, vector<1x4xf32>
    %38 = vector.broadcast %37 : vector<1x4xf32> to vector<512x4xf32>
    %39 = arith.addf %36, %38 : vector<512x4xf32>
    %cst_46 = arith.constant 0.000000e+00 : f32
    %40 = vector.broadcast %cst_46 : f32 to vector<512x4xf32>
    %41 = arith.maximumf %39, %40 : vector<512x4xf32>
    %42 = arith.truncf %41 : vector<512x4xf32> to vector<512x4xbf16>
    %c0_47 = arith.constant 0 : index
    %c0_48 = arith.constant 0 : index
    %43 = vector.load %arg4[%c0_47, %c0_48] : memref<4x16xbf16, #tpu.memory_space<vmem>>, vector<4x16xbf16>
    %cst_49 = arith.constant dense<0.000000e+00> : vector<512x16xf32>
    %44 = tpu.matmul %42, %43, %cst_49 {dimension_numbers = #tpu.dot_dimension_numbers<[1], [0], [0], [1], [0, 0, 1, 1], [], []>} : vector<512x4xbf16>, vector<4x16xbf16>, vector<512x16xf32> -> vector<512x16xf32>
    %c0_50 = arith.constant 0 : index
    %c0_51 = arith.constant 0 : index
    %45 = vector.load %arg7[%c0_50, %c0_51] : memref<1x16xf32, #tpu.memory_space<vmem>>, vector<1x16xf32>
    %46 = vector.broadcast %45 : vector<1x16xf32> to vector<512x16xf32>
    %47 = arith.addf %44, %46 : vector<512x16xf32>
    %48 = arith.addf %47, %1 : vector<512x16xf32>
    %cst_52 = arith.constant 0.000000e+00 : f32
    %49 = vector.broadcast %cst_52 : f32 to vector<512x16xf32>
    %50 = arith.maximumf %48, %49 : vector<512x16xf32>
    %51 = vector.shape_cast %50 : vector<512x16xf32> to vector<2x16x16x16xf32>
    %c0_53 = arith.constant 0 : index
    %c0_54 = arith.constant 0 : index
    %c0_55 = arith.constant 0 : index
    %c0_56 = arith.constant 0 : index
    %52 = vector.load %arg8[%c0_53, %c0_54, %c0_55, %c0_56] : memref<2x16x16x16xf32, #tpu.memory_space<vmem>>, vector<2x16x16x16xf32>
    tpu.vector_store %arg8[%c0_53, %c0_54, %c0_55, %c0_56], %51 {strides = array<i32>} : memref<2x16x16x16xf32, #tpu.memory_space<vmem>>, vector<2x16x16x16xf32>,
    return
  }
  func.func @transform_0(%arg0: i32) -> (i32, i32, i32, i32) {
    %c0_i32 = arith.constant 0 : i32
    %c0_i32_0 = arith.constant 0 : i32
    %c0_i32_1 = arith.constant 0 : i32
    %c0_i32_2 = arith.constant 0 : i32
    return %arg0, %c0_i32, %c0_i32_0, %c0_i32_1 : i32, i32, i32, i32
  }
  func.func @transform_1(%arg0: i32) -> (i32, i32) {
    %c0_i32 = arith.constant 0 : i32
    %c0_i32_0 = arith.constant 0 : i32
    %c0_i32_1 = arith.constant 0 : i32
    return %c0_i32, %c0_i32_0 : i32, i32
  }
  func.func @transform_2(%arg0: i32) -> (i32, i32) {
    %c0_i32 = arith.constant 0 : i32
    %c0_i32_0 = arith.constant 0 : i32
    %c0_i32_1 = arith.constant 0 : i32
    return %c0_i32, %c0_i32_0 : i32, i32
  }
  func.func @transform_3(%arg0: i32) -> (i32, i32) {
    %c0_i32 = arith.constant 0 : i32
    %c0_i32_0 = arith.constant 0 : i32
    %c0_i32_1 = arith.constant 0 : i32
    return %c0_i32, %c0_i32_0 : i32, i32
  }
  func.func @transform_4(%arg0: i32) -> (i32, i32) {
    %c0_i32 = arith.constant 0 : i32
    %c0_i32_0 = arith.constant 0 : i32
    %c0_i32_1 = arith.constant 0 : i32
    return %c0_i32, %c0_i32_0 : i32, i32
  }
  func.func @transform_5(%arg0: i32) -> (i32, i32) {
    %c0_i32 = arith.constant 0 : i32
    %c0_i32_0 = arith.constant 0 : i32
    %c0_i32_1 = arith.constant 0 : i32
    return %c0_i32, %c0_i32_0 : i32, i32
  }
  func.func @transform_6(%arg0: i32) -> (i32, i32) {
    %c0_i32 = arith.constant 0 : i32
    %c0_i32_0 = arith.constant 0 : i32
    %c0_i32_1 = arith.constant 0 : i32
    return %c0_i32, %c0_i32_0 : i32, i32
  }
  func.func @transform_7(%arg0: i32) -> (i32, i32, i32, i32) {
    %c0_i32 = arith.constant 0 : i32
    %c0_i32_0 = arith.constant 0 : i32
    %c0_i32_1 = arith.constant 0 : i32
    %c0_i32_2 = arith.constant 0 : i32
    return %arg0, %c0_i32, %c0_i32_0, %c0_i32_1 : i32, i32, i32, i32
  }
}

</mosaic_0001>

<llo_original>
// kernel: tpu_custom_call.1
$region0: #{tpu_custom_call.1}
  #allocation0 [shape = 'u32[]', space=smem, size = 0x4, offset = 0x4, fixed_abs, tag = 'smem constant byte address 0x4 - core index']
  #allocation1 [shape = 'u32[144,128]{1,0:T(1,128)}', space=vmem, size = 0x12000, scoped, tag = 'internal scratch']
  #allocation2 [shape = 'f32[2,18,18,4]{3,2,1,0:T(8,128)}', space=vmem, size = 0x6c000, scoped, tag = 'scratch operand']
  %s0 = inlined_call_operand.hbm [shape: f32[2,16,16,16], index: 0, kind: input, shape index: {}]
  %s1 = inlined_call_operand.vmem [shape: bf16[16,4], index: 1, kind: input, shape index: {}]
  %s2 = inlined_call_operand.vmem [shape: bf16[36,4], index: 2, kind: input, shape index: {}]
  %s3 = inlined_call_operand.vmem [shape: bf16[4,16], index: 3, kind: input, shape index: {}]
  %s4 = inlined_call_operand.vmem [shape: f32[1,4], index: 4, kind: input, shape index: {}]
  %s5 = inlined_call_operand.vmem [shape: f32[1,4], index: 5, kind: input, shape index: {}]
  %s6 = inlined_call_operand.vmem [shape: f32[1,16], index: 6, kind: input, shape index: {}]
  %s7 = inlined_call_operand.hbm [shape: f32[2,16,16,16], index: 7, kind: output, shape index: {}]
  %s8 = sld [smem:[#allocation0]]
  $region42: #{tpu_custom_call.1} parent=0
    _
  %s10 = ssub.s32 1, %s8
  %s11 = scalar_select 0, %s10, %s8
  $region1: #{tpu_custom_call.1} parent=0
    #allocation3 [shape = 'u8[262144]{0}', space=vmem, size = 0x40000, scoped, tag = 'input window, operand 0, single buffered']
    #allocation4 [shape = 's32[1]{0}', space=sflag, size = 0x4, scoped, tag = 'scoped memory for tpu_custom_call.1']
    #allocation5 [shape = 's32[1]{0}', space=sflag, size = 0x4, scoped, tag = 'scoped memory for tpu_custom_call.1']
    #allocation6 [shape = 'u8[262144]{0}', space=vmem, size = 0x40000, scoped, tag = 'output window, operand 0, single buffered']
    %12 = vsyncpa [#allocation4], 0
    %13 = vsyncpa [#allocation5], 0
    // Predicated region
    $region2: #{tpu_custom_call.1} parent=1 // pred_check
      _
    $region3: #{tpu_custom_call.1} parent=1 // pred_check_branch
      %15 = sbr.rel (0) target = $region5
    $region4: #{tpu_custom_call.1} parent=1 // pred_region
      %s17 = ssub.s32 8192, 8192
      %18 = vsyncadd [#allocation4], %s17
      %s19 = sshll.u32 [#allocation3], 4
      %s20 = int_to_ptr.vmem [resolvable:$true] %s19
      %25 = dma.hbm_to_vmem [thread:$0]  %s0, 8192, %s20, [#allocation4], 128, 128, 8
    $region5: #{tpu_custom_call.1} parent=1 // pred_fallthru
      _
    // Predicated region
    $region6: #{tpu_custom_call.1} parent=1 // pred_check
      _
    $region7: #{tpu_custom_call.1} parent=1 // pred_check_branch
      %27 = sbr.rel (0) target = $region9
    $region8: #{tpu_custom_call.1} parent=1 // pred_region
      _
    $region9: #{tpu_custom_call.1} parent=1 // pred_fallthru
      _
    // Predicated region
    $region10: #{tpu_custom_call.1} parent=1 // pred_check
      _
    $region11: #{tpu_custom_call.1} parent=1 // pred_check_branch
      %29 = sbr.rel (0) target = $region13
    $region12: #{tpu_custom_call.1} parent=1 // pred_region
      _
    $region13: #{tpu_custom_call.1} parent=1 // pred_fallthru
      _
    // Predicated region
    $region14: #{tpu_custom_call.1} parent=1 // pred_check
      _
    $region15: #{tpu_custom_call.1} parent=1 // pred_check_branch
      %31 = sbr.rel (0) target = $region17
    $region16: #{tpu_custom_call.1} parent=1 // pred_region
      _
    $region17: #{tpu_custom_call.1} parent=1 // pred_fallthru
      _
    // Predicated region
    $region18: #{tpu_custom_call.1} parent=1 // pred_check
      _
    $region19: #{tpu_custom_call.1} parent=1 // pred_check_branch
      %33 = sbr.rel (0) target = $region21
    $region20: #{tpu_custom_call.1} parent=1 // pred_region
      _
    $region21: #{tpu_custom_call.1} parent=1 // pred_fallthru
      _
    // Predicated region
    $region22: #{tpu_custom_call.1} parent=1 // pred_check
      _
    $region23: #{tpu_custom_call.1} parent=1 // pred_check_branch
      %35 = sbr.rel (0) target = $region25
    $region24: #{tpu_custom_call.1} parent=1 // pred_region
      _
    $region25: #{tpu_custom_call.1} parent=1 // pred_fallthru
      _
    // Predicated region
    $region26: #{tpu_custom_call.1} parent=1 // pred_check
      _
    $region27: #{tpu_custom_call.1} parent=1 // pred_check_branch
      %37 = sbr.rel (0) target = $region29
    $region28: #{tpu_custom_call.1} parent=1 // pred_region
      _
    $region29: #{tpu_custom_call.1} parent=1 // pred_fallthru
      _
    // Predicated region
    $region30: #{tpu_custom_call.1} parent=1 // pred_check
      _
    $region31: #{tpu_custom_call.1} parent=1 // pred_check_branch
      %39 = sbr.rel (0) target = $region33
    $region32: #{tpu_custom_call.1} parent=1 // pred_region
      %40 = dma.done [#allocation4], 8192
    $region33: #{tpu_custom_call.1} parent=1 // pred_fallthru
      _
    %v42 = vld [vmem:[#allocation3] sm:$0xff]
    %v43 = vld [vmem:[#allocation3 + $0x8] sm:$0xff]
    %v44 = vld [vmem:[#allocation3 + $0x10] sm:$0xff]
    %v45 = vld [vmem:[#allocation3 + $0x18] sm:$0xff]
    %v46 = vld [vmem:[#allocation3 + $0x20] sm:$0xff]
    %v47 = vld [vmem:[#allocation3 + $0x28] sm:$0xff]
    %v48 = vld [vmem:[#allocation3 + $0x30] sm:$0xff]
    %v49 = vld [vmem:[#allocation3 + $0x38] sm:$0xff]
    %v50 = vld [vmem:[#allocation3 + $0x40] sm:$0xff]
    %v51 = vld [vmem:[#allocation3 + $0x48] sm:$0xff]
    %v52 = vld [vmem:[#allocation3 + $0x50] sm:$0xff]
    %v53 = vld [vmem:[#allocation3 + $0x58] sm:$0xff]
    %v54 = vld [vmem:[#allocation3 + $0x60] sm:$0xff]
    %v55 = vld [vmem:[#allocation3 + $0x68] sm:$0xff]
    %v56 = vld [vmem:[#allocation3 + $0x70] sm:$0xff]
    %v57 = vld [vmem:[#allocation3 + $0x78] sm:$0xff]
    %v58 = vld [vmem:[#allocation3 + $0x80] sm:$0xff]
    %v59 = vld [vmem:[#allocation3 + $0x88] sm:$0xff]
    %v60 = vld [vmem:[#allocation3 + $0x90] sm:$0xff]
    %v61 = vld [vmem:[#allocation3 + $0x98] sm:$0xff]
    %v62 = vld [vmem:[#allocation3 + $0xa0] sm:$0xff]
    %v63 = vld [vmem:[#allocation3 + $0xa8] sm:$0xff]
    %v64 = vld [vmem:[#allocation3 + $0xb0] sm:$0xff]
    %v65 = vld [vmem:[#allocation3 + $0xb8] sm:$0xff]
    %v66 = vld [vmem:[#allocation3 + $0xc0] sm:$0xff]
    %v67 = vld [vmem:[#allocation3 + $0xc8] sm:$0xff]
    %v68 = vld [vmem:[#allocation3 + $0xd0] sm:$0xff]
    %v69 = vld [vmem:[#allocation3 + $0xd8] sm:$0xff]
    %v70 = vld [vmem:[#allocation3 + $0xe0] sm:$0xff]
    %v71 = vld [vmem:[#allocation3 + $0xe8] sm:$0xff]
    %v72 = vld [vmem:[#allocation3 + $0xf0] sm:$0xff]
    %v73 = vld [vmem:[#allocation3 + $0xf8] sm:$0xff]
    %v74 = vld [vmem:[#allocation3 + $0x100] sm:$0xff]
    %v75 = vld [vmem:[#allocation3 + $0x108] sm:$0xff]
    %v76 = vld [vmem:[#allocation3 + $0x110] sm:$0xff]
    %v77 = vld [vmem:[#allocation3 + $0x118] sm:$0xff]
    %v78 = vld [vmem:[#allocation3 + $0x120] sm:$0xff]
    %v79 = vld [vmem:[#allocation3 + $0x128] sm:$0xff]
    %v80 = vld [vmem:[#allocation3 + $0x130] sm:$0xff]
    %v81 = vld [vmem:[#allocation3 + $0x138] sm:$0xff]
    %v82 = vld [vmem:[#allocation3 + $0x140] sm:$0xff]
    %v83 = vld [vmem:[#allocation3 + $0x148] sm:$0xff]
    %v84 = vld [vmem:[#allocation3 + $0x150] sm:$0xff]
    %v85 = vld [vmem:[#allocation3 + $0x158] sm:$0xff]
    %v86 = vld [vmem:[#allocation3 + $0x160] sm:$0xff]
    %v87 = vld [vmem:[#allocation3 + $0x168] sm:$0xff]
    %v88 = vld [vmem:[#allocation3 + $0x170] sm:$0xff]
    %v89 = vld [vmem:[#allocation3 + $0x178] sm:$0xff]
    %v90 = vld [vmem:[#allocation3 + $0x180] sm:$0xff]
    %v91 = vld [vmem:[#allocation3 + $0x188] sm:$0xff]
    %v92 = vld [vmem:[#allocation3 + $0x190] sm:$0xff]
    %v93 = vld [vmem:[#allocation3 + $0x198] sm:$0xff]
    %v94 = vld [vmem:[#allocation3 + $0x1a0] sm:$0xff]
    %v95 = vld [vmem:[#allocation3 + $0x1a8] sm:$0xff]
    %v96 = vld [vmem:[#allocation3 + $0x1b0] sm:$0xff]
    %v97 = vld [vmem:[#allocation3 + $0x1b8] sm:$0xff]
    %v98 = vld [vmem:[#allocation3 + $0x1c0] sm:$0xff]
    %v99 = vld [vmem:[#allocation3 + $0x1c8] sm:$0xff]
    %v100 = vld [vmem:[#allocation3 + $0x1d0] sm:$0xff]
    %v101 = vld [vmem:[#allocation3 + $0x1d8] sm:$0xff]
    %v102 = vld [vmem:[#allocation3 + $0x1e0] sm:$0xff]
    %v103 = vld [vmem:[#allocation3 + $0x1e8] sm:$0xff]
    %v104 = vld [vmem:[#allocation3 + $0x1f0] sm:$0xff]
    %v105 = vld [vmem:[#allocation3 + $0x1f8] sm:$0xff]
    %v106 = vpack.c.bf16 %v43, %v42
    %v107 = vpack.c.bf16 %v45, %v44
    %v108 = vpack.c.bf16 %v47, %v46
    %v109 = vpack.c.bf16 %v49, %v48
    %v110 = vpack.c.bf16 %v51, %v50
    %v111 = vpack.c.bf16 %v53, %v52
    %v112 = vpack.c.bf16 %v55, %v54
    %v113 = vpack.c.bf16 %v57, %v56
    %v114 = vpack.c.bf16 %v59, %v58
    %v115 = vpack.c.bf16 %v61, %v60
    %v116 = vpack.c.bf16 %v63, %v62
    %v117 = vpack.c.bf16 %v65, %v64
    %v118 = vpack.c.bf16 %v67, %v66
    %v119 = vpack.c.bf16 %v69, %v68
    %v120 = vpack.c.bf16 %v71, %v70
    %v121 = vpack.c.bf16 %v73, %v72
    %v122 = vpack.c.bf16 %v75, %v74
    %v123 = vpack.c.bf16 %v77, %v76
    %v124 = vpack.c.bf16 %v79, %v78
    %v125 = vpack.c.bf16 %v81, %v80
    %v126 = vpack.c.bf16 %v83, %v82
    %v127 = vpack.c.bf16 %v85, %v84
    %v128 = vpack.c.bf16 %v87, %v86
    %v129 = vpack.c.bf16 %v89, %v88
    %v130 = vpack.c.bf16 %v91, %v90
    %v131 = vpack.c.bf16 %v93, %v92
    %v132 = vpack.c.bf16 %v95, %v94
    %v133 = vpack.c.bf16 %v97, %v96
    %v134 = vpack.c.bf16 %v99, %v98
    %v135 = vpack.c.bf16 %v101, %v100
    %v136 = vpack.c.bf16 %v103, %v102
    %v137 = vpack.c.bf16 %v105, %v104
    %v138 = vld [vmem:[%s1] sm:$0xf]
    %v139 = vld [vmem:[%s1 + $0x4] sm:$0xf]
    %v140 = vld [vmem:[%s4] sm:$0x1]
    %v142 = vlaneseq
    %v143 = vshrl.u32 %v142, 7
    %v144 = vsub.s32 0, %v143
    %v145 = vrot.slane %v140, %v144
    %v149 = vunpack.c.l.b16 %v138
    %v150 = vunpack.c.l.b16 %v139
    %v151 = vpack.c.b16 %v150, %v149
    %vm153 = vcmask 130048
    %v155 = vsel %vm153, %v106, 0
    %v158 = vsel %vm153, %v107, 0
    %v161 = vsel %vm153, %v108, 0
    %v164 = vsel %vm153, %v109, 0
    %v167 = vsel %vm153, %v110, 0
    %v170 = vsel %vm153, %v111, 0
    %v173 = vsel %vm153, %v112, 0
    %v176 = vsel %vm153, %v113, 0
    %v179 = vsel %vm153, %v114, 0
    %v182 = vsel %vm153, %v115, 0
    %v185 = vsel %vm153, %v116, 0
    %v188 = vsel %vm153, %v117, 0
    %v191 = vsel %vm153, %v118, 0
    %v194 = vsel %vm153, %v119, 0
    %v197 = vsel %vm153, %v120, 0
    %v200 = vsel %vm153, %v121, 0
    %v203 = vsel %vm153, %v122, 0
    %v206 = vsel %vm153, %v123, 0
    %v209 = vsel %vm153, %v124, 0
    %v212 = vsel %vm153, %v125, 0
    %v215 = vsel %vm153, %v126, 0
    %v218 = vsel %vm153, %v127, 0
    %v221 = vsel %vm153, %v128, 0
    %v224 = vsel %vm153, %v129, 0
    %v227 = vsel %vm153, %v130, 0
    %v230 = vsel %vm153, %v131, 0
    %v233 = vsel %vm153, %v132, 0
    %v236 = vsel %vm153, %v133, 0
    %v239 = vsel %vm153, %v134, 0
    %v242 = vsel %vm153, %v135, 0
    %v245 = vsel %vm153, %v136, 0
    %v248 = vsel %vm153, %v137, 0
    %250 = vmatprep.subr.bf16.mxu0 0
    %251 = vmatpush1.bf16.msra.mxu0 %v151
    %252 = vmatprep.subr.bf16.mxu0 0
    %253 = vmatpush1.bf16.msra.mxu0 0
    %254 = vmatprep.subr.bf16.mxu0 0
    %255 = vmatpush1.bf16.msra.mxu0 0
    %256 = vmatprep.subr.bf16.mxu0 0
    %257 = vmatpush1.bf16.msra.mxu0 0
    %258 = vmatprep.subr.bf16.mxu0 0
    %259 = vmatpush1.bf16.msra.mxu0 0
    %260 = vmatprep.subr.bf16.mxu0 0
    %261 = vmatpush1.bf16.msra.mxu0 0
    %262 = vmatprep.subr.bf16.mxu0 0
    %263 = vmatpush1.bf16.msra.mxu0 0
    %264 = vmatprep.subr.bf16.mxu0 0
    %265 = vmatpush1.bf16.msra.mxu0 0
    %266 = vmatprep.subr.bf16.mxu0 0
    %267 = vmatpush1.bf16.msra.mxu0 0
    %268 = vmatprep.subr.bf16.mxu0 0
    %269 = vmatpush1.bf16.msra.mxu0 0
    %270 = vmatprep.subr.bf16.mxu0 0
    %271 = vmatpush1.bf16.msra.mxu0 0
    %272 = vmatprep.subr.bf16.mxu0 0
    %273 = vmatpush1.bf16.msra.mxu0 0
    %274 = vmatprep.subr.bf16.mxu0 0
    %275 = vmatpush1.bf16.msra.mxu0 0
    %276 = vmatprep.subr.bf16.mxu0 0
    %277 = vmatpush1.bf16.msra.mxu0 0
    %278 = vmatprep.subr.bf16.mxu0 0
    %279 = vmatpush1.bf16.msra.mxu0 0
    %280 = vmatprep.subr.bf16.mxu0 0
    %281 = vmatpush1.bf16.msra.mxu0 0
    %282 = vmatprep.mubr.bf16.mxu0 0
    %283 = vmatmul.mubr.bf16.gmra.mrb[0].mxu0 %v155
    %v284 = vpop.f32.mrb[0].mxu0
    %v285 = vadd.f32 %v145, %v284
    %v286 = vpop.f32.mrb[0].mxu0
    %v287 = vpop.f32.mrb[0].mxu0
    %v288 = vadd.f32 %v145, %v287
    %v289 = vpop.f32.mrb[0].mxu0
    %290 = vmatprep.mubr.bf16.mxu0 0
    %291 = vmatmul.mubr.bf16.gmra.mrb[0].mxu0 %v158
    %v292 = vpop.f32.mrb[0].mxu0
    %v293 = vadd.f32 %v145, %v292
    %v294 = vpop.f32.mrb[0].mxu0
    %v295 = vpop.f32.mrb[0].mxu0
    %v296 = vadd.f32 %v145, %v295
    %v297 = vpop.f32.mrb[0].mxu0
    %298 = vmatprep.mubr.bf16.mxu0 0
    %299 = vmatmul.mubr.bf16.gmra.mrb[0].mxu0 %v161
    %v300 = vpop.f32.mrb[0].mxu0
    %v301 = vadd.f32 %v145, %v300
    %v302 = vpop.f32.mrb[0].mxu0
    %v303 = vpop.f32.mrb[0].mxu0
    %v304 = vadd.f32 %v145, %v303
    %v305 = vpop.f32.mrb[0].mxu0
    %306 = vmatprep.mubr.bf16.mxu0 0
    %307 = vmatmul.mubr.bf16.gmra.mrb[0].mxu0 %v164
    %v308 = vpop.f32.mrb[0].mxu0
    %v309 = vadd.f32 %v145, %v308
    %v310 = vpop.f32.mrb[0].mxu0
    %v311 = vpop.f32.mrb[0].mxu0
    %v312 = vadd.f32 %v145, %v311
    %v313 = vpop.f32.mrb[0].mxu0
    %314 = vmatprep.mubr.bf16.mxu0 0
    %315 = vmatmul.mubr.bf16.gmra.mrb[0].mxu0 %v167
    %v316 = vpop.f32.mrb[0].mxu0
    %v317 = vadd.f32 %v145, %v316
    %v318 = vpop.f32.mrb[0].mxu0
    %v319 = vpop.f32.mrb[0].mxu0
    %v320 = vadd.f32 %v145, %v319
    %v321 = vpop.f32.mrb[0].mxu0
    %322 = vmatprep.mubr.bf16.mxu0 0
    %323 = vmatmul.mubr.bf16.gmra.mrb[0].mxu0 %v170
    %v324 = vpop.f32.mrb[0].mxu0
    %v325 = vadd.f32 %v145, %v324
    %v326 = vpop.f32.mrb[0].mxu0
    %v327 = vpop.f32.mrb[0].mxu0
    %v328 = vadd.f32 %v145, %v327
    %v329 = vpop.f32.mrb[0].mxu0
    %330 = vmatprep.mubr.bf16.mxu0 0
    %331 = vmatmul.mubr.bf16.gmra.mrb[0].mxu0 %v173
    %v332 = vpop.f32.mrb[0].mxu0
    %v333 = vadd.f32 %v145, %v332
    %v334 = vpop.f32.mrb[0].mxu0
    %v335 = vpop.f32.mrb[0].mxu0
    %v336 = vadd.f32 %v145, %v335
    %v337 = vpop.f32.mrb[0].mxu0
    %338 = vmatprep.mubr.bf16.mxu0 0
    %339 = vmatmul.mubr.bf16.gmra.mrb[0].mxu0 %v176
    %v340 = vpop.f32.mrb[0].mxu0
    %v341 = vadd.f32 %v145, %v340
    %v342 = vpop.f32.mrb[0].mxu0
    %v343 = vpop.f32.mrb[0].mxu0
    %v344 = vadd.f32 %v145, %v343
    %v345 = vpop.f32.mrb[0].mxu0
    %346 = vmatprep.mubr.bf16.mxu0 0
    %347 = vmatmul.mubr.bf16.gmra.mrb[0].mxu0 %v179
    %v348 = vpop.f32.mrb[0].mxu0
    %v349 = vadd.f32 %v145, %v348
    %v350 = vpop.f32.mrb[0].mxu0
    %v351 = vpop.f32.mrb[0].mxu0
    %v352 = vadd.f32 %v145, %v351
    %v353 = vpop.f32.mrb[0].mxu0
    %354 = vmatprep.mubr.bf16.mxu0 0
    %355 = vmatmul.mubr.bf16.gmra.mrb[0].mxu0 %v182
    %v356 = vpop.f32.mrb[0].mxu0
    %v357 = vadd.f32 %v145, %v356
    %v358 = vpop.f32.mrb[0].mxu0
    %v359 = vpop.f32.mrb[0].mxu0
    %v360 = vadd.f32 %v145, %v359
    %v361 = vpop.f32.mrb[0].mxu0
    %362 = vmatprep.mubr.bf16.mxu0 0
    %363 = vmatmul.mubr.bf16.gmra.mrb[0].mxu0 %v185
    %v364 = vpop.f32.mrb[0].mxu0
    %v365 = vadd.f32 %v145, %v364
    %v366 = vpop.f32.mrb[0].mxu0
    %v367 = vpop.f32.mrb[0].mxu0
    %v368 = vadd.f32 %v145, %v367
    %v369 = vpop.f32.mrb[0].mxu0
    %370 = vmatprep.mubr.bf16.mxu0 0
    %371 = vmatmul.mubr.bf16.gmra.mrb[0].mxu0 %v188
    %v372 = vpop.f32.mrb[0].mxu0
    %v373 = vadd.f32 %v145, %v372
    %v374 = vpop.f32.mrb[0].mxu0
    %v375 = vpop.f32.mrb[0].mxu0
    %v376 = vadd.f32 %v145, %v375
    %v377 = vpop.f32.mrb[0].mxu0
    %378 = vmatprep.mubr.bf16.mxu0 0
    %379 = vmatmul.mubr.bf16.gmra.mrb[0].mxu0 %v191
    %v380 = vpop.f32.mrb[0].mxu0
    %v381 = vadd.f32 %v145, %v380
    %v382 = vpop.f32.mrb[0].mxu0
    %v383 = vpop.f32.mrb[0].mxu0
    %v384 = vadd.f32 %v145, %v383
    %v385 = vpop.f32.mrb[0].mxu0
    %386 = vmatprep.mubr.bf16.mxu0 0
    %387 = vmatmul.mubr.bf16.gmra.mrb[0].mxu0 %v194
    %v388 = vpop.f32.mrb[0].mxu0
    %v389 = vadd.f32 %v145, %v388
    %v390 = vpop.f32.mrb[0].mxu0
    %v391 = vpop.f32.mrb[0].mxu0
    %v392 = vadd.f32 %v145, %v391
    %v393 = vpop.f32.mrb[0].mxu0
    %394 = vmatprep.mubr.bf16.mxu0 0
    %395 = vmatmul.mubr.bf16.gmra.mrb[0].mxu0 %v197
    %v396 = vpop.f32.mrb[0].mxu0
    %v397 = vadd.f32 %v145, %v396
    %v398 = vpop.f32.mrb[0].mxu0
    %v399 = vpop.f32.mrb[0].mxu0
    %v400 = vadd.f32 %v145, %v399
    %v401 = vpop.f32.mrb[0].mxu0
    %402 = vmatprep.mubr.bf16.mxu0 0
    %403 = vmatmul.mubr.bf16.gmra.mrb[0].mxu0 %v200
    %v404 = vpop.f32.mrb[0].mxu0
    %v405 = vadd.f32 %v145, %v404
    %v406 = vpop.f32.mrb[0].mxu0
    %v407 = vpop.f32.mrb[0].mxu0
    %v408 = vadd.f32 %v145, %v407
    %v409 = vpop.f32.mrb[0].mxu0
    %410 = vmatprep.mubr.bf16.mxu0 0
    %411 = vmatmul.mubr.bf16.gmra.mrb[0].mxu0 %v203
    %v412 = vpop.f32.mrb[0].mxu0
    %v413 = vadd.f32 %v145, %v412
    %v414 = vpop.f32.mrb[0].mxu0
    %v415 = vpop.f32.mrb[0].mxu0
    %v416 = vadd.f32 %v145, %v415
    %v417 = vpop.f32.mrb[0].mxu0
    %418 = vmatprep.mubr.bf16.mxu0 0
    %419 = vmatmul.mubr.bf16.gmra.mrb[0].mxu0 %v206
    %v420 = vpop.f32.mrb[0].mxu0
    %v421 = vadd.f32 %v145, %v420
    %v422 = vpop.f32.mrb[0].mxu0
    %v423 = vpop.f32.mrb[0].mxu0
    %v424 = vadd.f32 %v145, %v423
    %v425 = vpop.f32.mrb[0].mxu0
    %426 = vmatprep.mubr.bf16.mxu0 0
    %427 = vmatmul.mubr.bf16.gmra.mrb[0].mxu0 %v209
    %v428 = vpop.f32.mrb[0].mxu0
    %v429 = vadd.f32 %v145, %v428
    %v430 = vpop.f32.mrb[0].mxu0
    %v431 = vpop.f32.mrb[0].mxu0
    %v432 = vadd.f32 %v145, %v431
    %v433 = vpop.f32.mrb[0].mxu0
    %434 = vmatprep.mubr.bf16.mxu0 0
    %435 = vmatmul.mubr.bf16.gmra.mrb[0].mxu0 %v212
    %v436 = vpop.f32.mrb[0].mxu0
    %v437 = vadd.f32 %v145, %v436
    %v438 = vpop.f32.mrb[0].mxu0
    %v439 = vpop.f32.mrb[0].mxu0
    %v440 = vadd.f32 %v145, %v439
    %v441 = vpop.f32.mrb[0].mxu0
    %442 = vmatprep.mubr.bf16.mxu0 0
    %443 = vmatmul.mubr.bf16.gmra.mrb[0].mxu0 %v215
    %v444 = vpop.f32.mrb[0].mxu0
    %v445 = vadd.f32 %v145, %v444
    %v446 = vpop.f32.mrb[0].mxu0
    %v447 = vpop.f32.mrb[0].mxu0
    %v448 = vadd.f32 %v145, %v447
    %v449 = vpop.f32.mrb[0].mxu0
    %450 = vmatprep.mubr.bf16.mxu0 0
    %451 = vmatmul.mubr.bf16.gmra.mrb[0].mxu0 %v218
    %v452 = vpop.f32.mrb[0].mxu0
    %v453 = vadd.f32 %v145, %v452
    %v454 = vpop.f32.mrb[0].mxu0
    %v455 = vpop.f32.mrb[0].mxu0
    %v456 = vadd.f32 %v145, %v455
    %v457 = vpop.f32.mrb[0].mxu0
    %458 = vmatprep.mubr.bf16.mxu0 0
    %459 = vmatmul.mubr.bf16.gmra.mrb[0].mxu0 %v221
    %v460 = vpop.f32.mrb[0].mxu0
    %v461 = vadd.f32 %v145, %v460
    %v462 = vpop.f32.mrb[0].mxu0
    %v463 = vpop.f32.mrb[0].mxu0
    %v464 = vadd.f32 %v145, %v463
    %v465 = vpop.f32.mrb[0].mxu0
    %466 = vmatprep.mubr.bf16.mxu0 0
    %467 = vmatmul.mubr.bf16.gmra.mrb[0].mxu0 %v224
    %v468 = vpop.f32.mrb[0].mxu0
    %v469 = vadd.f32 %v145, %v468
    %v470 = vpop.f32.mrb[0].mxu0
    %v471 = vpop.f32.mrb[0].mxu0
    %v472 = vadd.f32 %v145, %v471
    %v473 = vpop.f32.mrb[0].mxu0
    %474 = vmatprep.mubr.bf16.mxu0 0
    %475 = vmatmul.mubr.bf16.gmra.mrb[0].mxu0 %v227
    %v476 = vpop.f32.mrb[0].mxu0
    %v477 = vadd.f32 %v145, %v476
    %v478 = vpop.f32.mrb[0].mxu0
    %v479 = vpop.f32.mrb[0].mxu0
    %v480 = vadd.f32 %v145, %v479
    %v481 = vpop.f32.mrb[0].mxu0
    %482 = vmatprep.mubr.bf16.mxu0 0
    %483 = vmatmul.mubr.bf16.gmra.mrb[0].mxu0 %v230
    %v484 = vpop.f32.mrb[0].mxu0
    %v485 = vadd.f32 %v145, %v484
    %v486 = vpop.f32.mrb[0].mxu0
    %v487 = vpop.f32.mrb[0].mxu0
    %v488 = vadd.f32 %v145, %v487
    %v489 = vpop.f32.mrb[0].mxu0
    %490 = vmatprep.mubr.bf16.mxu0 0
    %491 = vmatmul.mubr.bf16.gmra.mrb[0].mxu0 %v233
    %v492 = vpop.f32.mrb[0].mxu0
    %v493 = vadd.f32 %v145, %v492
    %v494 = vpop.f32.mrb[0].mxu0
    %v495 = vpop.f32.mrb[0].mxu0
    %v496 = vadd.f32 %v145, %v495
    %v497 = vpop.f32.mrb[0].mxu0
    %498 = vmatprep.mubr.bf16.mxu0 0
    %499 = vmatmul.mubr.bf16.gmra.mrb[0].mxu0 %v236
    %v500 = vpop.f32.mrb[0].mxu0
    %v501 = vadd.f32 %v145, %v500
    %v502 = vpop.f32.mrb[0].mxu0
    %v503 = vpop.f32.mrb[0].mxu0
    %v504 = vadd.f32 %v145, %v503
    %v505 = vpop.f32.mrb[0].mxu0
    %506 = vmatprep.mubr.bf16.mxu0 0
    %507 = vmatmul.mubr.bf16.gmra.mrb[0].mxu0 %v239
    %v508 = vpop.f32.mrb[0].mxu0
    %v509 = vadd.f32 %v145, %v508
    %v510 = vpop.f32.mrb[0].mxu0
    %v511 = vpop.f32.mrb[0].mxu0
    %v512 = vadd.f32 %v145, %v511
    %v513 = vpop.f32.mrb[0].mxu0
    %514 = vmatprep.mubr.bf16.mxu0 0
    %515 = vmatmul.mubr.bf16.gmra.mrb[0].mxu0 %v242
    %v516 = vpop.f32.mrb[0].mxu0
    %v517 = vadd.f32 %v145, %v516
    %v518 = vpop.f32.mrb[0].mxu0
    %v519 = vpop.f32.mrb[0].mxu0
    %v520 = vadd.f32 %v145, %v519
    %v521 = vpop.f32.mrb[0].mxu0
    %522 = vmatprep.mubr.bf16.mxu0 0
    %523 = vmatmul.mubr.bf16.gmra.mrb[0].mxu0 %v245
    %v524 = vpop.f32.mrb[0].mxu0
    %v525 = vadd.f32 %v145, %v524
    %v526 = vpop.f32.mrb[0].mxu0
    %v527 = vpop.f32.mrb[0].mxu0
    %v528 = vadd.f32 %v145, %v527
    %v529 = vpop.f32.mrb[0].mxu0
    %530 = vmatprep.mubr.bf16.mxu0 0
    %531 = vmatmul.mubr.bf16.gmra.mrb[0].mxu0 %v248
    %v532 = vpop.f32.mrb[0].mxu0
    %v533 = vadd.f32 %v145, %v532
    %v534 = vpop.f32.mrb[0].mxu0
    %v535 = vpop.f32.mrb[0].mxu0
    %v536 = vadd.f32 %v145, %v535
    %v537 = vpop.f32.mrb[0].mxu0
    %538 = vdwg.mxu0
    %v539 = vmax.f32 %v285, 0.0
    %v540 = vmax.f32 %v288, 0.0
    %v541 = vmax.f32 %v293, 0.0
    %v542 = vmax.f32 %v296, 0.0
    %v543 = vmax.f32 %v301, 0.0
    %v544 = vmax.f32 %v304, 0.0
    %v545 = vmax.f32 %v309, 0.0
    %v546 = vmax.f32 %v312, 0.0
    %v547 = vmax.f32 %v317, 0.0
    %v548 = vmax.f32 %v320, 0.0
    %v549 = vmax.f32 %v325, 0.0
    %v550 = vmax.f32 %v328, 0.0
    %v551 = vmax.f32 %v333, 0.0
    %v552 = vmax.f32 %v336, 0.0
    %v553 = vmax.f32 %v341, 0.0
    %v554 = vmax.f32 %v344, 0.0
    %v555 = vmax.f32 %v349, 0.0
    %v556 = vmax.f32 %v352, 0.0
    %v557 = vmax.f32 %v357, 0.0
    %v558 = vmax.f32 %v360, 0.0
    %v559 = vmax.f32 %v365, 0.0
    %v560 = vmax.f32 %v368, 0.0
    %v561 = vmax.f32 %v373, 0.0
    %v562 = vmax.f32 %v376, 0.0
    %v563 = vmax.f32 %v381, 0.0
    %v564 = vmax.f32 %v384, 0.0
    %v565 = vmax.f32 %v389, 0.0
    %v566 = vmax.f32 %v392, 0.0
    %v567 = vmax.f32 %v397, 0.0
    %v568 = vmax.f32 %v400, 0.0
    %v569 = vmax.f32 %v405, 0.0
    %v570 = vmax.f32 %v408, 0.0
    %v571 = vmax.f32 %v413, 0.0
    %v572 = vmax.f32 %v416, 0.0
    %v573 = vmax.f32 %v421, 0.0
    %v574 = vmax.f32 %v424, 0.0
    %v575 = vmax.f32 %v429, 0.0
    %v576 = vmax.f32 %v432, 0.0
    %v577 = vmax.f32 %v437, 0.0
    %v578 = vmax.f32 %v440, 0.0
    %v579 = vmax.f32 %v445, 0.0
    %v580 = vmax.f32 %v448, 0.0
    %v581 = vmax.f32 %v453, 0.0
    %v582 = vmax.f32 %v456, 0.0
    %v583 = vmax.f32 %v461, 0.0
    %v584 = vmax.f32 %v464, 0.0
    %v585 = vmax.f32 %v469, 0.0
    %v586 = vmax.f32 %v472, 0.0
    %v587 = vmax.f32 %v477, 0.0
    %v588 = vmax.f32 %v480, 0.0
    %v589 = vmax.f32 %v485, 0.0
    %v590 = vmax.f32 %v488, 0.0
    %v591 = vmax.f32 %v493, 0.0
    %v592 = vmax.f32 %v496, 0.0
    %v593 = vmax.f32 %v501, 0.0
    %v594 = vmax.f32 %v504, 0.0
    %v595 = vmax.f32 %v509, 0.0
    %v596 = vmax.f32 %v512, 0.0
    %v597 = vmax.f32 %v517, 0.0
    %v598 = vmax.f32 %v520, 0.0
    %v599 = vmax.f32 %v525, 0.0
    %v600 = vmax.f32 %v528, 0.0
    %v601 = vmax.f32 %v533, 0.0
    %v602 = vmax.f32 %v536, 0.0
    %vm603 = vcmask 31744
    %604 = vst.msk [vmem:[#allocation2] sm:$0xff] %vm603, 0.0
    %605 = vst.msk [vmem:[#allocation2 + $0x8] sm:$0xff] %vm603, 0.0
    %vm606 = vcmask 25600
    %607 = vst.msk [vmem:[#allocation2 + $0x10] sm:$0x3] %vm606, 0.0
    %608 = vst.msk [vmem:[#allocation2 + $0x1b0] sm:$0xff] %vm603, 0.0
    %609 = vst.msk [vmem:[#allocation2 + $0x1b8] sm:$0xff] %vm603, 0.0
    %610 = vst.msk [vmem:[#allocation2 + $0x1c0] sm:$0x3] %vm606, 0.0
    %s611 = scalar_lea.vmem [#allocation2], 408
    %612 = vst.msk [vmem:[%s611] sm:$0xff] %vm603, 0.0
    %613 = vst.msk [vmem:[%s611 + $0x8] sm:$0xff] %vm603, 0.0
    %614 = vst.msk [vmem:[%s611 + $0x10] sm:$0x3] %vm606, 0.0
    %615 = vst.msk [vmem:[%s611 + $0x1b0] sm:$0xff] %vm603, 0.0
    %616 = vst.msk [vmem:[%s611 + $0x1b8] sm:$0xff] %vm603, 0.0
    %617 = vst.msk [vmem:[%s611 + $0x1c0] sm:$0x3] %vm606, 0.0
    %vm618 = vcmask 24576
    %619 = vst.msk [vmem:[#allocation2] sm:$0x1] %vm618, 0.0
    %620 = vst.msk [vmem:[#allocation2 + $0x18] sm:$0x1] %vm618, 0.0
    %621 = vst.msk [vmem:[#allocation2 + $0x30] sm:$0x1] %vm618, 0.0
    %622 = vst.msk [vmem:[#allocation2 + $0x48] sm:$0x1] %vm618, 0.0
    %623 = vst.msk [vmem:[#allocation2 + $0x60] sm:$0x1] %vm618, 0.0
    %624 = vst.msk [vmem:[#allocation2 + $0x78] sm:$0x1] %vm618, 0.0
    %625 = vst.msk [vmem:[#allocation2 + $0x90] sm:$0x1] %vm618, 0.0
    %626 = vst.msk [vmem:[#allocation2 + $0xa8] sm:$0x1] %vm618, 0.0
    %627 = vst.msk [vmem:[#allocation2 + $0xc0] sm:$0x1] %vm618, 0.0
    %628 = vst.msk [vmem:[#allocation2 + $0xd8] sm:$0x1] %vm618, 0.0
    %629 = vst.msk [vmem:[#allocation2 + $0xf0] sm:$0x1] %vm618, 0.0
    %630 = vst.msk [vmem:[#allocation2 + $0x108] sm:$0x1] %vm618, 0.0
    %631 = vst.msk [vmem:[#allocation2 + $0x120] sm:$0x1] %vm618, 0.0
    %632 = vst.msk [vmem:[#allocation2 + $0x138] sm:$0x1] %vm618, 0.0
    %633 = vst.msk [vmem:[#allocation2 + $0x150] sm:$0x1] %vm618, 0.0
    %634 = vst.msk [vmem:[#allocation2 + $0x168] sm:$0x1] %vm618, 0.0
    %635 = vst.msk [vmem:[#allocation2 + $0x180] sm:$0x1] %vm618, 0.0
    %636 = vst.msk [vmem:[#allocation2 + $0x198] sm:$0x1] %vm618, 0.0
    %637 = vst.msk [vmem:[#allocation2 + $0x1b0] sm:$0x1] %vm618, 0.0
    %638 = vst.msk [vmem:[#allocation2 + $0x1c8] sm:$0x1] %vm618, 0.0
    %639 = vst.msk [vmem:[#allocation2 + $0x1e0] sm:$0x1] %vm618, 0.0
    %640 = vst.msk [vmem:[#allocation2 + $0x1f8] sm:$0x1] %vm618, 0.0
    %641 = vst.msk [vmem:[#allocation2 + $0x210] sm:$0x1] %vm618, 0.0
    %642 = vst.msk [vmem:[#allocation2 + $0x228] sm:$0x1] %vm618, 0.0
    %643 = vst.msk [vmem:[#allocation2 + $0x240] sm:$0x1] %vm618, 0.0
    %644 = vst.msk [vmem:[#allocation2 + $0x258] sm:$0x1] %vm618, 0.0
    %645 = vst.msk [vmem:[#allocation2 + $0x270] sm:$0x1] %vm618, 0.0
    %646 = vst.msk [vmem:[#allocation2 + $0x288] sm:$0x1] %vm618, 0.0
    %647 = vst.msk [vmem:[#allocation2 + $0x2a0] sm:$0x1] %vm618, 0.0
    %648 = vst.msk [vmem:[#allocation2 + $0x2b8] sm:$0x1] %vm618, 0.0
    %649 = vst.msk [vmem:[#allocation2 + $0x2d0] sm:$0x1] %vm618, 0.0
    %650 = vst.msk [vmem:[#allocation2 + $0x2e8] sm:$0x1] %vm618, 0.0
    %651 = vst.msk [vmem:[#allocation2 + $0x300] sm:$0x1] %vm618, 0.0
    %652 = vst.msk [vmem:[#allocation2 + $0x318] sm:$0x1] %vm618, 0.0
    %653 = vst.msk [vmem:[#allocation2 + $0x330] sm:$0x1] %vm618, 0.0
    %654 = vst.msk [vmem:[#allocation2 + $0x348] sm:$0x1] %vm618, 0.0
    %655 = vst.msk [vmem:[#allocation2 + $0x11] sm:$0x1] %vm618, 0.0
    %656 = vst.msk [vmem:[#allocation2 + $0x29] sm:$0x1] %vm618, 0.0
    %657 = vst.msk [vmem:[#allocation2 + $0x41] sm:$0x1] %vm618, 0.0
    %658 = vst.msk [vmem:[#allocation2 + $0x59] sm:$0x1] %vm618, 0.0
    %659 = vst.msk [vmem:[#allocation2 + $0x71] sm:$0x1] %vm618, 0.0
    %660 = vst.msk [vmem:[#allocation2 + $0x89] sm:$0x1] %vm618, 0.0
    %661 = vst.msk [vmem:[#allocation2 + $0xa1] sm:$0x1] %vm618, 0.0
    %662 = vst.msk [vmem:[#allocation2 + $0xb9] sm:$0x1] %vm618, 0.0
    %663 = vst.msk [vmem:[#allocation2 + $0xd1] sm:$0x1] %vm618, 0.0
    %664 = vst.msk [vmem:[#allocation2 + $0xe9] sm:$0x1] %vm618, 0.0
    %665 = vst.msk [vmem:[#allocation2 + $0x101] sm:$0x1] %vm618, 0.0
    %666 = vst.msk [vmem:[#allocation2 + $0x119] sm:$0x1] %vm618, 0.0
    %667 = vst.msk [vmem:[#allocation2 + $0x131] sm:$0x1] %vm618, 0.0
    %668 = vst.msk [vmem:[#allocation2 + $0x149] sm:$0x1] %vm618, 0.0
    %669 = vst.msk [vmem:[#allocation2 + $0x161] sm:$0x1] %vm618, 0.0
    %670 = vst.msk [vmem:[#allocation2 + $0x179] sm:$0x1] %vm618, 0.0
    %671 = vst.msk [vmem:[#allocation2 + $0x191] sm:$0x1] %vm618, 0.0
    %672 = vst.msk [vmem:[#allocation2 + $0x1a9] sm:$0x1] %vm618, 0.0
    %673 = vst.msk [vmem:[#allocation2 + $0x1c1] sm:$0x1] %vm618, 0.0
    %674 = vst.msk [vmem:[#allocation2 + $0x1d9] sm:$0x1] %vm618, 0.0
    %675 = vst.msk [vmem:[#allocation2 + $0x1f1] sm:$0x1] %vm618, 0.0
    %676 = vst.msk [vmem:[#allocation2 + $0x209] sm:$0x1] %vm618, 0.0
    %677 = vst.msk [vmem:[#allocation2 + $0x221] sm:$0x1] %vm618, 0.0
    %678 = vst.msk [vmem:[#allocation2 + $0x239] sm:$0x1] %vm618, 0.0
    %679 = vst.msk [vmem:[#allocation2 + $0x251] sm:$0x1] %vm618, 0.0
    %680 = vst.msk [vmem:[#allocation2 + $0x269] sm:$0x1] %vm618, 0.0
    %681 = vst.msk [vmem:[#allocation2 + $0x281] sm:$0x1] %vm618, 0.0
    %682 = vst.msk [vmem:[#allocation2 + $0x299] sm:$0x1] %vm618, 0.0
    %683 = vst.msk [vmem:[#allocation2 + $0x2b1] sm:$0x1] %vm618, 0.0
    %684 = vst.msk [vmem:[#allocation2 + $0x2c9] sm:$0x1] %vm618, 0.0
    %685 = vst.msk [vmem:[#allocation2 + $0x2e1] sm:$0x1] %vm618, 0.0
    %686 = vst.msk [vmem:[#allocation2 + $0x2f9] sm:$0x1] %vm618, 0.0
    %687 = vst.msk [vmem:[#allocation2 + $0x311] sm:$0x1] %vm618, 0.0
    %688 = vst.msk [vmem:[#allocation2 + $0x329] sm:$0x1] %vm618, 0.0
    %689 = vst.msk [vmem:[#allocation2 + $0x341] sm:$0x1] %vm618, 0.0
    %690 = vst.msk [vmem:[#allocation2 + $0x359] sm:$0x1] %vm618, 0.0
    %s691 = scalar_lea.vmem [#allocation2], 24
    %692 = vst.msk [vmem:[%s691 + $0x1] sm:$0xff] %vm603, %v539
    %693 = vst.msk [vmem:[%s691 + $0x9] sm:$0xff] %vm603, %v540
    %694 = vst.msk [vmem:[%s691 + $0x19] sm:$0xff] %vm603, %v541
    %695 = vst.msk [vmem:[%s691 + $0x21] sm:$0xff] %vm603, %v542
    %696 = vst.msk [vmem:[%s691 + $0x31] sm:$0xff] %vm603, %v543
    %697 = vst.msk [vmem:[%s691 + $0x39] sm:$0xff] %vm603, %v544
    %698 = vst.msk [vmem:[%s691 + $0x49] sm:$0xff] %vm603, %v545
    %699 = vst.msk [vmem:[%s691 + $0x51] sm:$0xff] %vm603, %v546
    %700 = vst.msk [vmem:[%s691 + $0x61] sm:$0xff] %vm603, %v547
    %701 = vst.msk [vmem:[%s691 + $0x69] sm:$0xff] %vm603, %v548
    %702 = vst.msk [vmem:[%s691 + $0x79] sm:$0xff] %vm603, %v549
    %703 = vst.msk [vmem:[%s691 + $0x81] sm:$0xff] %vm603, %v550
    %704 = vst.msk [vmem:[%s691 + $0x91] sm:$0xff] %vm603, %v551
    %705 = vst.msk [vmem:[%s691 + $0x99] sm:$0xff] %vm603, %v552
    %706 = vst.msk [vmem:[%s691 + $0xa9] sm:$0xff] %vm603, %v553
    %707 = vst.msk [vmem:[%s691 + $0xb1] sm:$0xff] %vm603, %v554
    %708 = vst.msk [vmem:[%s691 + $0xc1] sm:$0xff] %vm603, %v555
    %709 = vst.msk [vmem:[%s691 + $0xc9] sm:$0xff] %vm603, %v556
    %710 = vst.msk [vmem:[%s691 + $0xd9] sm:$0xff] %vm603, %v557
    %711 = vst.msk [vmem:[%s691 + $0xe1] sm:$0xff] %vm603, %v558
    %712 = vst.msk [vmem:[%s691 + $0xf1] sm:$0xff] %vm603, %v559
    %713 = vst.msk [vmem:[%s691 + $0xf9] sm:$0xff] %vm603, %v560
    %714 = vst.msk [vmem:[%s691 + $0x109] sm:$0xff] %vm603, %v561
    %715 = vst.msk [vmem:[%s691 + $0x111] sm:$0xff] %vm603, %v562
    %716 = vst.msk [vmem:[%s691 + $0x121] sm:$0xff] %vm603, %v563
    %717 = vst.msk [vmem:[%s691 + $0x129] sm:$0xff] %vm603, %v564
    %718 = vst.msk [vmem:[%s691 + $0x139] sm:$0xff] %vm603, %v565
    %719 = vst.msk [vmem:[%s691 + $0x141] sm:$0xff] %vm603, %v566
    %720 = vst.msk [vmem:[%s691 + $0x151] sm:$0xff] %vm603, %v567
    %721 = vst.msk [vmem:[%s691 + $0x159] sm:$0xff] %vm603, %v568
    %722 = vst.msk [vmem:[%s691 + $0x169] sm:$0xff] %vm603, %v569
    %723 = vst.msk [vmem:[%s691 + $0x171] sm:$0xff] %vm603, %v570
    %724 = vst.msk [vmem:[%s691 + $0x1b1] sm:$0xff] %vm603, %v571
    %725 = vst.msk [vmem:[%s691 + $0x1b9] sm:$0xff] %vm603, %v572
    %726 = vst.msk [vmem:[%s691 + $0x1c9] sm:$0xff] %vm603, %v573
    %727 = vst.msk [vmem:[%s691 + $0x1d1] sm:$0xff] %vm603, %v574
    %728 = vst.msk [vmem:[%s691 + $0x1e1] sm:$0xff] %vm603, %v575
    %729 = vst.msk [vmem:[%s691 + $0x1e9] sm:$0xff] %vm603, %v576
    %730 = vst.msk [vmem:[%s691 + $0x1f9] sm:$0xff] %vm603, %v577
    %731 = vst.msk [vmem:[%s691 + $0x201] sm:$0xff] %vm603, %v578
    %732 = vst.msk [vmem:[%s691 + $0x211] sm:$0xff] %vm603, %v579
    %733 = vst.msk [vmem:[%s691 + $0x219] sm:$0xff] %vm603, %v580
    %734 = vst.msk [vmem:[%s691 + $0x229] sm:$0xff] %vm603, %v581
    %735 = vst.msk [vmem:[%s691 + $0x231] sm:$0xff] %vm603, %v582
    %736 = vst.msk [vmem:[%s691 + $0x241] sm:$0xff] %vm603, %v583
    %737 = vst.msk [vmem:[%s691 + $0x249] sm:$0xff] %vm603, %v584
    %738 = vst.msk [vmem:[%s691 + $0x259] sm:$0xff] %vm603, %v585
    %739 = vst.msk [vmem:[%s691 + $0x261] sm:$0xff] %vm603, %v586
    %740 = vst.msk [vmem:[%s691 + $0x271] sm:$0xff] %vm603, %v587
    %741 = vst.msk [vmem:[%s691 + $0x279] sm:$0xff] %vm603, %v588
    %742 = vst.msk [vmem:[%s691 + $0x289] sm:$0xff] %vm603, %v589
    %743 = vst.msk [vmem:[%s691 + $0x291] sm:$0xff] %vm603, %v590
    %744 = vst.msk [vmem:[%s691 + $0x2a1] sm:$0xff] %vm603, %v591
    %745 = vst.msk [vmem:[%s691 + $0x2a9] sm:$0xff] %vm603, %v592
    %746 = vst.msk [vmem:[%s691 + $0x2b9] sm:$0xff] %vm603, %v593
    %747 = vst.msk [vmem:[%s691 + $0x2c1] sm:$0xff] %vm603, %v594
    %748 = vst.msk [vmem:[%s691 + $0x2d1] sm:$0xff] %vm603, %v595
    %749 = vst.msk [vmem:[%s691 + $0x2d9] sm:$0xff] %vm603, %v596
    %750 = vst.msk [vmem:[%s691 + $0x2e9] sm:$0xff] %vm603, %v597
    %751 = vst.msk [vmem:[%s691 + $0x2f1] sm:$0xff] %vm603, %v598
    %752 = vst.msk [vmem:[%s691 + $0x301] sm:$0xff] %vm603, %v599
    %753 = vst.msk [vmem:[%s691 + $0x309] sm:$0xff] %vm603, %v600
    %754 = vst.msk [vmem:[%s691 + $0x319] sm:$0xff] %vm603, %v601
    %755 = vst.msk [vmem:[%s691 + $0x321] sm:$0xff] %vm603, %v602
    %v756 = vld [vmem:[#allocation2] sm:$0xff]
    %v757 = vld [vmem:[#allocation2 + $0x8] sm:$0xff]
    %v758 = vld [vmem:[#allocation2 + $0x10] sm:$0x3]
    %v759 = vld [vmem:[#allocation2 + $0x18] sm:$0xff]
    %v760 = vld [vmem:[#allocation2 + $0x20] sm:$0xff]
    %v761 = vld [vmem:[#allocation2 + $0x28] sm:$0x3]
    %v762 = vld [vmem:[#allocation2 + $0x30] sm:$0xff]
    %v763 = vld [vmem:[#allocation2 + $0x38] sm:$0xff]
    %v764 = vld [vmem:[#allocation2 + $0x40] sm:$0x3]
    %v765 = vld [vmem:[#allocation2 + $0x48] sm:$0xff]
    %v766 = vld [vmem:[#allocation2 + $0x50] sm:$0xff]
    %v767 = vld [vmem:[#allocation2 + $0x58] sm:$0x3]
    %v768 = vld [vmem:[#allocation2 + $0x60] sm:$0xff]
    %v769 = vld [vmem:[#allocation2 + $0x68] sm:$0xff]
    %v770 = vld [vmem:[#allocation2 + $0x70] sm:$0x3]
    %v771 = vld [vmem:[#allocation2 + $0x78] sm:$0xff]
    %v772 = vld [vmem:[#allocation2 + $0x80] sm:$0xff]
    %v773 = vld [vmem:[#allocation2 + $0x88] sm:$0x3]
    %v774 = vld [vmem:[#allocation2 + $0x90] sm:$0xff]
    %v775 = vld [vmem:[#allocation2 + $0x98] sm:$0xff]
    %v776 = vld [vmem:[#allocation2 + $0xa0] sm:$0x3]
    %v777 = vld [vmem:[#allocation2 + $0xa8] sm:$0xff]
    %v778 = vld [vmem:[#allocation2 + $0xb0] sm:$0xff]
    %v779 = vld [vmem:[#allocation2 + $0xb8] sm:$0x3]
    %v780 = vld [vmem:[#allocation2 + $0xc0] sm:$0xff]
    %v781 = vld [vmem:[#allocation2 + $0xc8] sm:$0xff]
    %v782 = vld [vmem:[#allocation2 + $0xd0] sm:$0x3]
    %v783 = vld [vmem:[#allocation2 + $0xd8] sm:$0xff]
    %v784 = vld [vmem:[#allocation2 + $0xe0] sm:$0xff]
    %v785 = vld [vmem:[#allocation2 + $0xe8] sm:$0x3]
    %v786 = vld [vmem:[#allocation2 + $0xf0] sm:$0xff]
    %v787 = vld [vmem:[#allocation2 + $0xf8] sm:$0xff]
    %v788 = vld [vmem:[#allocation2 + $0x100] sm:$0x3]
    %v789 = vld [vmem:[#allocation2 + $0x108] sm:$0xff]
    %v790 = vld [vmem:[#allocation2 + $0x110] sm:$0xff]
    %v791 = vld [vmem:[#allocation2 + $0x118] sm:$0x3]
    %v792 = vld [vmem:[#allocation2 + $0x120] sm:$0xff]
    %v793 = vld [vmem:[#allocation2 + $0x128] sm:$0xff]
    %v794 = vld [vmem:[#allocation2 + $0x130] sm:$0x3]
    %v795 = vld [vmem:[#allocation2 + $0x138] sm:$0xff]
    %v796 = vld [vmem:[#allocation2 + $0x140] sm:$0xff]
    %v797 = vld [vmem:[#allocation2 + $0x148] sm:$0x3]
    %v798 = vld [vmem:[#allocation2 + $0x150] sm:$0xff]
    %v799 = vld [vmem:[#allocation2 + $0x158] sm:$0xff]
    %v800 = vld [vmem:[#allocation2 + $0x160] sm:$0x3]
    %v801 = vld [vmem:[#allocation2 + $0x168] sm:$0xff]
    %v802 = vld [vmem:[#allocation2 + $0x170] sm:$0xff]
    %v803 = vld [vmem:[#allocation2 + $0x178] sm:$0x3]
    %v804 = vld [vmem:[#allocation2 + $0x1b0] sm:$0xff]
    %v805 = vld [vmem:[#allocation2 + $0x1b8] sm:$0xff]
    %v806 = vld [vmem:[#allocation2 + $0x1c0] sm:$0x3]
    %v807 = vld [vmem:[#allocation2 + $0x1c8] sm:$0xff]
    %v808 = vld [vmem:[#allocation2 + $0x1d0] sm:$0xff]
    %v809 = vld [vmem:[#allocation2 + $0x1d8] sm:$0x3]
    %v810 = vld [vmem:[#allocation2 + $0x1e0] sm:$0xff]
    %v811 = vld [vmem:[#allocation2 + $0x1e8] sm:$0xff]
    %v812 = vld [vmem:[#allocation2 + $0x1f0] sm:$0x3]
    %v813 = vld [vmem:[#allocation2 + $0x1f8] sm:$0xff]
    %v814 = vld [vmem:[#allocation2 + $0x200] sm:$0xff]
    %v815 = vld [vmem:[#allocation2 + $0x208] sm:$0x3]
    %v816 = vld [vmem:[#allocation2 + $0x210] sm:$0xff]
    %v817 = vld [vmem:[#allocation2 + $0x218] sm:$0xff]
    %v818 = vld [vmem:[#allocation2 + $0x220] sm:$0x3]
    %v819 = vld [vmem:[#allocation2 + $0x228] sm:$0xff]
    %v820 = vld [vmem:[#allocation2 + $0x230] sm:$0xff]
    %v821 = vld [vmem:[#allocation2 + $0x238] sm:$0x3]
    %v822 = vld [vmem:[#allocation2 + $0x240] sm:$0xff]
    %v823 = vld [vmem:[#allocation2 + $0x248] sm:$0xff]
    %v824 = vld [vmem:[#allocation2 + $0x250] sm:$0x3]
    %v825 = vld [vmem:[#allocation2 + $0x258] sm:$0xff]
    %v826 = vld [vmem:[#allocation2 + $0x260] sm:$0xff]
    %v827 = vld [vmem:[#allocation2 + $0x268] sm:$0x3]
    %v828 = vld [vmem:[#allocation2 + $0x270] sm:$0xff]
    %v829 = vld [vmem:[#allocation2 + $0x278] sm:$0xff]
    %v830 = vld [vmem:[#allocation2 + $0x280] sm:$0x3]
    %v831 = vld [vmem:[#allocation2 + $0x288] sm:$0xff]
    %v832 = vld [vmem:[#allocation2 + $0x290] sm:$0xff]
    %v833 = vld [vmem:[#allocation2 + $0x298] sm:$0x3]
    %v834 = vld [vmem:[#allocation2 + $0x2a0] sm:$0xff]
    %v835 = vld [vmem:[#allocation2 + $0x2a8] sm:$0xff]
    %v836 = vld [vmem:[#allocation2 + $0x2b0] sm:$0x3]
    %v837 = vld [vmem:[#allocation2 + $0x2b8] sm:$0xff]
    %v838 = vld [vmem:[#allocation2 + $0x2c0] sm:$0xff]
    %v839 = vld [vmem:[#allocation2 + $0x2c8] sm:$0x3]
    %v840 = vld [vmem:[#allocation2 + $0x2d0] sm:$0xff]
    %v841 = vld [vmem:[#allocation2 + $0x2d8] sm:$0xff]
    %v842 = vld [vmem:[#allocation2 + $0x2e0] sm:$0x3]
    %v843 = vld [vmem:[#allocation2 + $0x2e8] sm:$0xff]
    %v844 = vld [vmem:[#allocation2 + $0x2f0] sm:$0xff]
    %v845 = vld [vmem:[#allocation2 + $0x2f8] sm:$0x3]
    %v846 = vld [vmem:[#allocation2 + $0x300] sm:$0xff]
    %v847 = vld [vmem:[#allocation2 + $0x308] sm:$0xff]
    %v848 = vld [vmem:[#allocation2 + $0x310] sm:$0x3]
    %v849 = vld [vmem:[#allocation2 + $0x318] sm:$0xff]
    %v850 = vld [vmem:[#allocation2 + $0x320] sm:$0xff]
    %v851 = vld [vmem:[#allocation2 + $0x328] sm:$0x3]
    %v852 = vld [vmem:[%s691] sm:$0xff]
    %v853 = vld [vmem:[%s691 + $0x8] sm:$0xff]
    %v854 = vld [vmem:[%s691 + $0x10] sm:$0x3]
    %v855 = vld [vmem:[%s691 + $0x18] sm:$0xff]
    %v856 = vld [vmem:[%s691 + $0x20] sm:$0xff]
    %v857 = vld [vmem:[%s691 + $0x28] sm:$0x3]
    %v858 = vld [vmem:[%s691 + $0x30] sm:$0xff]
    %v859 = vld [vmem:[%s691 + $0x38] sm:$0xff]
    %v860 = vld [vmem:[%s691 + $0x40] sm:$0x3]
    %v861 = vld [vmem:[%s691 + $0x48] sm:$0xff]
    %v862 = vld [vmem:[%s691 + $0x50] sm:$0xff]
    %v863 = vld [vmem:[%s691 + $0x58] sm:$0x3]
    %v864 = vld [vmem:[%s691 + $0x60] sm:$0xff]
    %v865 = vld [vmem:[%s691 + $0x68] sm:$0xff]
    %v866 = vld [vmem:[%s691 + $0x70] sm:$0x3]
    %v867 = vld [vmem:[%s691 + $0x78] sm:$0xff]
    %v868 = vld [vmem:[%s691 + $0x80] sm:$0xff]
    %v869 = vld [vmem:[%s691 + $0x88] sm:$0x3]
    %v870 = vld [vmem:[%s691 + $0x90] sm:$0xff]
    %v871 = vld [vmem:[%s691 + $0x98] sm:$0xff]
    %v872 = vld [vmem:[%s691 + $0xa0] sm:$0x3]
    %v873 = vld [vmem:[%s691 + $0xa8] sm:$0xff]
    %v874 = vld [vmem:[%s691 + $0xb0] sm:$0xff]
    %v875 = vld [vmem:[%s691 + $0xb8] sm:$0x3]
    %v876 = vld [vmem:[%s691 + $0xc0] sm:$0xff]
    %v877 = vld [vmem:[%s691 + $0xc8] sm:$0xff]
    %v878 = vld [vmem:[%s691 + $0xd0] sm:$0x3]
    %v879 = vld [vmem:[%s691 + $0xd8] sm:$0xff]
    %v880 = vld [vmem:[%s691 + $0xe0] sm:$0xff]
    %v881 = vld [vmem:[%s691 + $0xe8] sm:$0x3]
    %v882 = vld [vmem:[%s691 + $0xf0] sm:$0xff]
    %v883 = vld [vmem:[%s691 + $0xf8] sm:$0xff]
    %v884 = vld [vmem:[%s691 + $0x100] sm:$0x3]
    %v885 = vld [vmem:[%s691 + $0x108] sm:$0xff]
    %v886 = vld [vmem:[%s691 + $0x110] sm:$0xff]
    %v887 = vld [vmem:[%s691 + $0x118] sm:$0x3]
    %v888 = vld [vmem:[%s691 + $0x120] sm:$0xff]
    %v889 = vld [vmem:[%s691 + $0x128] sm:$0xff]
    %v890 = vld [vmem:[%s691 + $0x130] sm:$0x3]
    %v891 = vld [vmem:[%s691 + $0x138] sm:$0xff]
    %v892 = vld [vmem:[%s691 + $0x140] sm:$0xff]
    %v893 = vld [vmem:[%s691 + $0x148] sm:$0x3]
    %v894 = vld [vmem:[%s691 + $0x150] sm:$0xff]
    %v895 = vld [vmem:[%s691 + $0x158] sm:$0xff]
    %v896 = vld [vmem:[%s691 + $0x160] sm:$0x3]
    %v897 = vld [vmem:[%s691 + $0x168] sm:$0xff]
    %v898 = vld [vmem:[%s691 + $0x170] sm:$0xff]
    %v899 = vld [vmem:[%s691 + $0x178] sm:$0x3]
    %v900 = vld [vmem:[%s691 + $0x1b0] sm:$0xff]
    %v901 = vld [vmem:[%s691 + $0x1b8] sm:$0xff]
    %v902 = vld [vmem:[%s691 + $0x1c0] sm:$0x3]
    %v903 = vld [vmem:[%s691 + $0x1c8] sm:$0xff]
    %v904 = vld [vmem:[%s691 + $0x1d0] sm:$0xff]
    %v905 = vld [vmem:[%s691 + $0x1d8] sm:$0x3]
    %v906 = vld [vmem:[%s691 + $0x1e0] sm:$0xff]
    %v907 = vld [vmem:[%s691 + $0x1e8] sm:$0xff]
    %v908 = vld [vmem:[%s691 + $0x1f0] sm:$0x3]
    %v909 = vld [vmem:[%s691 + $0x1f8] sm:$0xff]
    %v910 = vld [vmem:[%s691 + $0x200] sm:$0xff]
    %v911 = vld [vmem:[%s691 + $0x208] sm:$0x3]
    %v912 = vld [vmem:[%s691 + $0x210] sm:$0xff]
    %v913 = vld [vmem:[%s691 + $0x218] sm:$0xff]
    %v914 = vld [vmem:[%s691 + $0x220] sm:$0x3]
    %v915 = vld [vmem:[%s691 + $0x228] sm:$0xff]
    %v916 = vld [vmem:[%s691 + $0x230] sm:$0xff]
    %v917 = vld [vmem:[%s691 + $0x238] sm:$0x3]
    %v918 = vld [vmem:[%s691 + $0x240] sm:$0xff]
    %v919 = vld [vmem:[%s691 + $0x248] sm:$0xff]
    %v920 = vld [vmem:[%s691 + $0x250] sm:$0x3]
    %v921 = vld [vmem:[%s691 + $0x258] sm:$0xff]
    %v922 = vld [vmem:[%s691 + $0x260] sm:$0xff]
    %v923 = vld [vmem:[%s691 + $0x268] sm:$0x3]
    %v924 = vld [vmem:[%s691 + $0x270] sm:$0xff]
    %v925 = vld [vmem:[%s691 + $0x278] sm:$0xff]
    %v926 = vld [vmem:[%s691 + $0x280] sm:$0x3]
    %v927 = vld [vmem:[%s691 + $0x288] sm:$0xff]
    %v928 = vld [vmem:[%s691 + $0x290] sm:$0xff]
    %v929 = vld [vmem:[%s691 + $0x298] sm:$0x3]
    %v930 = vld [vmem:[%s691 + $0x2a0] sm:$0xff]
    %v931 = vld [vmem:[%s691 + $0x2a8] sm:$0xff]
    %v932 = vld [vmem:[%s691 + $0x2b0] sm:$0x3]
    %v933 = vld [vmem:[%s691 + $0x2b8] sm:$0xff]
    %v934 = vld [vmem:[%s691 + $0x2c0] sm:$0xff]
    %v935 = vld [vmem:[%s691 + $0x2c8] sm:$0x3]
    %v936 = vld [vmem:[%s691 + $0x2d0] sm:$0xff]
    %v937 = vld [vmem:[%s691 + $0x2d8] sm:$0xff]
    %v938 = vld [vmem:[%s691 + $0x2e0] sm:$0x3]
    %v939 = vld [vmem:[%s691 + $0x2e8] sm:$0xff]
    %v940 = vld [vmem:[%s691 + $0x2f0] sm:$0xff]
    %v941 = vld [vmem:[%s691 + $0x2f8] sm:$0x3]
    %v942 = vld [vmem:[%s691 + $0x300] sm:$0xff]
    %v943 = vld [vmem:[%s691 + $0x308] sm:$0xff]
    %v944 = vld [vmem:[%s691 + $0x310] sm:$0x3]
    %v945 = vld [vmem:[%s691 + $0x318] sm:$0xff]
    %v946 = vld [vmem:[%s691 + $0x320] sm:$0xff]
    %v947 = vld [vmem:[%s691 + $0x328] sm:$0x3]
    %s948 = scalar_lea.vmem [#allocation2], 48
    %v949 = vld [vmem:[%s948] sm:$0xff]
    %v950 = vld [vmem:[%s948 + $0x8] sm:$0xff]
    %v951 = vld [vmem:[%s948 + $0x10] sm:$0x3]
    %v952 = vld [vmem:[%s948 + $0x18] sm:$0xff]
    %v953 = vld [vmem:[%s948 + $0x20] sm:$0xff]
    %v954 = vld [vmem:[%s948 + $0x28] sm:$0x3]
    %v955 = vld [vmem:[%s948 + $0x30] sm:$0xff]
    %v956 = vld [vmem:[%s948 + $0x38] sm:$0xff]
    %v957 = vld [vmem:[%s948 + $0x40] sm:$0x3]
    %v958 = vld [vmem:[%s948 + $0x48] sm:$0xff]
    %v959 = vld [vmem:[%s948 + $0x50] sm:$0xff]
    %v960 = vld [vmem:[%s948 + $0x58] sm:$0x3]
    %v961 = vld [vmem:[%s948 + $0x60] sm:$0xff]
    %v962 = vld [vmem:[%s948 + $0x68] sm:$0xff]
    %v963 = vld [vmem:[%s948 + $0x70] sm:$0x3]
    %v964 = vld [vmem:[%s948 + $0x78] sm:$0xff]
    %v965 = vld [vmem:[%s948 + $0x80] sm:$0xff]
    %v966 = vld [vmem:[%s948 + $0x88] sm:$0x3]
    %v967 = vld [vmem:[%s948 + $0x90] sm:$0xff]
    %v968 = vld [vmem:[%s948 + $0x98] sm:$0xff]
    %v969 = vld [vmem:[%s948 + $0xa0] sm:$0x3]
    %v970 = vld [vmem:[%s948 + $0xa8] sm:$0xff]
    %v971 = vld [vmem:[%s948 + $0xb0] sm:$0xff]
    %v972 = vld [vmem:[%s948 + $0xb8] sm:$0x3]
    %v973 = vld [vmem:[%s948 + $0xc0] sm:$0xff]
    %v974 = vld [vmem:[%s948 + $0xc8] sm:$0xff]
    %v975 = vld [vmem:[%s948 + $0xd0] sm:$0x3]
    %v976 = vld [vmem:[%s948 + $0xd8] sm:$0xff]
    %v977 = vld [vmem:[%s948 + $0xe0] sm:$0xff]
    %v978 = vld [vmem:[%s948 + $0xe8] sm:$0x3]
    %v979 = vld [vmem:[%s948 + $0xf0] sm:$0xff]
    %v980 = vld [vmem:[%s948 + $0xf8] sm:$0xff]
    %v981 = vld [vmem:[%s948 + $0x100] sm:$0x3]
    %v982 = vld [vmem:[%s948 + $0x108] sm:$0xff]
    %v983 = vld [vmem:[%s948 + $0x110] sm:$0xff]
    %v984 = vld [vmem:[%s948 + $0x118] sm:$0x3]
    %v985 = vld [vmem:[%s948 + $0x120] sm:$0xff]
    %v986 = vld [vmem:[%s948 + $0x128] sm:$0xff]
    %v987 = vld [vmem:[%s948 + $0x130] sm:$0x3]
    %v988 = vld [vmem:[%s948 + $0x138] sm:$0xff]
    %v989 = vld [vmem:[%s948 + $0x140] sm:$0xff]
    %v990 = vld [vmem:[%s948 + $0x148] sm:$0x3]
    %v991 = vld [vmem:[%s948 + $0x150] sm:$0xff]
    %v992 = vld [vmem:[%s948 + $0x158] sm:$0xff]
    %v993 = vld [vmem:[%s948 + $0x160] sm:$0x3]
    %v994 = vld [vmem:[%s948 + $0x168] sm:$0xff]
    %v995 = vld [vmem:[%s948 + $0x170] sm:$0xff]
    %v996 = vld [vmem:[%s948 + $0x178] sm:$0x3]
    %v997 = vld [vmem:[%s948 + $0x1b0] sm:$0xff]
    %v998 = vld [vmem:[%s948 + $0x1b8] sm:$0xff]
    %v999 = vld [vmem:[%s948 + $0x1c0] sm:$0x3]
    %v1000 = vld [vmem:[%s948 + $0x1c8] sm:$0xff]
    %v1001 = vld [vmem:[%s948 + $0x1d0] sm:$0xff]
    %v1002 = vld [vmem:[%s948 + $0x1d8] sm:$0x3]
    %v1003 = vld [vmem:[%s948 + $0x1e0] sm:$0xff]
    %v1004 = vld [vmem:[%s948 + $0x1e8] sm:$0xff]
    %v1005 = vld [vmem:[%s948 + $0x1f0] sm:$0x3]
    %v1006 = vld [vmem:[%s948 + $0x1f8] sm:$0xff]
    %v1007 = vld [vmem:[%s948 + $0x200] sm:$0xff]
    %v1008 = vld [vmem:[%s948 + $0x208] sm:$0x3]
    %v1009 = vld [vmem:[%s948 + $0x210] sm:$0xff]
    %v1010 = vld [vmem:[%s948 + $0x218] sm:$0xff]
    %v1011 = vld [vmem:[%s948 + $0x220] sm:$0x3]
    %v1012 = vld [vmem:[%s948 + $0x228] sm:$0xff]
    %v1013 = vld [vmem:[%s948 + $0x230] sm:$0xff]
    %v1014 = vld [vmem:[%s948 + $0x238] sm:$0x3]
    %v1015 = vld [vmem:[%s948 + $0x240] sm:$0xff]
    %v1016 = vld [vmem:[%s948 + $0x248] sm:$0xff]
    %v1017 = vld [vmem:[%s948 + $0x250] sm:$0x3]
    %v1018 = vld [vmem:[%s948 + $0x258] sm:$0xff]
    %v1019 = vld [vmem:[%s948 + $0x260] sm:$0xff]
    %v1020 = vld [vmem:[%s948 + $0x268] sm:$0x3]
    %v1021 = vld [vmem:[%s948 + $0x270] sm:$0xff]
    %v1022 = vld [vmem:[%s948 + $0x278] sm:$0xff]
    %v1023 = vld [vmem:[%s948 + $0x280] sm:$0x3]
    %v1024 = vld [vmem:[%s948 + $0x288] sm:$0xff]
    %v1025 = vld [vmem:[%s948 + $0x290] sm:$0xff]
    %v1026 = vld [vmem:[%s948 + $0x298] sm:$0x3]
    %v1027 = vld [vmem:[%s948 + $0x2a0] sm:$0xff]
    %v1028 = vld [vmem:[%s948 + $0x2a8] sm:$0xff]
    %v1029 = vld [vmem:[%s948 + $0x2b0] sm:$0x3]
    %v1030 = vld [vmem:[%s948 + $0x2b8] sm:$0xff]
    %v1031 = vld [vmem:[%s948 + $0x2c0] sm:$0xff]
    %v1032 = vld [vmem:[%s948 + $0x2c8] sm:$0x3]
    %v1033 = vld [vmem:[%s948 + $0x2d0] sm:$0xff]
    %v1034 = vld [vmem:[%s948 + $0x2d8] sm:$0xff]
    %v1035 = vld [vmem:[%s948 + $0x2e0] sm:$0x3]
    %v1036 = vld [vmem:[%s948 + $0x2e8] sm:$0xff]
    %v1037 = vld [vmem:[%s948 + $0x2f0] sm:$0xff]
    %v1038 = vld [vmem:[%s948 + $0x2f8] sm:$0x3]
    %v1039 = vld [vmem:[%s948 + $0x300] sm:$0xff]
    %v1040 = vld [vmem:[%s948 + $0x308] sm:$0xff]
    %v1041 = vld [vmem:[%s948 + $0x310] sm:$0x3]
    %v1042 = vld [vmem:[%s948 + $0x318] sm:$0xff]
    %v1043 = vld [vmem:[%s948 + $0x320] sm:$0xff]
    %v1044 = vld [vmem:[%s948 + $0x328] sm:$0x3]
    %vm1141 = vcmask 1046528
    %v1142 = vrot.slane %v756, 1
    %v1143 = vrot.slane %v757, 1
    %v1144 = vsel %vm1141, %v1142, %v1143
    %v1145 = vrot.slane %v758, 1
    %v1146 = vsel %vm1141, %v1143, %v1145
    %v1147 = vrot.slane %v759, 1
    %v1148 = vrot.slane %v760, 1
    %v1149 = vsel %vm1141, %v1147, %v1148
    %v1150 = vrot.slane %v761, 1
    %v1151 = vsel %vm1141, %v1148, %v1150
    %v1152 = vrot.slane %v762, 1
    %v1153 = vrot.slane %v763, 1
    %v1154 = vsel %vm1141, %v1152, %v1153
    %v1155 = vrot.slane %v764, 1
    %v1156 = vsel %vm1141, %v1153, %v1155
    %v1157 = vrot.slane %v765, 1
    %v1158 = vrot.slane %v766, 1
    %v1159 = vsel %vm1141, %v1157, %v1158
    %v1160 = vrot.slane %v767, 1
    %v1161 = vsel %vm1141, %v1158, %v1160
    %v1162 = vrot.slane %v768, 1
    %v1163 = vrot.slane %v769, 1
    %v1164 = vsel %vm1141, %v1162, %v1163
    %v1165 = vrot.slane %v770, 1
    %v1166 = vsel %vm1141, %v1163, %v1165
    %v1167 = vrot.slane %v771, 1
    %v1168 = vrot.slane %v772, 1
    %v1169 = vsel %vm1141, %v1167, %v1168
    %v1170 = vrot.slane %v773, 1
    %v1171 = vsel %vm1141, %v1168, %v1170
    %v1172 = vrot.slane %v774, 1
    %v1173 = vrot.slane %v775, 1
    %v1174 = vsel %vm1141, %v1172, %v1173
    %v1175 = vrot.slane %v776, 1
    %v1176 = vsel %vm1141, %v1173, %v1175
    %v1177 = vrot.slane %v777, 1
    %v1178 = vrot.slane %v778, 1
    %v1179 = vsel %vm1141, %v1177, %v1178
    %v1180 = vrot.slane %v779, 1
    %v1181 = vsel %vm1141, %v1178, %v1180
    %v1182 = vrot.slane %v780, 1
    %v1183 = vrot.slane %v781, 1
    %v1184 = vsel %vm1141, %v1182, %v1183
    %v1185 = vrot.slane %v782, 1
    %v1186 = vsel %vm1141, %v1183, %v1185
    %v1187 = vrot.slane %v783, 1
    %v1188 = vrot.slane %v784, 1
    %v1189 = vsel %vm1141, %v1187, %v1188
    %v1190 = vrot.slane %v785, 1
    %v1191 = vsel %vm1141, %v1188, %v1190
    %v1192 = vrot.slane %v786, 1
    %v1193 = vrot.slane %v787, 1
    %v1194 = vsel %vm1141, %v1192, %v1193
    %v1195 = vrot.slane %v788, 1
    %v1196 = vsel %vm1141, %v1193, %v1195
    %v1197 = vrot.slane %v789, 1
    %v1198 = vrot.slane %v790, 1
    %v1199 = vsel %vm1141, %v1197, %v1198
    %v1200 = vrot.slane %v791, 1
    %v1201 = vsel %vm1141, %v1198, %v1200
    %v1202 = vrot.slane %v792, 1
    %v1203 = vrot.slane %v793, 1
    %v1204 = vsel %vm1141, %v1202, %v1203
    %v1205 = vrot.slane %v794, 1
    %v1206 = vsel %vm1141, %v1203, %v1205
    %v1207 = vrot.slane %v795, 1
    %v1208 = vrot.slane %v796, 1
    %v1209 = vsel %vm1141, %v1207, %v1208
    %v1210 = vrot.slane %v797, 1
    %v1211 = vsel %vm1141, %v1208, %v1210
    %v1212 = vrot.slane %v798, 1
    %v1213 = vrot.slane %v799, 1
    %v1214 = vsel %vm1141, %v1212, %v1213
    %v1215 = vrot.slane %v800, 1
    %v1216 = vsel %vm1141, %v1213, %v1215
    %v1217 = vrot.slane %v801, 1
    %v1218 = vrot.slane %v802, 1
    %v1219 = vsel %vm1141, %v1217, %v1218
    %v1220 = vrot.slane %v803, 1
    %v1221 = vsel %vm1141, %v1218, %v1220
    %v1222 = vrot.slane %v804, 1
    %v1223 = vrot.slane %v805, 1
    %v1224 = vsel %vm1141, %v1222, %v1223
    %v1225 = vrot.slane %v806, 1
    %v1226 = vsel %vm1141, %v1223, %v1225
    %v1227 = vrot.slane %v807, 1
    %v1228 = vrot.slane %v808, 1
    %v1229 = vsel %vm1141, %v1227, %v1228
    %v1230 = vrot.slane %v809, 1
    %v1231 = vsel %vm1141, %v1228, %v1230
    %v1232 = vrot.slane %v810, 1
    %v1233 = vrot.slane %v811, 1
    %v1234 = vsel %vm1141, %v1232, %v1233
    %v1235 = vrot.slane %v812, 1
    %v1236 = vsel %vm1141, %v1233, %v1235
    %v1237 = vrot.slane %v813, 1
    %v1238 = vrot.slane %v814, 1
    %v1239 = vsel %vm1141, %v1237, %v1238
    %v1240 = vrot.slane %v815, 1
    %v1241 = vsel %vm1141, %v1238, %v1240
    %v1242 = vrot.slane %v816, 1
    %v1243 = vrot.slane %v817, 1
    %v1244 = vsel %vm1141, %v1242, %v1243
    %v1245 = vrot.slane %v818, 1
    %v1246 = vsel %vm1141, %v1243, %v1245
    %v1247 = vrot.slane %v819, 1
    %v1248 = vrot.slane %v820, 1
    %v1249 = vsel %vm1141, %v1247, %v1248
    %v1250 = vrot.slane %v821, 1
    %v1251 = vsel %vm1141, %v1248, %v1250
    %v1252 = vrot.slane %v822, 1
    %v1253 = vrot.slane %v823, 1
    %v1254 = vsel %vm1141, %v1252, %v1253
    %v1255 = vrot.slane %v824, 1
    %v1256 = vsel %vm1141, %v1253, %v1255
    %v1257 = vrot.slane %v825, 1
    %v1258 = vrot.slane %v826, 1
    %v1259 = vsel %vm1141, %v1257, %v1258
    %v1260 = vrot.slane %v827, 1
    %v1261 = vsel %vm1141, %v1258, %v1260
    %v1262 = vrot.slane %v828, 1
    %v1263 = vrot.slane %v829, 1
    %v1264 = vsel %vm1141, %v1262, %v1263
    %v1265 = vrot.slane %v830, 1
    %v1266 = vsel %vm1141, %v1263, %v1265
    %v1267 = vrot.slane %v831, 1
    %v1268 = vrot.slane %v832, 1
    %v1269 = vsel %vm1141, %v1267, %v1268
    %v1270 = vrot.slane %v833, 1
    %v1271 = vsel %vm1141, %v1268, %v1270
    %v1272 = vrot.slane %v834, 1
    %v1273 = vrot.slane %v835, 1
    %v1274 = vsel %vm1141, %v1272, %v1273
    %v1275 = vrot.slane %v836, 1
    %v1276 = vsel %vm1141, %v1273, %v1275
    %v1277 = vrot.slane %v837, 1
    %v1278 = vrot.slane %v838, 1
    %v1279 = vsel %vm1141, %v1277, %v1278
    %v1280 = vrot.slane %v839, 1
    %v1281 = vsel %vm1141, %v1278, %v1280
    %v1282 = vrot.slane %v840, 1
    %v1283 = vrot.slane %v841, 1
    %v1284 = vsel %vm1141, %v1282, %v1283
    %v1285 = vrot.slane %v842, 1
    %v1286 = vsel %vm1141, %v1283, %v1285
    %v1287 = vrot.slane %v843, 1
    %v1288 = vrot.slane %v844, 1
    %v1289 = vsel %vm1141, %v1287, %v1288
    %v1290 = vrot.slane %v845, 1
    %v1291 = vsel %vm1141, %v1288, %v1290
    %v1292 = vrot.slane %v846, 1
    %v1293 = vrot.slane %v847, 1
    %v1294 = vsel %vm1141, %v1292, %v1293
    %v1295 = vrot.slane %v848, 1
    %v1296 = vsel %vm1141, %v1293, %v1295
    %v1297 = vrot.slane %v849, 1
    %v1298 = vrot.slane %v850, 1
    %v1299 = vsel %vm1141, %v1297, %v1298
    %v1300 = vrot.slane %v851, 1
    %v1301 = vsel %vm1141, %v1298, %v1300
    %1302 = vrot.lane.b32.xlu0 %v1144, 4
    %v1303 = vpop.permute.xlu0 %1302
    %1304 = vrot.lane.b32.xlu0 %v1146, 4
    %v1305 = vpop.permute.xlu0 %1304
    %1306 = vrot.lane.b32.xlu0 %v1149, 4
    %v1307 = vpop.permute.xlu0 %1306
    %1308 = vrot.lane.b32.xlu0 %v1151, 4
    %v1309 = vpop.permute.xlu0 %1308
    %1310 = vrot.lane.b32.xlu0 %v1154, 4
    %v1311 = vpop.permute.xlu0 %1310
    %1312 = vrot.lane.b32.xlu0 %v1156, 4
    %v1313 = vpop.permute.xlu0 %1312
    %1314 = vrot.lane.b32.xlu0 %v1159, 4
    %v1315 = vpop.permute.xlu0 %1314
    %1316 = vrot.lane.b32.xlu0 %v1161, 4
    %v1317 = vpop.permute.xlu0 %1316
    %1318 = vrot.lane.b32.xlu0 %v1164, 4
    %v1319 = vpop.permute.xlu0 %1318
    %1320 = vrot.lane.b32.xlu0 %v1166, 4
    %v1321 = vpop.permute.xlu0 %1320
    %1322 = vrot.lane.b32.xlu0 %v1169, 4
    %v1323 = vpop.permute.xlu0 %1322
    %1324 = vrot.lane.b32.xlu0 %v1171, 4
    %v1325 = vpop.permute.xlu0 %1324
    %1326 = vrot.lane.b32.xlu0 %v1174, 4
    %v1327 = vpop.permute.xlu0 %1326
    %1328 = vrot.lane.b32.xlu0 %v1176, 4
    %v1329 = vpop.permute.xlu0 %1328
    %1330 = vrot.lane.b32.xlu0 %v1179, 4
    %v1331 = vpop.permute.xlu0 %1330
    %1332 = vrot.lane.b32.xlu0 %v1181, 4
    %v1333 = vpop.permute.xlu0 %1332
    %1334 = vrot.lane.b32.xlu0 %v1184, 4
    %v1335 = vpop.permute.xlu0 %1334
    %1336 = vrot.lane.b32.xlu0 %v1186, 4
    %v1337 = vpop.permute.xlu0 %1336
    %1338 = vrot.lane.b32.xlu0 %v1189, 4
    %v1339 = vpop.permute.xlu0 %1338
    %1340 = vrot.lane.b32.xlu0 %v1191, 4
    %v1341 = vpop.permute.xlu0 %1340
    %1342 = vrot.lane.b32.xlu0 %v1194, 4
    %v1343 = vpop.permute.xlu0 %1342
    %1344 = vrot.lane.b32.xlu0 %v1196, 4
    %v1345 = vpop.permute.xlu0 %1344
    %1346 = vrot.lane.b32.xlu0 %v1199, 4
    %v1347 = vpop.permute.xlu0 %1346
    %1348 = vrot.lane.b32.xlu0 %v1201, 4
    %v1349 = vpop.permute.xlu0 %1348
    %1350 = vrot.lane.b32.xlu0 %v1204, 4
    %v1351 = vpop.permute.xlu0 %1350
    %1352 = vrot.lane.b32.xlu0 %v1206, 4
    %v1353 = vpop.permute.xlu0 %1352
    %1354 = vrot.lane.b32.xlu0 %v1209, 4
    %v1355 = vpop.permute.xlu0 %1354
    %1356 = vrot.lane.b32.xlu0 %v1211, 4
    %v1357 = vpop.permute.xlu0 %1356
    %1358 = vrot.lane.b32.xlu0 %v1214, 4
    %v1359 = vpop.permute.xlu0 %1358
    %1360 = vrot.lane.b32.xlu0 %v1216, 4
    %v1361 = vpop.permute.xlu0 %1360
    %1362 = vrot.lane.b32.xlu0 %v1219, 4
    %v1363 = vpop.permute.xlu0 %1362
    %1364 = vrot.lane.b32.xlu0 %v1221, 4
    %v1365 = vpop.permute.xlu0 %1364
    %1366 = vrot.lane.b32.xlu0 %v1224, 4
    %v1367 = vpop.permute.xlu0 %1366
    %1368 = vrot.lane.b32.xlu0 %v1226, 4
    %v1369 = vpop.permute.xlu0 %1368
    %1370 = vrot.lane.b32.xlu0 %v1229, 4
    %v1371 = vpop.permute.xlu0 %1370
    %1372 = vrot.lane.b32.xlu0 %v1231, 4
    %v1373 = vpop.permute.xlu0 %1372
    %1374 = vrot.lane.b32.xlu0 %v1234, 4
    %v1375 = vpop.permute.xlu0 %1374
    %1376 = vrot.lane.b32.xlu0 %v1236, 4
    %v1377 = vpop.permute.xlu0 %1376
    %1378 = vrot.lane.b32.xlu0 %v1239, 4
    %v1379 = vpop.permute.xlu0 %1378
    %1380 = vrot.lane.b32.xlu0 %v1241, 4
    %v1381 = vpop.permute.xlu0 %1380
    %1382 = vrot.lane.b32.xlu0 %v1244, 4
    %v1383 = vpop.permute.xlu0 %1382
    %1384 = vrot.lane.b32.xlu0 %v1246, 4
    %v1385 = vpop.permute.xlu0 %1384
    %1386 = vrot.lane.b32.xlu0 %v1249, 4
    %v1387 = vpop.permute.xlu0 %1386
    %1388 = vrot.lane.b32.xlu0 %v1251, 4
    %v1389 = vpop.permute.xlu0 %1388
    %1390 = vrot.lane.b32.xlu0 %v1254, 4
    %v1391 = vpop.permute.xlu0 %1390
    %1392 = vrot.lane.b32.xlu0 %v1256, 4
    %v1393 = vpop.permute.xlu0 %1392
    %1394 = vrot.lane.b32.xlu0 %v1259, 4
    %v1395 = vpop.permute.xlu0 %1394
    %1396 = vrot.lane.b32.xlu0 %v1261, 4
    %v1397 = vpop.permute.xlu0 %1396
    %1398 = vrot.lane.b32.xlu0 %v1264, 4
    %v1399 = vpop.permute.xlu0 %1398
    %1400 = vrot.lane.b32.xlu0 %v1266, 4
    %v1401 = vpop.permute.xlu0 %1400
    %1402 = vrot.lane.b32.xlu0 %v1269, 4
    %v1403 = vpop.permute.xlu0 %1402
    %1404 = vrot.lane.b32.xlu0 %v1271, 4
    %v1405 = vpop.permute.xlu0 %1404
    %1406 = vrot.lane.b32.xlu0 %v1274, 4
    %v1407 = vpop.permute.xlu0 %1406
    %1408 = vrot.lane.b32.xlu0 %v1276, 4
    %v1409 = vpop.permute.xlu0 %1408
    %1410 = vrot.lane.b32.xlu0 %v1279, 4
    %v1411 = vpop.permute.xlu0 %1410
    %1412 = vrot.lane.b32.xlu0 %v1281, 4
    %v1413 = vpop.permute.xlu0 %1412
    %1414 = vrot.lane.b32.xlu0 %v1284, 4
    %v1415 = vpop.permute.xlu0 %1414
    %1416 = vrot.lane.b32.xlu0 %v1286, 4
    %v1417 = vpop.permute.xlu0 %1416
    %1418 = vrot.lane.b32.xlu0 %v1289, 4
    %v1419 = vpop.permute.xlu0 %1418
    %1420 = vrot.lane.b32.xlu0 %v1291, 4
    %v1421 = vpop.permute.xlu0 %1420
    %1422 = vrot.lane.b32.xlu0 %v1294, 4
    %v1423 = vpop.permute.xlu0 %1422
    %1424 = vrot.lane.b32.xlu0 %v1296, 4
    %v1425 = vpop.permute.xlu0 %1424
    %1426 = vrot.lane.b32.xlu0 %v1299, 4
    %v1427 = vpop.permute.xlu0 %1426
    %1428 = vrot.lane.b32.xlu0 %v1301, 4
    %v1429 = vpop.permute.xlu0 %1428
    %vm1494 = vcmask 1045504
    %v1495 = vrot.slane %v756, 2
    %v1496 = vrot.slane %v757, 2
    %v1497 = vsel %vm1494, %v1495, %v1496
    %v1498 = vrot.slane %v758, 2
    %v1499 = vsel %vm1494, %v1496, %v1498
    %v1500 = vrot.slane %v759, 2
    %v1501 = vrot.slane %v760, 2
    %v1502 = vsel %vm1494, %v1500, %v1501
    %v1503 = vrot.slane %v761, 2
    %v1504 = vsel %vm1494, %v1501, %v1503
    %v1505 = vrot.slane %v762, 2
    %v1506 = vrot.slane %v763, 2
    %v1507 = vsel %vm1494, %v1505, %v1506
    %v1508 = vrot.slane %v764, 2
    %v1509 = vsel %vm1494, %v1506, %v1508
    %v1510 = vrot.slane %v765, 2
    %v1511 = vrot.slane %v766, 2
    %v1512 = vsel %vm1494, %v1510, %v1511
    %v1513 = vrot.slane %v767, 2
    %v1514 = vsel %vm1494, %v1511, %v1513
    %v1515 = vrot.slane %v768, 2
    %v1516 = vrot.slane %v769, 2
    %v1517 = vsel %vm1494, %v1515, %v1516
    %v1518 = vrot.slane %v770, 2
    %v1519 = vsel %vm1494, %v1516, %v1518
    %v1520 = vrot.slane %v771, 2
    %v1521 = vrot.slane %v772, 2
    %v1522 = vsel %vm1494, %v1520, %v1521
    %v1523 = vrot.slane %v773, 2
    %v1524 = vsel %vm1494, %v1521, %v1523
    %v1525 = vrot.slane %v774, 2
    %v1526 = vrot.slane %v775, 2
    %v1527 = vsel %vm1494, %v1525, %v1526
    %v1528 = vrot.slane %v776, 2
    %v1529 = vsel %vm1494, %v1526, %v1528
    %v1530 = vrot.slane %v777, 2
    %v1531 = vrot.slane %v778, 2
    %v1532 = vsel %vm1494, %v1530, %v1531
    %v1533 = vrot.slane %v779, 2
    %v1534 = vsel %vm1494, %v1531, %v1533
    %v1535 = vrot.slane %v780, 2
    %v1536 = vrot.slane %v781, 2
    %v1537 = vsel %vm1494, %v1535, %v1536
    %v1538 = vrot.slane %v782, 2
    %v1539 = vsel %vm1494, %v1536, %v1538
    %v1540 = vrot.slane %v783, 2
    %v1541 = vrot.slane %v784, 2
    %v1542 = vsel %vm1494, %v1540, %v1541
    %v1543 = vrot.slane %v785, 2
    %v1544 = vsel %vm1494, %v1541, %v1543
    %v1545 = vrot.slane %v786, 2
    %v1546 = vrot.slane %v787, 2
    %v1547 = vsel %vm1494, %v1545, %v1546
    %v1548 = vrot.slane %v788, 2
    %v1549 = vsel %vm1494, %v1546, %v1548
    %v1550 = vrot.slane %v789, 2
    %v1551 = vrot.slane %v790, 2
    %v1552 = vsel %vm1494, %v1550, %v1551
    %v1553 = vrot.slane %v791, 2
    %v1554 = vsel %vm1494, %v1551, %v1553
    %v1555 = vrot.slane %v792, 2
    %v1556 = vrot.slane %v793, 2
    %v1557 = vsel %vm1494, %v1555, %v1556
    %v1558 = vrot.slane %v794, 2
    %v1559 = vsel %vm1494, %v1556, %v1558
    %v1560 = vrot.slane %v795, 2
    %v1561 = vrot.slane %v796, 2
    %v1562 = vsel %vm1494, %v1560, %v1561
    %v1563 = vrot.slane %v797, 2
    %v1564 = vsel %vm1494, %v1561, %v1563
    %v1565 = vrot.slane %v798, 2
    %v1566 = vrot.slane %v799, 2
    %v1567 = vsel %vm1494, %v1565, %v1566
    %v1568 = vrot.slane %v800, 2
    %v1569 = vsel %vm1494, %v1566, %v1568
    %v1570 = vrot.slane %v801, 2
    %v1571 = vrot.slane %v802, 2
    %v1572 = vsel %vm1494, %v1570, %v1571
    %v1573 = vrot.slane %v803, 2
    %v1574 = vsel %vm1494, %v1571, %v1573
    %v1575 = vrot.slane %v804, 2
    %v1576 = vrot.slane %v805, 2
    %v1577 = vsel %vm1494, %v1575, %v1576
    %v1578 = vrot.slane %v806, 2
    %v1579 = vsel %vm1494, %v1576, %v1578
    %v1580 = vrot.slane %v807, 2
    %v1581 = vrot.slane %v808, 2
    %v1582 = vsel %vm1494, %v1580, %v1581
    %v1583 = vrot.slane %v809, 2
    %v1584 = vsel %vm1494, %v1581, %v1583
    %v1585 = vrot.slane %v810, 2
    %v1586 = vrot.slane %v811, 2
    %v1587 = vsel %vm1494, %v1585, %v1586
    %v1588 = vrot.slane %v812, 2
    %v1589 = vsel %vm1494, %v1586, %v1588
    %v1590 = vrot.slane %v813, 2
    %v1591 = vrot.slane %v814, 2
    %v1592 = vsel %vm1494, %v1590, %v1591
    %v1593 = vrot.slane %v815, 2
    %v1594 = vsel %vm1494, %v1591, %v1593
    %v1595 = vrot.slane %v816, 2
    %v1596 = vrot.slane %v817, 2
    %v1597 = vsel %vm1494, %v1595, %v1596
    %v1598 = vrot.slane %v818, 2
    %v1599 = vsel %vm1494, %v1596, %v1598
    %v1600 = vrot.slane %v819, 2
    %v1601 = vrot.slane %v820, 2
    %v1602 = vsel %vm1494, %v1600, %v1601
    %v1603 = vrot.slane %v821, 2
    %v1604 = vsel %vm1494, %v1601, %v1603
    %v1605 = vrot.slane %v822, 2
    %v1606 = vrot.slane %v823, 2
    %v1607 = vsel %vm1494, %v1605, %v1606
    %v1608 = vrot.slane %v824, 2
    %v1609 = vsel %vm1494, %v1606, %v1608
    %v1610 = vrot.slane %v825, 2
    %v1611 = vrot.slane %v826, 2
    %v1612 = vsel %vm1494, %v1610, %v1611
    %v1613 = vrot.slane %v827, 2
    %v1614 = vsel %vm1494, %v1611, %v1613
    %v1615 = vrot.slane %v828, 2
    %v1616 = vrot.slane %v829, 2
    %v1617 = vsel %vm1494, %v1615, %v1616
    %v1618 = vrot.slane %v830, 2
    %v1619 = vsel %vm1494, %v1616, %v1618
    %v1620 = vrot.slane %v831, 2
    %v1621 = vrot.slane %v832, 2
    %v1622 = vsel %vm1494, %v1620, %v1621
    %v1623 = vrot.slane %v833, 2
    %v1624 = vsel %vm1494, %v1621, %v1623
    %v1625 = vrot.slane %v834, 2
    %v1626 = vrot.slane %v835, 2
    %v1627 = vsel %vm1494, %v1625, %v1626
    %v1628 = vrot.slane %v836, 2
    %v1629 = vsel %vm1494, %v1626, %v1628
    %v1630 = vrot.slane %v837, 2
    %v1631 = vrot.slane %v838, 2
    %v1632 = vsel %vm1494, %v1630, %v1631
    %v1633 = vrot.slane %v839, 2
    %v1634 = vsel %vm1494, %v1631, %v1633
    %v1635 = vrot.slane %v840, 2
    %v1636 = vrot.slane %v841, 2
    %v1637 = vsel %vm1494, %v1635, %v1636
    %v1638 = vrot.slane %v842, 2
    %v1639 = vsel %vm1494, %v1636, %v1638
    %v1640 = vrot.slane %v843, 2
    %v1641 = vrot.slane %v844, 2
    %v1642 = vsel %vm1494, %v1640, %v1641
    %v1643 = vrot.slane %v845, 2
    %v1644 = vsel %vm1494, %v1641, %v1643
    %v1645 = vrot.slane %v846, 2
    %v1646 = vrot.slane %v847, 2
    %v1647 = vsel %vm1494, %v1645, %v1646
    %v1648 = vrot.slane %v848, 2
    %v1649 = vsel %vm1494, %v1646, %v1648
    %v1650 = vrot.slane %v849, 2
    %v1651 = vrot.slane %v850, 2
    %v1652 = vsel %vm1494, %v1650, %v1651
    %v1653 = vrot.slane %v851, 2
    %v1654 = vsel %vm1494, %v1651, %v1653
    %1655 = vrot.lane.b32.xlu0 %v1497, 8
    %v1656 = vpop.permute.xlu0 %1655
    %1657 = vrot.lane.b32.xlu0 %v1499, 8
    %v1658 = vpop.permute.xlu0 %1657
    %1659 = vrot.lane.b32.xlu0 %v1502, 8
    %v1660 = vpop.permute.xlu0 %1659
    %1661 = vrot.lane.b32.xlu0 %v1504, 8
    %v1662 = vpop.permute.xlu0 %1661
    %1663 = vrot.lane.b32.xlu0 %v1507, 8
    %v1664 = vpop.permute.xlu0 %1663
    %1665 = vrot.lane.b32.xlu0 %v1509, 8
    %v1666 = vpop.permute.xlu0 %1665
    %1667 = vrot.lane.b32.xlu0 %v1512, 8
    %v1668 = vpop.permute.xlu0 %1667
    %1669 = vrot.lane.b32.xlu0 %v1514, 8
    %v1670 = vpop.permute.xlu0 %1669
    %1671 = vrot.lane.b32.xlu0 %v1517, 8
    %v1672 = vpop.permute.xlu0 %1671
    %1673 = vrot.lane.b32.xlu0 %v1519, 8
    %v1674 = vpop.permute.xlu0 %1673
    %1675 = vrot.lane.b32.xlu0 %v1522, 8
    %v1676 = vpop.permute.xlu0 %1675
    %1677 = vrot.lane.b32.xlu0 %v1524, 8
    %v1678 = vpop.permute.xlu0 %1677
    %1679 = vrot.lane.b32.xlu0 %v1527, 8
    %v1680 = vpop.permute.xlu0 %1679
    %1681 = vrot.lane.b32.xlu0 %v1529, 8
    %v1682 = vpop.permute.xlu0 %1681
    %1683 = vrot.lane.b32.xlu0 %v1532, 8
    %v1684 = vpop.permute.xlu0 %1683
    %1685 = vrot.lane.b32.xlu0 %v1534, 8
    %v1686 = vpop.permute.xlu0 %1685
    %1687 = vrot.lane.b32.xlu0 %v1537, 8
    %v1688 = vpop.permute.xlu0 %1687
    %1689 = vrot.lane.b32.xlu0 %v1539, 8
    %v1690 = vpop.permute.xlu0 %1689
    %1691 = vrot.lane.b32.xlu0 %v1542, 8
    %v1692 = vpop.permute.xlu0 %1691
    %1693 = vrot.lane.b32.xlu0 %v1544, 8
    %v1694 = vpop.permute.xlu0 %1693
    %1695 = vrot.lane.b32.xlu0 %v1547, 8
    %v1696 = vpop.permute.xlu0 %1695
    %1697 = vrot.lane.b32.xlu0 %v1549, 8
    %v1698 = vpop.permute.xlu0 %1697
    %1699 = vrot.lane.b32.xlu0 %v1552, 8
    %v1700 = vpop.permute.xlu0 %1699
    %1701 = vrot.lane.b32.xlu0 %v1554, 8
    %v1702 = vpop.permute.xlu0 %1701
    %1703 = vrot.lane.b32.xlu0 %v1557, 8
    %v1704 = vpop.permute.xlu0 %1703
    %1705 = vrot.lane.b32.xlu0 %v1559, 8
    %v1706 = vpop.permute.xlu0 %1705
    %1707 = vrot.lane.b32.xlu0 %v1562, 8
    %v1708 = vpop.permute.xlu0 %1707
    %1709 = vrot.lane.b32.xlu0 %v1564, 8
    %v1710 = vpop.permute.xlu0 %1709
    %1711 = vrot.lane.b32.xlu0 %v1567, 8
    %v1712 = vpop.permute.xlu0 %1711
    %1713 = vrot.lane.b32.xlu0 %v1569, 8
    %v1714 = vpop.permute.xlu0 %1713
    %1715 = vrot.lane.b32.xlu0 %v1572, 8
    %v1716 = vpop.permute.xlu0 %1715
    %1717 = vrot.lane.b32.xlu0 %v1574, 8
    %v1718 = vpop.permute.xlu0 %1717
    %1719 = vrot.lane.b32.xlu0 %v1577, 8
    %v1720 = vpop.permute.xlu0 %1719
    %1721 = vrot.lane.b32.xlu0 %v1579, 8
    %v1722 = vpop.permute.xlu0 %1721
    %1723 = vrot.lane.b32.xlu0 %v1582, 8
    %v1724 = vpop.permute.xlu0 %1723
    %1725 = vrot.lane.b32.xlu0 %v1584, 8
    %v1726 = vpop.permute.xlu0 %1725
    %1727 = vrot.lane.b32.xlu0 %v1587, 8
    %v1728 = vpop.permute.xlu0 %1727
    %1729 = vrot.lane.b32.xlu0 %v1589, 8
    %v1730 = vpop.permute.xlu0 %1729
    %1731 = vrot.lane.b32.xlu0 %v1592, 8
    %v1732 = vpop.permute.xlu0 %1731
    %1733 = vrot.lane.b32.xlu0 %v1594, 8
    %v1734 = vpop.permute.xlu0 %1733
    %1735 = vrot.lane.b32.xlu0 %v1597, 8
    %v1736 = vpop.permute.xlu0 %1735
    %1737 = vrot.lane.b32.xlu0 %v1599, 8
    %v1738 = vpop.permute.xlu0 %1737
    %1739 = vrot.lane.b32.xlu0 %v1602, 8
    %v1740 = vpop.permute.xlu0 %1739
    %1741 = vrot.lane.b32.xlu0 %v1604, 8
    %v1742 = vpop.permute.xlu0 %1741
    %1743 = vrot.lane.b32.xlu0 %v1607, 8
    %v1744 = vpop.permute.xlu0 %1743
    %1745 = vrot.lane.b32.xlu0 %v1609, 8
    %v1746 = vpop.permute.xlu0 %1745
    %1747 = vrot.lane.b32.xlu0 %v1612, 8
    %v1748 = vpop.permute.xlu0 %1747
    %1749 = vrot.lane.b32.xlu0 %v1614, 8
    %v1750 = vpop.permute.xlu0 %1749
    %1751 = vrot.lane.b32.xlu0 %v1617, 8
    %v1752 = vpop.permute.xlu0 %1751
    %1753 = vrot.lane.b32.xlu0 %v1619, 8
    %v1754 = vpop.permute.xlu0 %1753
    %1755 = vrot.lane.b32.xlu0 %v1622, 8
    %v1756 = vpop.permute.xlu0 %1755
    %1757 = vrot.lane.b32.xlu0 %v1624, 8
    %v1758 = vpop.permute.xlu0 %1757
    %1759 = vrot.lane.b32.xlu0 %v1627, 8
    %v1760 = vpop.permute.xlu0 %1759
    %1761 = vrot.lane.b32.xlu0 %v1629, 8
    %v1762 = vpop.permute.xlu0 %1761
    %1763 = vrot.lane.b32.xlu0 %v1632, 8
    %v1764 = vpop.permute.xlu0 %1763
    %1765 = vrot.lane.b32.xlu0 %v1634, 8
    %v1766 = vpop.permute.xlu0 %1765
    %1767 = vrot.lane.b32.xlu0 %v1637, 8
    %v1768 = vpop.permute.xlu0 %1767
    %1769 = vrot.lane.b32.xlu0 %v1639, 8
    %v1770 = vpop.permute.xlu0 %1769
    %1771 = vrot.lane.b32.xlu0 %v1642, 8
    %v1772 = vpop.permute.xlu0 %1771
    %1773 = vrot.lane.b32.xlu0 %v1644, 8
    %v1774 = vpop.permute.xlu0 %1773
    %1775 = vrot.lane.b32.xlu0 %v1647, 8
    %v1776 = vpop.permute.xlu0 %1775
    %1777 = vrot.lane.b32.xlu0 %v1649, 8
    %v1778 = vpop.permute.xlu0 %1777
    %1779 = vrot.lane.b32.xlu0 %v1652, 8
    %v1780 = vpop.permute.xlu0 %1779
    %1781 = vrot.lane.b32.xlu0 %v1654, 8
    %v1782 = vpop.permute.xlu0 %1781
    %1911 = vrot.lane.b32.xlu0 %v852, 12
    %v1912 = vpop.permute.xlu0 %1911
    %1913 = vrot.lane.b32.xlu0 %v853, 12
    %v1914 = vpop.permute.xlu0 %1913
    %1915 = vrot.lane.b32.xlu0 %v855, 12
    %v1916 = vpop.permute.xlu0 %1915
    %1917 = vrot.lane.b32.xlu0 %v856, 12
    %v1918 = vpop.permute.xlu0 %1917
    %1919 = vrot.lane.b32.xlu0 %v858, 12
    %v1920 = vpop.permute.xlu0 %1919
    %1921 = vrot.lane.b32.xlu0 %v859, 12
    %v1922 = vpop.permute.xlu0 %1921
    %1923 = vrot.lane.b32.xlu0 %v861, 12
    %v1924 = vpop.permute.xlu0 %1923
    %1925 = vrot.lane.b32.xlu0 %v862, 12
    %v1926 = vpop.permute.xlu0 %1925
    %1927 = vrot.lane.b32.xlu0 %v864, 12
    %v1928 = vpop.permute.xlu0 %1927
    %1929 = vrot.lane.b32.xlu0 %v865, 12
    %v1930 = vpop.permute.xlu0 %1929
    %1931 = vrot.lane.b32.xlu0 %v867, 12
    %v1932 = vpop.permute.xlu0 %1931
    %1933 = vrot.lane.b32.xlu0 %v868, 12
    %v1934 = vpop.permute.xlu0 %1933
    %1935 = vrot.lane.b32.xlu0 %v870, 12
    %v1936 = vpop.permute.xlu0 %1935
    %1937 = vrot.lane.b32.xlu0 %v871, 12
    %v1938 = vpop.permute.xlu0 %1937
    %1939 = vrot.lane.b32.xlu0 %v873, 12
    %v1940 = vpop.permute.xlu0 %1939
    %1941 = vrot.lane.b32.xlu0 %v874, 12
    %v1942 = vpop.permute.xlu0 %1941
    %1943 = vrot.lane.b32.xlu0 %v876, 12
    %v1944 = vpop.permute.xlu0 %1943
    %1945 = vrot.lane.b32.xlu0 %v877, 12
    %v1946 = vpop.permute.xlu0 %1945
    %1947 = vrot.lane.b32.xlu0 %v879, 12
    %v1948 = vpop.permute.xlu0 %1947
    %1949 = vrot.lane.b32.xlu0 %v880, 12
    %v1950 = vpop.permute.xlu0 %1949
    %1951 = vrot.lane.b32.xlu0 %v882, 12
    %v1952 = vpop.permute.xlu0 %1951
    %1953 = vrot.lane.b32.xlu0 %v883, 12
    %v1954 = vpop.permute.xlu0 %1953
    %1955 = vrot.lane.b32.xlu0 %v885, 12
    %v1956 = vpop.permute.xlu0 %1955
    %1957 = vrot.lane.b32.xlu0 %v886, 12
    %v1958 = vpop.permute.xlu0 %1957
    %1959 = vrot.lane.b32.xlu0 %v888, 12
    %v1960 = vpop.permute.xlu0 %1959
    %1961 = vrot.lane.b32.xlu0 %v889, 12
    %v1962 = vpop.permute.xlu0 %1961
    %1963 = vrot.lane.b32.xlu0 %v891, 12
    %v1964 = vpop.permute.xlu0 %1963
    %1965 = vrot.lane.b32.xlu0 %v892, 12
    %v1966 = vpop.permute.xlu0 %1965
    %1967 = vrot.lane.b32.xlu0 %v894, 12
    %v1968 = vpop.permute.xlu0 %1967
    %1969 = vrot.lane.b32.xlu0 %v895, 12
    %v1970 = vpop.permute.xlu0 %1969
    %1971 = vrot.lane.b32.xlu0 %v897, 12
    %v1972 = vpop.permute.xlu0 %1971
    %1973 = vrot.lane.b32.xlu0 %v898, 12
    %v1974 = vpop.permute.xlu0 %1973
    %1975 = vrot.lane.b32.xlu0 %v900, 12
    %v1976 = vpop.permute.xlu0 %1975
    %1977 = vrot.lane.b32.xlu0 %v901, 12
    %v1978 = vpop.permute.xlu0 %1977
    %1979 = vrot.lane.b32.xlu0 %v903, 12
    %v1980 = vpop.permute.xlu0 %1979
    %1981 = vrot.lane.b32.xlu0 %v904, 12
    %v1982 = vpop.permute.xlu0 %1981
    %1983 = vrot.lane.b32.xlu0 %v906, 12
    %v1984 = vpop.permute.xlu0 %1983
    %1985 = vrot.lane.b32.xlu0 %v907, 12
    %v1986 = vpop.permute.xlu0 %1985
    %1987 = vrot.lane.b32.xlu0 %v909, 12
    %v1988 = vpop.permute.xlu0 %1987
    %1989 = vrot.lane.b32.xlu0 %v910, 12
    %v1990 = vpop.permute.xlu0 %1989
    %1991 = vrot.lane.b32.xlu0 %v912, 12
    %v1992 = vpop.permute.xlu0 %1991
    %1993 = vrot.lane.b32.xlu0 %v913, 12
    %v1994 = vpop.permute.xlu0 %1993
    %1995 = vrot.lane.b32.xlu0 %v915, 12
    %v1996 = vpop.permute.xlu0 %1995
    %1997 = vrot.lane.b32.xlu0 %v916, 12
    %v1998 = vpop.permute.xlu0 %1997
    %1999 = vrot.lane.b32.xlu0 %v918, 12
    %v2000 = vpop.permute.xlu0 %1999
    %2001 = vrot.lane.b32.xlu0 %v919, 12
    %v2002 = vpop.permute.xlu0 %2001
    %2003 = vrot.lane.b32.xlu0 %v921, 12
    %v2004 = vpop.permute.xlu0 %2003
    %2005 = vrot.lane.b32.xlu0 %v922, 12
    %v2006 = vpop.permute.xlu0 %2005
    %2007 = vrot.lane.b32.xlu0 %v924, 12
    %v2008 = vpop.permute.xlu0 %2007
    %2009 = vrot.lane.b32.xlu0 %v925, 12
    %v2010 = vpop.permute.xlu0 %2009
    %2011 = vrot.lane.b32.xlu0 %v927, 12
    %v2012 = vpop.permute.xlu0 %2011
    %2013 = vrot.lane.b32.xlu0 %v928, 12
    %v2014 = vpop.permute.xlu0 %2013
    %2015 = vrot.lane.b32.xlu0 %v930, 12
    %v2016 = vpop.permute.xlu0 %2015
    %2017 = vrot.lane.b32.xlu0 %v931, 12
    %v2018 = vpop.permute.xlu0 %2017
    %2019 = vrot.lane.b32.xlu0 %v933, 12
    %v2020 = vpop.permute.xlu0 %2019
    %2021 = vrot.lane.b32.xlu0 %v934, 12
    %v2022 = vpop.permute.xlu0 %2021
    %2023 = vrot.lane.b32.xlu0 %v936, 12
    %v2024 = vpop.permute.xlu0 %2023
    %2025 = vrot.lane.b32.xlu0 %v937, 12
    %v2026 = vpop.permute.xlu0 %2025
    %2027 = vrot.lane.b32.xlu0 %v939, 12
    %v2028 = vpop.permute.xlu0 %2027
    %2029 = vrot.lane.b32.xlu0 %v940, 12
    %v2030 = vpop.permute.xlu0 %2029
    %2031 = vrot.lane.b32.xlu0 %v942, 12
    %v2032 = vpop.permute.xlu0 %2031
    %2033 = vrot.lane.b32.xlu0 %v943, 12
    %v2034 = vpop.permute.xlu0 %2033
    %2035 = vrot.lane.b32.xlu0 %v945, 12
    %v2036 = vpop.permute.xlu0 %2035
    %2037 = vrot.lane.b32.xlu0 %v946, 12
    %v2038 = vpop.permute.xlu0 %2037
    %v2135 = vrot.slane %v852, 1
    %v2136 = vrot.slane %v853, 1
    %v2137 = vsel %vm1141, %v2135, %v2136
    %v2138 = vrot.slane %v854, 1
    %v2139 = vsel %vm1141, %v2136, %v2138
    %v2140 = vrot.slane %v855, 1
    %v2141 = vrot.slane %v856, 1
    %v2142 = vsel %vm1141, %v2140, %v2141
    %v2143 = vrot.slane %v857, 1
    %v2144 = vsel %vm1141, %v2141, %v2143
    %v2145 = vrot.slane %v858, 1
    %v2146 = vrot.slane %v859, 1
    %v2147 = vsel %vm1141, %v2145, %v2146
    %v2148 = vrot.slane %v860, 1
    %v2149 = vsel %vm1141, %v2146, %v2148
    %v2150 = vrot.slane %v861, 1
    %v2151 = vrot.slane %v862, 1
    %v2152 = vsel %vm1141, %v2150, %v2151
    %v2153 = vrot.slane %v863, 1
    %v2154 = vsel %vm1141, %v2151, %v2153
    %v2155 = vrot.slane %v864, 1
    %v2156 = vrot.slane %v865, 1
    %v2157 = vsel %vm1141, %v2155, %v2156
    %v2158 = vrot.slane %v866, 1
    %v2159 = vsel %vm1141, %v2156, %v2158
    %v2160 = vrot.slane %v867, 1
    %v2161 = vrot.slane %v868, 1
    %v2162 = vsel %vm1141, %v2160, %v2161
    %v2163 = vrot.slane %v869, 1
    %v2164 = vsel %vm1141, %v2161, %v2163
    %v2165 = vrot.slane %v870, 1
    %v2166 = vrot.slane %v871, 1
    %v2167 = vsel %vm1141, %v2165, %v2166
    %v2168 = vrot.slane %v872, 1
    %v2169 = vsel %vm1141, %v2166, %v2168
    %v2170 = vrot.slane %v873, 1
    %v2171 = vrot.slane %v874, 1
    %v2172 = vsel %vm1141, %v2170, %v2171
    %v2173 = vrot.slane %v875, 1
    %v2174 = vsel %vm1141, %v2171, %v2173
    %v2175 = vrot.slane %v876, 1
    %v2176 = vrot.slane %v877, 1
    %v2177 = vsel %vm1141, %v2175, %v2176
    %v2178 = vrot.slane %v878, 1
    %v2179 = vsel %vm1141, %v2176, %v2178
    %v2180 = vrot.slane %v879, 1
    %v2181 = vrot.slane %v880, 1
    %v2182 = vsel %vm1141, %v2180, %v2181
    %v2183 = vrot.slane %v881, 1
    %v2184 = vsel %vm1141, %v2181, %v2183
    %v2185 = vrot.slane %v882, 1
    %v2186 = vrot.slane %v883, 1
    %v2187 = vsel %vm1141, %v2185, %v2186
    %v2188 = vrot.slane %v884, 1
    %v2189 = vsel %vm1141, %v2186, %v2188
    %v2190 = vrot.slane %v885, 1
    %v2191 = vrot.slane %v886, 1
    %v2192 = vsel %vm1141, %v2190, %v2191
    %v2193 = vrot.slane %v887, 1
    %v2194 = vsel %vm1141, %v2191, %v2193
    %v2195 = vrot.slane %v888, 1
    %v2196 = vrot.slane %v889, 1
    %v2197 = vsel %vm1141, %v2195, %v2196
    %v2198 = vrot.slane %v890, 1
    %v2199 = vsel %vm1141, %v2196, %v2198
    %v2200 = vrot.slane %v891, 1
    %v2201 = vrot.slane %v892, 1
    %v2202 = vsel %vm1141, %v2200, %v2201
    %v2203 = vrot.slane %v893, 1
    %v2204 = vsel %vm1141, %v2201, %v2203
    %v2205 = vrot.slane %v894, 1
    %v2206 = vrot.slane %v895, 1
    %v2207 = vsel %vm1141, %v2205, %v2206
    %v2208 = vrot.slane %v896, 1
    %v2209 = vsel %vm1141, %v2206, %v2208
    %v2210 = vrot.slane %v897, 1
    %v2211 = vrot.slane %v898, 1
    %v2212 = vsel %vm1141, %v2210, %v2211
    %v2213 = vrot.slane %v899, 1
    %v2214 = vsel %vm1141, %v2211, %v2213
    %v2215 = vrot.slane %v900, 1
    %v2216 = vrot.slane %v901, 1
    %v2217 = vsel %vm1141, %v2215, %v2216
    %v2218 = vrot.slane %v902, 1
    %v2219 = vsel %vm1141, %v2216, %v2218
    %v2220 = vrot.slane %v903, 1
    %v2221 = vrot.slane %v904, 1
    %v2222 = vsel %vm1141, %v2220, %v2221
    %v2223 = vrot.slane %v905, 1
    %v2224 = vsel %vm1141, %v2221, %v2223
    %v2225 = vrot.slane %v906, 1
    %v2226 = vrot.slane %v907, 1
    %v2227 = vsel %vm1141, %v2225, %v2226
    %v2228 = vrot.slane %v908, 1
    %v2229 = vsel %vm1141, %v2226, %v2228
    %v2230 = vrot.slane %v909, 1
    %v2231 = vrot.slane %v910, 1
    %v2232 = vsel %vm1141, %v2230, %v2231
    %v2233 = vrot.slane %v911, 1
    %v2234 = vsel %vm1141, %v2231, %v2233
    %v2235 = vrot.slane %v912, 1
    %v2236 = vrot.slane %v913, 1
    %v2237 = vsel %vm1141, %v2235, %v2236
    %v2238 = vrot.slane %v914, 1
    %v2239 = vsel %vm1141, %v2236, %v2238
    %v2240 = vrot.slane %v915, 1
    %v2241 = vrot.slane %v916, 1
    %v2242 = vsel %vm1141, %v2240, %v2241
    %v2243 = vrot.slane %v917, 1
    %v2244 = vsel %vm1141, %v2241, %v2243
    %v2245 = vrot.slane %v918, 1
    %v2246 = vrot.slane %v919, 1
    %v2247 = vsel %vm1141, %v2245, %v2246
    %v2248 = vrot.slane %v920, 1
    %v2249 = vsel %vm1141, %v2246, %v2248
    %v2250 = vrot.slane %v921, 1
    %v2251 = vrot.slane %v922, 1
    %v2252 = vsel %vm1141, %v2250, %v2251
    %v2253 = vrot.slane %v923, 1
    %v2254 = vsel %vm1141, %v2251, %v2253
    %v2255 = vrot.slane %v924, 1
    %v2256 = vrot.slane %v925, 1
    %v2257 = vsel %vm1141, %v2255, %v2256
    %v2258 = vrot.slane %v926, 1
    %v2259 = vsel %vm1141, %v2256, %v2258
    %v2260 = vrot.slane %v927, 1
    %v2261 = vrot.slane %v928, 1
    %v2262 = vsel %vm1141, %v2260, %v2261
    %v2263 = vrot.slane %v929, 1
    %v2264 = vsel %vm1141, %v2261, %v2263
    %v2265 = vrot.slane %v930, 1
    %v2266 = vrot.slane %v931, 1
    %v2267 = vsel %vm1141, %v2265, %v2266
    %v2268 = vrot.slane %v932, 1
    %v2269 = vsel %vm1141, %v2266, %v2268
    %v2270 = vrot.slane %v933, 1
    %v2271 = vrot.slane %v934, 1
    %v2272 = vsel %vm1141, %v2270, %v2271
    %v2273 = vrot.slane %v935, 1
    %v2274 = vsel %vm1141, %v2271, %v2273
    %v2275 = vrot.slane %v936, 1
    %v2276 = vrot.slane %v937, 1
    %v2277 = vsel %vm1141, %v2275, %v2276
    %v2278 = vrot.slane %v938, 1
    %v2279 = vsel %vm1141, %v2276, %v2278
    %v2280 = vrot.slane %v939, 1
    %v2281 = vrot.slane %v940, 1
    %v2282 = vsel %vm1141, %v2280, %v2281
    %v2283 = vrot.slane %v941, 1
    %v2284 = vsel %vm1141, %v2281, %v2283
    %v2285 = vrot.slane %v942, 1
    %v2286 = vrot.slane %v943, 1
    %v2287 = vsel %vm1141, %v2285, %v2286
    %v2288 = vrot.slane %v944, 1
    %v2289 = vsel %vm1141, %v2286, %v2288
    %v2290 = vrot.slane %v945, 1
    %v2291 = vrot.slane %v946, 1
    %v2292 = vsel %vm1141, %v2290, %v2291
    %v2293 = vrot.slane %v947, 1
    %v2294 = vsel %vm1141, %v2291, %v2293
    %2295 = vrot.lane.b32.xlu0 %v2137, 16
    %v2296 = vpop.permute.xlu0 %2295
    %2297 = vrot.lane.b32.xlu0 %v2139, 16
    %v2298 = vpop.permute.xlu0 %2297
    %2299 = vrot.lane.b32.xlu0 %v2142, 16
    %v2300 = vpop.permute.xlu0 %2299
    %2301 = vrot.lane.b32.xlu0 %v2144, 16
    %v2302 = vpop.permute.xlu0 %2301
    %2303 = vrot.lane.b32.xlu0 %v2147, 16
    %v2304 = vpop.permute.xlu0 %2303
    %2305 = vrot.lane.b32.xlu0 %v2149, 16
    %v2306 = vpop.permute.xlu0 %2305
    %2307 = vrot.lane.b32.xlu0 %v2152, 16
    %v2308 = vpop.permute.xlu0 %2307
    %2309 = vrot.lane.b32.xlu0 %v2154, 16
    %v2310 = vpop.permute.xlu0 %2309
    %2311 = vrot.lane.b32.xlu0 %v2157, 16
    %v2312 = vpop.permute.xlu0 %2311
    %2313 = vrot.lane.b32.xlu0 %v2159, 16
    %v2314 = vpop.permute.xlu0 %2313
    %2315 = vrot.lane.b32.xlu0 %v2162, 16
    %v2316 = vpop.permute.xlu0 %2315
    %2317 = vrot.lane.b32.xlu0 %v2164, 16
    %v2318 = vpop.permute.xlu0 %2317
    %2319 = vrot.lane.b32.xlu0 %v2167, 16
    %v2320 = vpop.permute.xlu0 %2319
    %2321 = vrot.lane.b32.xlu0 %v2169, 16
    %v2322 = vpop.permute.xlu0 %2321
    %2323 = vrot.lane.b32.xlu0 %v2172, 16
    %v2324 = vpop.permute.xlu0 %2323
    %2325 = vrot.lane.b32.xlu0 %v2174, 16
    %v2326 = vpop.permute.xlu0 %2325
    %2327 = vrot.lane.b32.xlu0 %v2177, 16
    %v2328 = vpop.permute.xlu0 %2327
    %2329 = vrot.lane.b32.xlu0 %v2179, 16
    %v2330 = vpop.permute.xlu0 %2329
    %2331 = vrot.lane.b32.xlu0 %v2182, 16
    %v2332 = vpop.permute.xlu0 %2331
    %2333 = vrot.lane.b32.xlu0 %v2184, 16
    %v2334 = vpop.permute.xlu0 %2333
    %2335 = vrot.lane.b32.xlu0 %v2187, 16
    %v2336 = vpop.permute.xlu0 %2335
    %2337 = vrot.lane.b32.xlu0 %v2189, 16
    %v2338 = vpop.permute.xlu0 %2337
    %2339 = vrot.lane.b32.xlu0 %v2192, 16
    %v2340 = vpop.permute.xlu0 %2339
    %2341 = vrot.lane.b32.xlu0 %v2194, 16
    %v2342 = vpop.permute.xlu0 %2341
    %2343 = vrot.lane.b32.xlu0 %v2197, 16
    %v2344 = vpop.permute.xlu0 %2343
    %2345 = vrot.lane.b32.xlu0 %v2199, 16
    %v2346 = vpop.permute.xlu0 %2345
    %2347 = vrot.lane.b32.xlu0 %v2202, 16
    %v2348 = vpop.permute.xlu0 %2347
    %2349 = vrot.lane.b32.xlu0 %v2204, 16
    %v2350 = vpop.permute.xlu0 %2349
    %2351 = vrot.lane.b32.xlu0 %v2207, 16
    %v2352 = vpop.permute.xlu0 %2351
    %2353 = vrot.lane.b32.xlu0 %v2209, 16
    %v2354 = vpop.permute.xlu0 %2353
    %2355 = vrot.lane.b32.xlu0 %v2212, 16
    %v2356 = vpop.permute.xlu0 %2355
    %2357 = vrot.lane.b32.xlu0 %v2214, 16
    %v2358 = vpop.permute.xlu0 %2357
    %2359 = vrot.lane.b32.xlu0 %v2217, 16
    %v2360 = vpop.permute.xlu0 %2359
    %2361 = vrot.lane.b32.xlu0 %v2219, 16
    %v2362 = vpop.permute.xlu0 %2361
    %2363 = vrot.lane.b32.xlu0 %v2222, 16
    %v2364 = vpop.permute.xlu0 %2363
    %2365 = vrot.lane.b32.xlu0 %v2224, 16
    %v2366 = vpop.permute.xlu0 %2365
    %2367 = vrot.lane.b32.xlu0 %v2227, 16
    %v2368 = vpop.permute.xlu0 %2367
    %2369 = vrot.lane.b32.xlu0 %v2229, 16
    %v2370 = vpop.permute.xlu0 %2369
    %2371 = vrot.lane.b32.xlu0 %v2232, 16
    %v2372 = vpop.permute.xlu0 %2371
    %2373 = vrot.lane.b32.xlu0 %v2234, 16
    %v2374 = vpop.permute.xlu0 %2373
    %2375 = vrot.lane.b32.xlu0 %v2237, 16
    %v2376 = vpop.permute.xlu0 %2375
    %2377 = vrot.lane.b32.xlu0 %v2239, 16
    %v2378 = vpop.permute.xlu0 %2377
    %2379 = vrot.lane.b32.xlu0 %v2242, 16
    %v2380 = vpop.permute.xlu0 %2379
    %2381 = vrot.lane.b32.xlu0 %v2244, 16
    %v2382 = vpop.permute.xlu0 %2381
    %2383 = vrot.lane.b32.xlu0 %v2247, 16
    %v2384 = vpop.permute.xlu0 %2383
    %2385 = vrot.lane.b32.xlu0 %v2249, 16
    %v2386 = vpop.permute.xlu0 %2385
    %2387 = vrot.lane.b32.xlu0 %v2252, 16
    %v2388 = vpop.permute.xlu0 %2387
    %2389 = vrot.lane.b32.xlu0 %v2254, 16
    %v2390 = vpop.permute.xlu0 %2389
    %2391 = vrot.lane.b32.xlu0 %v2257, 16
    %v2392 = vpop.permute.xlu0 %2391
    %2393 = vrot.lane.b32.xlu0 %v2259, 16
    %v2394 = vpop.permute.xlu0 %2393
    %2395 = vrot.lane.b32.xlu0 %v2262, 16
    %v2396 = vpop.permute.xlu0 %2395
    %2397 = vrot.lane.b32.xlu0 %v2264, 16
    %v2398 = vpop.permute.xlu0 %2397
    %2399 = vrot.lane.b32.xlu0 %v2267, 16
    %v2400 = vpop.permute.xlu0 %2399
    %2401 = vrot.lane.b32.xlu0 %v2269, 16
    %v2402 = vpop.permute.xlu0 %2401
    %2403 = vrot.lane.b32.xlu0 %v2272, 16
    %v2404 = vpop.permute.xlu0 %2403
    %2405 = vrot.lane.b32.xlu0 %v2274, 16
    %v2406 = vpop.permute.xlu0 %2405
    %2407 = vrot.lane.b32.xlu0 %v2277, 16
    %v2408 = vpop.permute.xlu0 %2407
    %2409 = vrot.lane.b32.xlu0 %v2279, 16
    %v2410 = vpop.permute.xlu0 %2409
    %2411 = vrot.lane.b32.xlu0 %v2282, 16
    %v2412 = vpop.permute.xlu0 %2411
    %2413 = vrot.lane.b32.xlu0 %v2284, 16
    %v2414 = vpop.permute.xlu0 %2413
    %2415 = vrot.lane.b32.xlu0 %v2287, 16
    %v2416 = vpop.permute.xlu0 %2415
    %2417 = vrot.lane.b32.xlu0 %v2289, 16
    %v2418 = vpop.permute.xlu0 %2417
    %2419 = vrot.lane.b32.xlu0 %v2292, 16
    %v2420 = vpop.permute.xlu0 %2419
    %2421 = vrot.lane.b32.xlu0 %v2294, 16
    %v2422 = vpop.permute.xlu0 %2421
    %v2487 = vrot.slane %v852, 2
    %v2488 = vrot.slane %v853, 2
    %v2489 = vsel %vm1494, %v2487, %v2488
    %v2490 = vrot.slane %v854, 2
    %v2491 = vsel %vm1494, %v2488, %v2490
    %v2492 = vrot.slane %v855, 2
    %v2493 = vrot.slane %v856, 2
    %v2494 = vsel %vm1494, %v2492, %v2493
    %v2495 = vrot.slane %v857, 2
    %v2496 = vsel %vm1494, %v2493, %v2495
    %v2497 = vrot.slane %v858, 2
    %v2498 = vrot.slane %v859, 2
    %v2499 = vsel %vm1494, %v2497, %v2498
    %v2500 = vrot.slane %v860, 2
    %v2501 = vsel %vm1494, %v2498, %v2500
    %v2502 = vrot.slane %v861, 2
    %v2503 = vrot.slane %v862, 2
    %v2504 = vsel %vm1494, %v2502, %v2503
    %v2505 = vrot.slane %v863, 2
    %v2506 = vsel %vm1494, %v2503, %v2505
    %v2507 = vrot.slane %v864, 2
    %v2508 = vrot.slane %v865, 2
    %v2509 = vsel %vm1494, %v2507, %v2508
    %v2510 = vrot.slane %v866, 2
    %v2511 = vsel %vm1494, %v2508, %v2510
    %v2512 = vrot.slane %v867, 2
    %v2513 = vrot.slane %v868, 2
    %v2514 = vsel %vm1494, %v2512, %v2513
    %v2515 = vrot.slane %v869, 2
    %v2516 = vsel %vm1494, %v2513, %v2515
    %v2517 = vrot.slane %v870, 2
    %v2518 = vrot.slane %v871, 2
    %v2519 = vsel %vm1494, %v2517, %v2518
    %v2520 = vrot.slane %v872, 2
    %v2521 = vsel %vm1494, %v2518, %v2520
    %v2522 = vrot.slane %v873, 2
    %v2523 = vrot.slane %v874, 2
    %v2524 = vsel %vm1494, %v2522, %v2523
    %v2525 = vrot.slane %v875, 2
    %v2526 = vsel %vm1494, %v2523, %v2525
    %v2527 = vrot.slane %v876, 2
    %v2528 = vrot.slane %v877, 2
    %v2529 = vsel %vm1494, %v2527, %v2528
    %v2530 = vrot.slane %v878, 2
    %v2531 = vsel %vm1494, %v2528, %v2530
    %v2532 = vrot.slane %v879, 2
    %v2533 = vrot.slane %v880, 2
    %v2534 = vsel %vm1494, %v2532, %v2533
    %v2535 = vrot.slane %v881, 2
    %v2536 = vsel %vm1494, %v2533, %v2535
    %v2537 = vrot.slane %v882, 2
    %v2538 = vrot.slane %v883, 2
    %v2539 = vsel %vm1494, %v2537, %v2538
    %v2540 = vrot.slane %v884, 2
    %v2541 = vsel %vm1494, %v2538, %v2540
    %v2542 = vrot.slane %v885, 2
    %v2543 = vrot.slane %v886, 2
    %v2544 = vsel %vm1494, %v2542, %v2543
    %v2545 = vrot.slane %v887, 2
    %v2546 = vsel %vm1494, %v2543, %v2545
    %v2547 = vrot.slane %v888, 2
    %v2548 = vrot.slane %v889, 2
    %v2549 = vsel %vm1494, %v2547, %v2548
    %v2550 = vrot.slane %v890, 2
    %v2551 = vsel %vm1494, %v2548, %v2550
    %v2552 = vrot.slane %v891, 2
    %v2553 = vrot.slane %v892, 2
    %v2554 = vsel %vm1494, %v2552, %v2553
    %v2555 = vrot.slane %v893, 2
    %v2556 = vsel %vm1494, %v2553, %v2555
    %v2557 = vrot.slane %v894, 2
    %v2558 = vrot.slane %v895, 2
    %v2559 = vsel %vm1494, %v2557, %v2558
    %v2560 = vrot.slane %v896, 2
    %v2561 = vsel %vm1494, %v2558, %v2560
    %v2562 = vrot.slane %v897, 2
    %v2563 = vrot.slane %v898, 2
    %v2564 = vsel %vm1494, %v2562, %v2563
    %v2565 = vrot.slane %v899, 2
    %v2566 = vsel %vm1494, %v2563, %v2565
    %v2567 = vrot.slane %v900, 2
    %v2568 = vrot.slane %v901, 2
    %v2569 = vsel %vm1494, %v2567, %v2568
    %v2570 = vrot.slane %v902, 2
    %v2571 = vsel %vm1494, %v2568, %v2570
    %v2572 = vrot.slane %v903, 2
    %v2573 = vrot.slane %v904, 2
    %v2574 = vsel %vm1494, %v2572, %v2573
    %v2575 = vrot.slane %v905, 2
    %v2576 = vsel %vm1494, %v2573, %v2575
    %v2577 = vrot.slane %v906, 2
    %v2578 = vrot.slane %v907, 2
    %v2579 = vsel %vm1494, %v2577, %v2578
    %v2580 = vrot.slane %v908, 2
    %v2581 = vsel %vm1494, %v2578, %v2580
    %v2582 = vrot.slane %v909, 2
    %v2583 = vrot.slane %v910, 2
    %v2584 = vsel %vm1494, %v2582, %v2583
    %v2585 = vrot.slane %v911, 2
    %v2586 = vsel %vm1494, %v2583, %v2585
    %v2587 = vrot.slane %v912, 2
    %v2588 = vrot.slane %v913, 2
    %v2589 = vsel %vm1494, %v2587, %v2588
    %v2590 = vrot.slane %v914, 2
    %v2591 = vsel %vm1494, %v2588, %v2590
    %v2592 = vrot.slane %v915, 2
    %v2593 = vrot.slane %v916, 2
    %v2594 = vsel %vm1494, %v2592, %v2593
    %v2595 = vrot.slane %v917, 2
    %v2596 = vsel %vm1494, %v2593, %v2595
    %v2597 = vrot.slane %v918, 2
    %v2598 = vrot.slane %v919, 2
    %v2599 = vsel %vm1494, %v2597, %v2598
    %v2600 = vrot.slane %v920, 2
    %v2601 = vsel %vm1494, %v2598, %v2600
    %v2602 = vrot.slane %v921, 2
    %v2603 = vrot.slane %v922, 2
    %v2604 = vsel %vm1494, %v2602, %v2603
    %v2605 = vrot.slane %v923, 2
    %v2606 = vsel %vm1494, %v2603, %v2605
    %v2607 = vrot.slane %v924, 2
    %v2608 = vrot.slane %v925, 2
    %v2609 = vsel %vm1494, %v2607, %v2608
    %v2610 = vrot.slane %v926, 2
    %v2611 = vsel %vm1494, %v2608, %v2610
    %v2612 = vrot.slane %v927, 2
    %v2613 = vrot.slane %v928, 2
    %v2614 = vsel %vm1494, %v2612, %v2613
    %v2615 = vrot.slane %v929, 2
    %v2616 = vsel %vm1494, %v2613, %v2615
    %v2617 = vrot.slane %v930, 2
    %v2618 = vrot.slane %v931, 2
    %v2619 = vsel %vm1494, %v2617, %v2618
    %v2620 = vrot.slane %v932, 2
    %v2621 = vsel %vm1494, %v2618, %v2620
    %v2622 = vrot.slane %v933, 2
    %v2623 = vrot.slane %v934, 2
    %v2624 = vsel %vm1494, %v2622, %v2623
    %v2625 = vrot.slane %v935, 2
    %v2626 = vsel %vm1494, %v2623, %v2625
    %v2627 = vrot.slane %v936, 2
    %v2628 = vrot.slane %v937, 2
    %v2629 = vsel %vm1494, %v2627, %v2628
    %v2630 = vrot.slane %v938, 2
    %v2631 = vsel %vm1494, %v2628, %v2630
    %v2632 = vrot.slane %v939, 2
    %v2633 = vrot.slane %v940, 2
    %v2634 = vsel %vm1494, %v2632, %v2633
    %v2635 = vrot.slane %v941, 2
    %v2636 = vsel %vm1494, %v2633, %v2635
    %v2637 = vrot.slane %v942, 2
    %v2638 = vrot.slane %v943, 2
    %v2639 = vsel %vm1494, %v2637, %v2638
    %v2640 = vrot.slane %v944, 2
    %v2641 = vsel %vm1494, %v2638, %v2640
    %v2642 = vrot.slane %v945, 2
    %v2643 = vrot.slane %v946, 2
    %v2644 = vsel %vm1494, %v2642, %v2643
    %v2645 = vrot.slane %v947, 2
    %v2646 = vsel %vm1494, %v2643, %v2645
    %2647 = vrot.lane.b32.xlu0 %v2489, 20
    %v2648 = vpop.permute.xlu0 %2647
    %2649 = vrot.lane.b32.xlu0 %v2491, 20
    %v2650 = vpop.permute.xlu0 %2649
    %2651 = vrot.lane.b32.xlu0 %v2494, 20
    %v2652 = vpop.permute.xlu0 %2651
    %2653 = vrot.lane.b32.xlu0 %v2496, 20
    %v2654 = vpop.permute.xlu0 %2653
    %2655 = vrot.lane.b32.xlu0 %v2499, 20
    %v2656 = vpop.permute.xlu0 %2655
    %2657 = vrot.lane.b32.xlu0 %v2501, 20
    %v2658 = vpop.permute.xlu0 %2657
    %2659 = vrot.lane.b32.xlu0 %v2504, 20
    %v2660 = vpop.permute.xlu0 %2659
    %2661 = vrot.lane.b32.xlu0 %v2506, 20
    %v2662 = vpop.permute.xlu0 %2661
    %2663 = vrot.lane.b32.xlu0 %v2509, 20
    %v2664 = vpop.permute.xlu0 %2663
    %2665 = vrot.lane.b32.xlu0 %v2511, 20
    %v2666 = vpop.permute.xlu0 %2665
    %2667 = vrot.lane.b32.xlu0 %v2514, 20
    %v2668 = vpop.permute.xlu0 %2667
    %2669 = vrot.lane.b32.xlu0 %v2516, 20
    %v2670 = vpop.permute.xlu0 %2669
    %2671 = vrot.lane.b32.xlu0 %v2519, 20
    %v2672 = vpop.permute.xlu0 %2671
    %2673 = vrot.lane.b32.xlu0 %v2521, 20
    %v2674 = vpop.permute.xlu0 %2673
    %2675 = vrot.lane.b32.xlu0 %v2524, 20
    %v2676 = vpop.permute.xlu0 %2675
    %2677 = vrot.lane.b32.xlu0 %v2526, 20
    %v2678 = vpop.permute.xlu0 %2677
    %2679 = vrot.lane.b32.xlu0 %v2529, 20
    %v2680 = vpop.permute.xlu0 %2679
    %2681 = vrot.lane.b32.xlu0 %v2531, 20
    %v2682 = vpop.permute.xlu0 %2681
    %2683 = vrot.lane.b32.xlu0 %v2534, 20
    %v2684 = vpop.permute.xlu0 %2683
    %2685 = vrot.lane.b32.xlu0 %v2536, 20
    %v2686 = vpop.permute.xlu0 %2685
    %2687 = vrot.lane.b32.xlu0 %v2539, 20
    %v2688 = vpop.permute.xlu0 %2687
    %2689 = vrot.lane.b32.xlu0 %v2541, 20
    %v2690 = vpop.permute.xlu0 %2689
    %2691 = vrot.lane.b32.xlu0 %v2544, 20
    %v2692 = vpop.permute.xlu0 %2691
    %2693 = vrot.lane.b32.xlu0 %v2546, 20
    %v2694 = vpop.permute.xlu0 %2693
    %2695 = vrot.lane.b32.xlu0 %v2549, 20
    %v2696 = vpop.permute.xlu0 %2695
    %2697 = vrot.lane.b32.xlu0 %v2551, 20
    %v2698 = vpop.permute.xlu0 %2697
    %2699 = vrot.lane.b32.xlu0 %v2554, 20
    %v2700 = vpop.permute.xlu0 %2699
    %2701 = vrot.lane.b32.xlu0 %v2556, 20
    %v2702 = vpop.permute.xlu0 %2701
    %2703 = vrot.lane.b32.xlu0 %v2559, 20
    %v2704 = vpop.permute.xlu0 %2703
    %2705 = vrot.lane.b32.xlu0 %v2561, 20
    %v2706 = vpop.permute.xlu0 %2705
    %2707 = vrot.lane.b32.xlu0 %v2564, 20
    %v2708 = vpop.permute.xlu0 %2707
    %2709 = vrot.lane.b32.xlu0 %v2566, 20
    %v2710 = vpop.permute.xlu0 %2709
    %2711 = vrot.lane.b32.xlu0 %v2569, 20
    %v2712 = vpop.permute.xlu0 %2711
    %2713 = vrot.lane.b32.xlu0 %v2571, 20
    %v2714 = vpop.permute.xlu0 %2713
    %2715 = vrot.lane.b32.xlu0 %v2574, 20
    %v2716 = vpop.permute.xlu0 %2715
    %2717 = vrot.lane.b32.xlu0 %v2576, 20
    %v2718 = vpop.permute.xlu0 %2717
    %2719 = vrot.lane.b32.xlu0 %v2579, 20
    %v2720 = vpop.permute.xlu0 %2719
    %2721 = vrot.lane.b32.xlu0 %v2581, 20
    %v2722 = vpop.permute.xlu0 %2721
    %2723 = vrot.lane.b32.xlu0 %v2584, 20
    %v2724 = vpop.permute.xlu0 %2723
    %2725 = vrot.lane.b32.xlu0 %v2586, 20
    %v2726 = vpop.permute.xlu0 %2725
    %2727 = vrot.lane.b32.xlu0 %v2589, 20
    %v2728 = vpop.permute.xlu0 %2727
    %2729 = vrot.lane.b32.xlu0 %v2591, 20
    %v2730 = vpop.permute.xlu0 %2729
    %2731 = vrot.lane.b32.xlu0 %v2594, 20
    %v2732 = vpop.permute.xlu0 %2731
    %2733 = vrot.lane.b32.xlu0 %v2596, 20
    %v2734 = vpop.permute.xlu0 %2733
    %2735 = vrot.lane.b32.xlu0 %v2599, 20
    %v2736 = vpop.permute.xlu0 %2735
    %2737 = vrot.lane.b32.xlu0 %v2601, 20
    %v2738 = vpop.permute.xlu0 %2737
    %2739 = vrot.lane.b32.xlu0 %v2604, 20
    %v2740 = vpop.permute.xlu0 %2739
    %2741 = vrot.lane.b32.xlu0 %v2606, 20
    %v2742 = vpop.permute.xlu0 %2741
    %2743 = vrot.lane.b32.xlu0 %v2609, 20
    %v2744 = vpop.permute.xlu0 %2743
    %2745 = vrot.lane.b32.xlu0 %v2611, 20
    %v2746 = vpop.permute.xlu0 %2745
    %2747 = vrot.lane.b32.xlu0 %v2614, 20
    %v2748 = vpop.permute.xlu0 %2747
    %2749 = vrot.lane.b32.xlu0 %v2616, 20
    %v2750 = vpop.permute.xlu0 %2749
    %2751 = vrot.lane.b32.xlu0 %v2619, 20
    %v2752 = vpop.permute.xlu0 %2751
    %2753 = vrot.lane.b32.xlu0 %v2621, 20
    %v2754 = vpop.permute.xlu0 %2753
    %2755 = vrot.lane.b32.xlu0 %v2624, 20
    %v2756 = vpop.permute.xlu0 %2755
    %2757 = vrot.lane.b32.xlu0 %v2626, 20
    %v2758 = vpop.permute.xlu0 %2757
    %2759 = vrot.lane.b32.xlu0 %v2629, 20
    %v2760 = vpop.permute.xlu0 %2759
    %2761 = vrot.lane.b32.xlu0 %v2631, 20
    %v2762 = vpop.permute.xlu0 %2761
    %2763 = vrot.lane.b32.xlu0 %v2634, 20
    %v2764 = vpop.permute.xlu0 %2763
    %2765 = vrot.lane.b32.xlu0 %v2636, 20
    %v2766 = vpop.permute.xlu0 %2765
    %2767 = vrot.lane.b32.xlu0 %v2639, 20
    %v2768 = vpop.permute.xlu0 %2767
    %2769 = vrot.lane.b32.xlu0 %v2641, 20
    %v2770 = vpop.permute.xlu0 %2769
    %2771 = vrot.lane.b32.xlu0 %v2644, 20
    %v2772 = vpop.permute.xlu0 %2771
    %2773 = vrot.lane.b32.xlu0 %v2646, 20
    %v2774 = vpop.permute.xlu0 %2773
    %2903 = vrot.lane.b32.xlu0 %v949, 24
    %v2904 = vpop.permute.xlu0 %2903
    %2905 = vrot.lane.b32.xlu0 %v950, 24
    %v2906 = vpop.permute.xlu0 %2905
    %2907 = vrot.lane.b32.xlu0 %v952, 24
    %v2908 = vpop.permute.xlu0 %2907
    %2909 = vrot.lane.b32.xlu0 %v953, 24
    %v2910 = vpop.permute.xlu0 %2909
    %2911 = vrot.lane.b32.xlu0 %v955, 24
    %v2912 = vpop.permute.xlu0 %2911
    %2913 = vrot.lane.b32.xlu0 %v956, 24
    %v2914 = vpop.permute.xlu0 %2913
    %2915 = vrot.lane.b32.xlu0 %v958, 24
    %v2916 = vpop.permute.xlu0 %2915
    %2917 = vrot.lane.b32.xlu0 %v959, 24
    %v2918 = vpop.permute.xlu0 %2917
    %2919 = vrot.lane.b32.xlu0 %v961, 24
    %v2920 = vpop.permute.xlu0 %2919
    %2921 = vrot.lane.b32.xlu0 %v962, 24
    %v2922 = vpop.permute.xlu0 %2921
    %2923 = vrot.lane.b32.xlu0 %v964, 24
    %v2924 = vpop.permute.xlu0 %2923
    %2925 = vrot.lane.b32.xlu0 %v965, 24
    %v2926 = vpop.permute.xlu0 %2925
    %2927 = vrot.lane.b32.xlu0 %v967, 24
    %v2928 = vpop.permute.xlu0 %2927
    %2929 = vrot.lane.b32.xlu0 %v968, 24
    %v2930 = vpop.permute.xlu0 %2929
    %2931 = vrot.lane.b32.xlu0 %v970, 24
    %v2932 = vpop.permute.xlu0 %2931
    %2933 = vrot.lane.b32.xlu0 %v971, 24
    %v2934 = vpop.permute.xlu0 %2933
    %2935 = vrot.lane.b32.xlu0 %v973, 24
    %v2936 = vpop.permute.xlu0 %2935
    %2937 = vrot.lane.b32.xlu0 %v974, 24
    %v2938 = vpop.permute.xlu0 %2937
    %2939 = vrot.lane.b32.xlu0 %v976, 24
    %v2940 = vpop.permute.xlu0 %2939
    %2941 = vrot.lane.b32.xlu0 %v977, 24
    %v2942 = vpop.permute.xlu0 %2941
    %2943 = vrot.lane.b32.xlu0 %v979, 24
    %v2944 = vpop.permute.xlu0 %2943
    %2945 = vrot.lane.b32.xlu0 %v980, 24
    %v2946 = vpop.permute.xlu0 %2945
    %2947 = vrot.lane.b32.xlu0 %v982, 24
    %v2948 = vpop.permute.xlu0 %2947
    %2949 = vrot.lane.b32.xlu0 %v983, 24
    %v2950 = vpop.permute.xlu0 %2949
    %2951 = vrot.lane.b32.xlu0 %v985, 24
    %v2952 = vpop.permute.xlu0 %2951
    %2953 = vrot.lane.b32.xlu0 %v986, 24
    %v2954 = vpop.permute.xlu0 %2953
    %2955 = vrot.lane.b32.xlu0 %v988, 24
    %v2956 = vpop.permute.xlu0 %2955
    %2957 = vrot.lane.b32.xlu0 %v989, 24
    %v2958 = vpop.permute.xlu0 %2957
    %2959 = vrot.lane.b32.xlu0 %v991, 24
    %v2960 = vpop.permute.xlu0 %2959
    %2961 = vrot.lane.b32.xlu0 %v992, 24
    %v2962 = vpop.permute.xlu0 %2961
    %2963 = vrot.lane.b32.xlu0 %v994, 24
    %v2964 = vpop.permute.xlu0 %2963
    %2965 = vrot.lane.b32.xlu0 %v995, 24
    %v2966 = vpop.permute.xlu0 %2965
    %2967 = vrot.lane.b32.xlu0 %v997, 24
    %v2968 = vpop.permute.xlu0 %2967
    %2969 = vrot.lane.b32.xlu0 %v998, 24
    %v2970 = vpop.permute.xlu0 %2969
    %2971 = vrot.lane.b32.xlu0 %v1000, 24
    %v2972 = vpop.permute.xlu0 %2971
    %2973 = vrot.lane.b32.xlu0 %v1001, 24
    %v2974 = vpop.permute.xlu0 %2973
    %2975 = vrot.lane.b32.xlu0 %v1003, 24
    %v2976 = vpop.permute.xlu0 %2975
    %2977 = vrot.lane.b32.xlu0 %v1004, 24
    %v2978 = vpop.permute.xlu0 %2977
    %2979 = vrot.lane.b32.xlu0 %v1006, 24
    %v2980 = vpop.permute.xlu0 %2979
    %2981 = vrot.lane.b32.xlu0 %v1007, 24
    %v2982 = vpop.permute.xlu0 %2981
    %2983 = vrot.lane.b32.xlu0 %v1009, 24
    %v2984 = vpop.permute.xlu0 %2983
    %2985 = vrot.lane.b32.xlu0 %v1010, 24
    %v2986 = vpop.permute.xlu0 %2985
    %2987 = vrot.lane.b32.xlu0 %v1012, 24
    %v2988 = vpop.permute.xlu0 %2987
    %2989 = vrot.lane.b32.xlu0 %v1013, 24
    %v2990 = vpop.permute.xlu0 %2989
    %2991 = vrot.lane.b32.xlu0 %v1015, 24
    %v2992 = vpop.permute.xlu0 %2991
    %2993 = vrot.lane.b32.xlu0 %v1016, 24
    %v2994 = vpop.permute.xlu0 %2993
    %2995 = vrot.lane.b32.xlu0 %v1018, 24
    %v2996 = vpop.permute.xlu0 %2995
    %2997 = vrot.lane.b32.xlu0 %v1019, 24
    %v2998 = vpop.permute.xlu0 %2997
    %2999 = vrot.lane.b32.xlu0 %v1021, 24
    %v3000 = vpop.permute.xlu0 %2999
    %3001 = vrot.lane.b32.xlu0 %v1022, 24
    %v3002 = vpop.permute.xlu0 %3001
    %3003 = vrot.lane.b32.xlu0 %v1024, 24
    %v3004 = vpop.permute.xlu0 %3003
    %3005 = vrot.lane.b32.xlu0 %v1025, 24
    %v3006 = vpop.permute.xlu0 %3005
    %3007 = vrot.lane.b32.xlu0 %v1027, 24
    %v3008 = vpop.permute.xlu0 %3007
    %3009 = vrot.lane.b32.xlu0 %v1028, 24
    %v3010 = vpop.permute.xlu0 %3009
    %3011 = vrot.lane.b32.xlu0 %v1030, 24
    %v3012 = vpop.permute.xlu0 %3011
    %3013 = vrot.lane.b32.xlu0 %v1031, 24
    %v3014 = vpop.permute.xlu0 %3013
    %3015 = vrot.lane.b32.xlu0 %v1033, 24
    %v3016 = vpop.permute.xlu0 %3015
    %3017 = vrot.lane.b32.xlu0 %v1034, 24
    %v3018 = vpop.permute.xlu0 %3017
    %3019 = vrot.lane.b32.xlu0 %v1036, 24
    %v3020 = vpop.permute.xlu0 %3019
    %3021 = vrot.lane.b32.xlu0 %v1037, 24
    %v3022 = vpop.permute.xlu0 %3021
    %3023 = vrot.lane.b32.xlu0 %v1039, 24
    %v3024 = vpop.permute.xlu0 %3023
    %3025 = vrot.lane.b32.xlu0 %v1040, 24
    %v3026 = vpop.permute.xlu0 %3025
    %3027 = vrot.lane.b32.xlu0 %v1042, 24
    %v3028 = vpop.permute.xlu0 %3027
    %3029 = vrot.lane.b32.xlu0 %v1043, 24
    %v3030 = vpop.permute.xlu0 %3029
    %v3127 = vrot.slane %v949, 1
    %v3128 = vrot.slane %v950, 1
    %v3129 = vsel %vm1141, %v3127, %v3128
    %v3130 = vrot.slane %v951, 1
    %v3131 = vsel %vm1141, %v3128, %v3130
    %v3132 = vrot.slane %v952, 1
    %v3133 = vrot.slane %v953, 1
    %v3134 = vsel %vm1141, %v3132, %v3133
    %v3135 = vrot.slane %v954, 1
    %v3136 = vsel %vm1141, %v3133, %v3135
    %v3137 = vrot.slane %v955, 1
    %v3138 = vrot.slane %v956, 1
    %v3139 = vsel %vm1141, %v3137, %v3138
    %v3140 = vrot.slane %v957, 1
    %v3141 = vsel %vm1141, %v3138, %v3140
    %v3142 = vrot.slane %v958, 1
    %v3143 = vrot.slane %v959, 1
    %v3144 = vsel %vm1141, %v3142, %v3143
    %v3145 = vrot.slane %v960, 1
    %v3146 = vsel %vm1141, %v3143, %v3145
    %v3147 = vrot.slane %v961, 1
    %v3148 = vrot.slane %v962, 1
    %v3149 = vsel %vm1141, %v3147, %v3148
    %v3150 = vrot.slane %v963, 1
    %v3151 = vsel %vm1141, %v3148, %v3150
    %v3152 = vrot.slane %v964, 1
    %v3153 = vrot.slane %v965, 1
    %v3154 = vsel %vm1141, %v3152, %v3153
    %v3155 = vrot.slane %v966, 1
    %v3156 = vsel %vm1141, %v3153, %v3155
    %v3157 = vrot.slane %v967, 1
    %v3158 = vrot.slane %v968, 1
    %v3159 = vsel %vm1141, %v3157, %v3158
    %v3160 = vrot.slane %v969, 1
    %v3161 = vsel %vm1141, %v3158, %v3160
    %v3162 = vrot.slane %v970, 1
    %v3163 = vrot.slane %v971, 1
    %v3164 = vsel %vm1141, %v3162, %v3163
    %v3165 = vrot.slane %v972, 1
    %v3166 = vsel %vm1141, %v3163, %v3165
    %v3167 = vrot.slane %v973, 1
    %v3168 = vrot.slane %v974, 1
    %v3169 = vsel %vm1141, %v3167, %v3168
    %v3170 = vrot.slane %v975, 1
    %v3171 = vsel %vm1141, %v3168, %v3170
    %v3172 = vrot.slane %v976, 1
    %v3173 = vrot.slane %v977, 1
    %v3174 = vsel %vm1141, %v3172, %v3173
    %v3175 = vrot.slane %v978, 1
    %v3176 = vsel %vm1141, %v3173, %v3175
    %v3177 = vrot.slane %v979, 1
    %v3178 = vrot.slane %v980, 1
    %v3179 = vsel %vm1141, %v3177, %v3178
    %v3180 = vrot.slane %v981, 1
    %v3181 = vsel %vm1141, %v3178, %v3180
    %v3182 = vrot.slane %v982, 1
    %v3183 = vrot.slane %v983, 1
    %v3184 = vsel %vm1141, %v3182, %v3183
    %v3185 = vrot.slane %v984, 1
    %v3186 = vsel %vm1141, %v3183, %v3185
    %v3187 = vrot.slane %v985, 1
    %v3188 = vrot.slane %v986, 1
    %v3189 = vsel %vm1141, %v3187, %v3188
    %v3190 = vrot.slane %v987, 1
    %v3191 = vsel %vm1141, %v3188, %v3190
    %v3192 = vrot.slane %v988, 1
    %v3193 = vrot.slane %v989, 1
    %v3194 = vsel %vm1141, %v3192, %v3193
    %v3195 = vrot.slane %v990, 1
    %v3196 = vsel %vm1141, %v3193, %v3195
    %v3197 = vrot.slane %v991, 1
    %v3198 = vrot.slane %v992, 1
    %v3199 = vsel %vm1141, %v3197, %v3198
    %v3200 = vrot.slane %v993, 1
    %v3201 = vsel %vm1141, %v3198, %v3200
    %v3202 = vrot.slane %v994, 1
    %v3203 = vrot.slane %v995, 1
    %v3204 = vsel %vm1141, %v3202, %v3203
    %v3205 = vrot.slane %v996, 1
    %v3206 = vsel %vm1141, %v3203, %v3205
    %v3207 = vrot.slane %v997, 1
    %v3208 = vrot.slane %v998, 1
    %v3209 = vsel %vm1141, %v3207, %v3208
    %v3210 = vrot.slane %v999, 1
    %v3211 = vsel %vm1141, %v3208, %v3210
    %v3212 = vrot.slane %v1000, 1
    %v3213 = vrot.slane %v1001, 1
    %v3214 = vsel %vm1141, %v3212, %v3213
    %v3215 = vrot.slane %v1002, 1
    %v3216 = vsel %vm1141, %v3213, %v3215
    %v3217 = vrot.slane %v1003, 1
    %v3218 = vrot.slane %v1004, 1
    %v3219 = vsel %vm1141, %v3217, %v3218
    %v3220 = vrot.slane %v1005, 1
    %v3221 = vsel %vm1141, %v3218, %v3220
    %v3222 = vrot.slane %v1006, 1
    %v3223 = vrot.slane %v1007, 1
    %v3224 = vsel %vm1141, %v3222, %v3223
    %v3225 = vrot.slane %v1008, 1
    %v3226 = vsel %vm1141, %v3223, %v3225
    %v3227 = vrot.slane %v1009, 1
    %v3228 = vrot.slane %v1010, 1
    %v3229 = vsel %vm1141, %v3227, %v3228
    %v3230 = vrot.slane %v1011, 1
    %v3231 = vsel %vm1141, %v3228, %v3230
    %v3232 = vrot.slane %v1012, 1
    %v3233 = vrot.slane %v1013, 1
    %v3234 = vsel %vm1141, %v3232, %v3233
    %v3235 = vrot.slane %v1014, 1
    %v3236 = vsel %vm1141, %v3233, %v3235
    %v3237 = vrot.slane %v1015, 1
    %v3238 = vrot.slane %v1016, 1
    %v3239 = vsel %vm1141, %v3237, %v3238
    %v3240 = vrot.slane %v1017, 1
    %v3241 = vsel %vm1141, %v3238, %v3240
    %v3242 = vrot.slane %v1018, 1
    %v3243 = vrot.slane %v1019, 1
    %v3244 = vsel %vm1141, %v3242, %v3243
    %v3245 = vrot.slane %v1020, 1
    %v3246 = vsel %vm1141, %v3243, %v3245
    %v3247 = vrot.slane %v1021, 1
    %v3248 = vrot.slane %v1022, 1
    %v3249 = vsel %vm1141, %v3247, %v3248
    %v3250 = vrot.slane %v1023, 1
    %v3251 = vsel %vm1141, %v3248, %v3250
    %v3252 = vrot.slane %v1024, 1
    %v3253 = vrot.slane %v1025, 1
    %v3254 = vsel %vm1141, %v3252, %v3253
    %v3255 = vrot.slane %v1026, 1
    %v3256 = vsel %vm1141, %v3253, %v3255
    %v3257 = vrot.slane %v1027, 1
    %v3258 = vrot.slane %v1028, 1
    %v3259 = vsel %vm1141, %v3257, %v3258
    %v3260 = vrot.slane %v1029, 1
    %v3261 = vsel %vm1141, %v3258, %v3260
    %v3262 = vrot.slane %v1030, 1
    %v3263 = vrot.slane %v1031, 1
    %v3264 = vsel %vm1141, %v3262, %v3263
    %v3265 = vrot.slane %v1032, 1
    %v3266 = vsel %vm1141, %v3263, %v3265
    %v3267 = vrot.slane %v1033, 1
    %v3268 = vrot.slane %v1034, 1
    %v3269 = vsel %vm1141, %v3267, %v3268
    %v3270 = vrot.slane %v1035, 1
    %v3271 = vsel %vm1141, %v3268, %v3270
    %v3272 = vrot.slane %v1036, 1
    %v3273 = vrot.slane %v1037, 1
    %v3274 = vsel %vm1141, %v3272, %v3273
    %v3275 = vrot.slane %v1038, 1
    %v3276 = vsel %vm1141, %v3273, %v3275
    %v3277 = vrot.slane %v1039, 1
    %v3278 = vrot.slane %v1040, 1
    %v3279 = vsel %vm1141, %v3277, %v3278
    %v3280 = vrot.slane %v1041, 1
    %v3281 = vsel %vm1141, %v3278, %v3280
    %v3282 = vrot.slane %v1042, 1
    %v3283 = vrot.slane %v1043, 1
    %v3284 = vsel %vm1141, %v3282, %v3283
    %v3285 = vrot.slane %v1044, 1
    %v3286 = vsel %vm1141, %v3283, %v3285
    %3287 = vrot.lane.b32.xlu0 %v3129, 28
    %v3288 = vpop.permute.xlu0 %3287
    %3289 = vrot.lane.b32.xlu0 %v3131, 28
    %v3290 = vpop.permute.xlu0 %3289
    %3291 = vrot.lane.b32.xlu0 %v3134, 28
    %v3292 = vpop.permute.xlu0 %3291
    %3293 = vrot.lane.b32.xlu0 %v3136, 28
    %v3294 = vpop.permute.xlu0 %3293
    %3295 = vrot.lane.b32.xlu0 %v3139, 28
    %v3296 = vpop.permute.xlu0 %3295
    %3297 = vrot.lane.b32.xlu0 %v3141, 28
    %v3298 = vpop.permute.xlu0 %3297
    %3299 = vrot.lane.b32.xlu0 %v3144, 28
    %v3300 = vpop.permute.xlu0 %3299
    %3301 = vrot.lane.b32.xlu0 %v3146, 28
    %v3302 = vpop.permute.xlu0 %3301
    %3303 = vrot.lane.b32.xlu0 %v3149, 28
    %v3304 = vpop.permute.xlu0 %3303
    %3305 = vrot.lane.b32.xlu0 %v3151, 28
    %v3306 = vpop.permute.xlu0 %3305
    %3307 = vrot.lane.b32.xlu0 %v3154, 28
    %v3308 = vpop.permute.xlu0 %3307
    %3309 = vrot.lane.b32.xlu0 %v3156, 28
    %v3310 = vpop.permute.xlu0 %3309
    %3311 = vrot.lane.b32.xlu0 %v3159, 28
    %v3312 = vpop.permute.xlu0 %3311
    %3313 = vrot.lane.b32.xlu0 %v3161, 28
    %v3314 = vpop.permute.xlu0 %3313
    %3315 = vrot.lane.b32.xlu0 %v3164, 28
    %v3316 = vpop.permute.xlu0 %3315
    %3317 = vrot.lane.b32.xlu0 %v3166, 28
    %v3318 = vpop.permute.xlu0 %3317
    %3319 = vrot.lane.b32.xlu0 %v3169, 28
    %v3320 = vpop.permute.xlu0 %3319
    %3321 = vrot.lane.b32.xlu0 %v3171, 28
    %v3322 = vpop.permute.xlu0 %3321
    %3323 = vrot.lane.b32.xlu0 %v3174, 28
    %v3324 = vpop.permute.xlu0 %3323
    %3325 = vrot.lane.b32.xlu0 %v3176, 28
    %v3326 = vpop.permute.xlu0 %3325
    %3327 = vrot.lane.b32.xlu0 %v3179, 28
    %v3328 = vpop.permute.xlu0 %3327
    %3329 = vrot.lane.b32.xlu0 %v3181, 28
    %v3330 = vpop.permute.xlu0 %3329
    %3331 = vrot.lane.b32.xlu0 %v3184, 28
    %v3332 = vpop.permute.xlu0 %3331
    %3333 = vrot.lane.b32.xlu0 %v3186, 28
    %v3334 = vpop.permute.xlu0 %3333
    %3335 = vrot.lane.b32.xlu0 %v3189, 28
    %v3336 = vpop.permute.xlu0 %3335
    %3337 = vrot.lane.b32.xlu0 %v3191, 28
    %v3338 = vpop.permute.xlu0 %3337
    %3339 = vrot.lane.b32.xlu0 %v3194, 28
    %v3340 = vpop.permute.xlu0 %3339
    %3341 = vrot.lane.b32.xlu0 %v3196, 28
    %v3342 = vpop.permute.xlu0 %3341
    %3343 = vrot.lane.b32.xlu0 %v3199, 28
    %v3344 = vpop.permute.xlu0 %3343
    %3345 = vrot.lane.b32.xlu0 %v3201, 28
    %v3346 = vpop.permute.xlu0 %3345
    %3347 = vrot.lane.b32.xlu0 %v3204, 28
    %v3348 = vpop.permute.xlu0 %3347
    %3349 = vrot.lane.b32.xlu0 %v3206, 28
    %v3350 = vpop.permute.xlu0 %3349
    %3351 = vrot.lane.b32.xlu0 %v3209, 28
    %v3352 = vpop.permute.xlu0 %3351
    %3353 = vrot.lane.b32.xlu0 %v3211, 28
    %v3354 = vpop.permute.xlu0 %3353
    %3355 = vrot.lane.b32.xlu0 %v3214, 28
    %v3356 = vpop.permute.xlu0 %3355
    %3357 = vrot.lane.b32.xlu0 %v3216, 28
    %v3358 = vpop.permute.xlu0 %3357
    %3359 = vrot.lane.b32.xlu0 %v3219, 28
    %v3360 = vpop.permute.xlu0 %3359
    %3361 = vrot.lane.b32.xlu0 %v3221, 28
    %v3362 = vpop.permute.xlu0 %3361
    %3363 = vrot.lane.b32.xlu0 %v3224, 28
    %v3364 = vpop.permute.xlu0 %3363
    %3365 = vrot.lane.b32.xlu0 %v3226, 28
    %v3366 = vpop.permute.xlu0 %3365
    %3367 = vrot.lane.b32.xlu0 %v3229, 28
    %v3368 = vpop.permute.xlu0 %3367
    %3369 = vrot.lane.b32.xlu0 %v3231, 28
    %v3370 = vpop.permute.xlu0 %3369
    %3371 = vrot.lane.b32.xlu0 %v3234, 28
    %v3372 = vpop.permute.xlu0 %3371
    %3373 = vrot.lane.b32.xlu0 %v3236, 28
    %v3374 = vpop.permute.xlu0 %3373
    %3375 = vrot.lane.b32.xlu0 %v3239, 28
    %v3376 = vpop.permute.xlu0 %3375
    %3377 = vrot.lane.b32.xlu0 %v3241, 28
    %v3378 = vpop.permute.xlu0 %3377
    %3379 = vrot.lane.b32.xlu0 %v3244, 28
    %v3380 = vpop.permute.xlu0 %3379
    %3381 = vrot.lane.b32.xlu0 %v3246, 28
    %v3382 = vpop.permute.xlu0 %3381
    %3383 = vrot.lane.b32.xlu0 %v3249, 28
    %v3384 = vpop.permute.xlu0 %3383
    %3385 = vrot.lane.b32.xlu0 %v3251, 28
    %v3386 = vpop.permute.xlu0 %3385
    %3387 = vrot.lane.b32.xlu0 %v3254, 28
    %v3388 = vpop.permute.xlu0 %3387
    %3389 = vrot.lane.b32.xlu0 %v3256, 28
    %v3390 = vpop.permute.xlu0 %3389
    %3391 = vrot.lane.b32.xlu0 %v3259, 28
    %v3392 = vpop.permute.xlu0 %3391
    %3393 = vrot.lane.b32.xlu0 %v3261, 28
    %v3394 = vpop.permute.xlu0 %3393
    %3395 = vrot.lane.b32.xlu0 %v3264, 28
    %v3396 = vpop.permute.xlu0 %3395
    %3397 = vrot.lane.b32.xlu0 %v3266, 28
    %v3398 = vpop.permute.xlu0 %3397
    %3399 = vrot.lane.b32.xlu0 %v3269, 28
    %v3400 = vpop.permute.xlu0 %3399
    %3401 = vrot.lane.b32.xlu0 %v3271, 28
    %v3402 = vpop.permute.xlu0 %3401
    %3403 = vrot.lane.b32.xlu0 %v3274, 28
    %v3404 = vpop.permute.xlu0 %3403
    %3405 = vrot.lane.b32.xlu0 %v3276, 28
    %v3406 = vpop.permute.xlu0 %3405
    %3407 = vrot.lane.b32.xlu0 %v3279, 28
    %v3408 = vpop.permute.xlu0 %3407
    %3409 = vrot.lane.b32.xlu0 %v3281, 28
    %v3410 = vpop.permute.xlu0 %3409
    %3411 = vrot.lane.b32.xlu0 %v3284, 28
    %v3412 = vpop.permute.xlu0 %3411
    %3413 = vrot.lane.b32.xlu0 %v3286, 28
    %v3414 = vpop.permute.xlu0 %3413
    %v3479 = vrot.slane %v949, 2
    %v3480 = vrot.slane %v950, 2
    %v3481 = vsel %vm1494, %v3479, %v3480
    %v3482 = vrot.slane %v951, 2
    %v3483 = vsel %vm1494, %v3480, %v3482
    %v3484 = vrot.slane %v952, 2
    %v3485 = vrot.slane %v953, 2
    %v3486 = vsel %vm1494, %v3484, %v3485
    %v3487 = vrot.slane %v954, 2
    %v3488 = vsel %vm1494, %v3485, %v3487
    %v3489 = vrot.slane %v955, 2
    %v3490 = vrot.slane %v956, 2
    %v3491 = vsel %vm1494, %v3489, %v3490
    %v3492 = vrot.slane %v957, 2
    %v3493 = vsel %vm1494, %v3490, %v3492
    %v3494 = vrot.slane %v958, 2
    %v3495 = vrot.slane %v959, 2
    %v3496 = vsel %vm1494, %v3494, %v3495
    %v3497 = vrot.slane %v960, 2
    %v3498 = vsel %vm1494, %v3495, %v3497
    %v3499 = vrot.slane %v961, 2
    %v3500 = vrot.slane %v962, 2
    %v3501 = vsel %vm1494, %v3499, %v3500
    %v3502 = vrot.slane %v963, 2
    %v3503 = vsel %vm1494, %v3500, %v3502
    %v3504 = vrot.slane %v964, 2
    %v3505 = vrot.slane %v965, 2
    %v3506 = vsel %vm1494, %v3504, %v3505
    %v3507 = vrot.slane %v966, 2
    %v3508 = vsel %vm1494, %v3505, %v3507
    %v3509 = vrot.slane %v967, 2
    %v3510 = vrot.slane %v968, 2
    %v3511 = vsel %vm1494, %v3509, %v3510
    %v3512 = vrot.slane %v969, 2
    %v3513 = vsel %vm1494, %v3510, %v3512
    %v3514 = vrot.slane %v970, 2
    %v3515 = vrot.slane %v971, 2
    %v3516 = vsel %vm1494, %v3514, %v3515
    %v3517 = vrot.slane %v972, 2
    %v3518 = vsel %vm1494, %v3515, %v3517
    %v3519 = vrot.slane %v973, 2
    %v3520 = vrot.slane %v974, 2
    %v3521 = vsel %vm1494, %v3519, %v3520
    %v3522 = vrot.slane %v975, 2
    %v3523 = vsel %vm1494, %v3520, %v3522
    %v3524 = vrot.slane %v976, 2
    %v3525 = vrot.slane %v977, 2
    %v3526 = vsel %vm1494, %v3524, %v3525
    %v3527 = vrot.slane %v978, 2
    %v3528 = vsel %vm1494, %v3525, %v3527
    %v3529 = vrot.slane %v979, 2
    %v3530 = vrot.slane %v980, 2
    %v3531 = vsel %vm1494, %v3529, %v3530
    %v3532 = vrot.slane %v981, 2
    %v3533 = vsel %vm1494, %v3530, %v3532
    %v3534 = vrot.slane %v982, 2
    %v3535 = vrot.slane %v983, 2
    %v3536 = vsel %vm1494, %v3534, %v3535
    %v3537 = vrot.slane %v984, 2
    %v3538 = vsel %vm1494, %v3535, %v3537
    %v3539 = vrot.slane %v985, 2
    %v3540 = vrot.slane %v986, 2
    %v3541 = vsel %vm1494, %v3539, %v3540
    %v3542 = vrot.slane %v987, 2
    %v3543 = vsel %vm1494, %v3540, %v3542
    %v3544 = vrot.slane %v988, 2
    %v3545 = vrot.slane %v989, 2
    %v3546 = vsel %vm1494, %v3544, %v3545
    %v3547 = vrot.slane %v990, 2
    %v3548 = vsel %vm1494, %v3545, %v3547
    %v3549 = vrot.slane %v991, 2
    %v3550 = vrot.slane %v992, 2
    %v3551 = vsel %vm1494, %v3549, %v3550
    %v3552 = vrot.slane %v993, 2
    %v3553 = vsel %vm1494, %v3550, %v3552
    %v3554 = vrot.slane %v994, 2
    %v3555 = vrot.slane %v995, 2
    %v3556 = vsel %vm1494, %v3554, %v3555
    %v3557 = vrot.slane %v996, 2
    %v3558 = vsel %vm1494, %v3555, %v3557
    %v3559 = vrot.slane %v997, 2
    %v3560 = vrot.slane %v998, 2
    %v3561 = vsel %vm1494, %v3559, %v3560
    %v3562 = vrot.slane %v999, 2
    %v3563 = vsel %vm1494, %v3560, %v3562
    %v3564 = vrot.slane %v1000, 2
    %v3565 = vrot.slane %v1001, 2
    %v3566 = vsel %vm1494, %v3564, %v3565
    %v3567 = vrot.slane %v1002, 2
    %v3568 = vsel %vm1494, %v3565, %v3567
    %v3569 = vrot.slane %v1003, 2
    %v3570 = vrot.slane %v1004, 2
    %v3571 = vsel %vm1494, %v3569, %v3570
    %v3572 = vrot.slane %v1005, 2
    %v3573 = vsel %vm1494, %v3570, %v3572
    %v3574 = vrot.slane %v1006, 2
    %v3575 = vrot.slane %v1007, 2
    %v3576 = vsel %vm1494, %v3574, %v3575
    %v3577 = vrot.slane %v1008, 2
    %v3578 = vsel %vm1494, %v3575, %v3577
    %v3579 = vrot.slane %v1009, 2
    %v3580 = vrot.slane %v1010, 2
    %v3581 = vsel %vm1494, %v3579, %v3580
    %v3582 = vrot.slane %v1011, 2
    %v3583 = vsel %vm1494, %v3580, %v3582
    %v3584 = vrot.slane %v1012, 2
    %v3585 = vrot.slane %v1013, 2
    %v3586 = vsel %vm1494, %v3584, %v3585
    %v3587 = vrot.slane %v1014, 2
    %v3588 = vsel %vm1494, %v3585, %v3587
    %v3589 = vrot.slane %v1015, 2
    %v3590 = vrot.slane %v1016, 2
    %v3591 = vsel %vm1494, %v3589, %v3590
    %v3592 = vrot.slane %v1017, 2
    %v3593 = vsel %vm1494, %v3590, %v3592
    %v3594 = vrot.slane %v1018, 2
    %v3595 = vrot.slane %v1019, 2
    %v3596 = vsel %vm1494, %v3594, %v3595
    %v3597 = vrot.slane %v1020, 2
    %v3598 = vsel %vm1494, %v3595, %v3597
    %v3599 = vrot.slane %v1021, 2
    %v3600 = vrot.slane %v1022, 2
    %v3601 = vsel %vm1494, %v3599, %v3600
    %v3602 = vrot.slane %v1023, 2
    %v3603 = vsel %vm1494, %v3600, %v3602
    %v3604 = vrot.slane %v1024, 2
    %v3605 = vrot.slane %v1025, 2
    %v3606 = vsel %vm1494, %v3604, %v3605
    %v3607 = vrot.slane %v1026, 2
    %v3608 = vsel %vm1494, %v3605, %v3607
    %v3609 = vrot.slane %v1027, 2
    %v3610 = vrot.slane %v1028, 2
    %v3611 = vsel %vm1494, %v3609, %v3610
    %v3612 = vrot.slane %v1029, 2
    %v3613 = vsel %vm1494, %v3610, %v3612
    %v3614 = vrot.slane %v1030, 2
    %v3615 = vrot.slane %v1031, 2
    %v3616 = vsel %vm1494, %v3614, %v3615
    %v3617 = vrot.slane %v1032, 2
    %v3618 = vsel %vm1494, %v3615, %v3617
    %v3619 = vrot.slane %v1033, 2
    %v3620 = vrot.slane %v1034, 2
    %v3621 = vsel %vm1494, %v3619, %v3620
    %v3622 = vrot.slane %v1035, 2
    %v3623 = vsel %vm1494, %v3620, %v3622
    %v3624 = vrot.slane %v1036, 2
    %v3625 = vrot.slane %v1037, 2
    %v3626 = vsel %vm1494, %v3624, %v3625
    %v3627 = vrot.slane %v1038, 2
    %v3628 = vsel %vm1494, %v3625, %v3627
    %v3629 = vrot.slane %v1039, 2
    %v3630 = vrot.slane %v1040, 2
    %v3631 = vsel %vm1494, %v3629, %v3630
    %v3632 = vrot.slane %v1041, 2
    %v3633 = vsel %vm1494, %v3630, %v3632
    %v3634 = vrot.slane %v1042, 2
    %v3635 = vrot.slane %v1043, 2
    %v3636 = vsel %vm1494, %v3634, %v3635
    %v3637 = vrot.slane %v1044, 2
    %v3638 = vsel %vm1494, %v3635, %v3637
    %3639 = vrot.lane.b32.xlu0 %v3481, 32
    %v3640 = vpop.permute.xlu0 %3639
    %3641 = vrot.lane.b32.xlu0 %v3483, 32
    %v3642 = vpop.permute.xlu0 %3641
    %3643 = vrot.lane.b32.xlu0 %v3486, 32
    %v3644 = vpop.permute.xlu0 %3643
    %3645 = vrot.lane.b32.xlu0 %v3488, 32
    %v3646 = vpop.permute.xlu0 %3645
    %3647 = vrot.lane.b32.xlu0 %v3491, 32
    %v3648 = vpop.permute.xlu0 %3647
    %3649 = vrot.lane.b32.xlu0 %v3493, 32
    %v3650 = vpop.permute.xlu0 %3649
    %3651 = vrot.lane.b32.xlu0 %v3496, 32
    %v3652 = vpop.permute.xlu0 %3651
    %3653 = vrot.lane.b32.xlu0 %v3498, 32
    %v3654 = vpop.permute.xlu0 %3653
    %3655 = vrot.lane.b32.xlu0 %v3501, 32
    %v3656 = vpop.permute.xlu0 %3655
    %3657 = vrot.lane.b32.xlu0 %v3503, 32
    %v3658 = vpop.permute.xlu0 %3657
    %3659 = vrot.lane.b32.xlu0 %v3506, 32
    %v3660 = vpop.permute.xlu0 %3659
    %3661 = vrot.lane.b32.xlu0 %v3508, 32
    %v3662 = vpop.permute.xlu0 %3661
    %3663 = vrot.lane.b32.xlu0 %v3511, 32
    %v3664 = vpop.permute.xlu0 %3663
    %3665 = vrot.lane.b32.xlu0 %v3513, 32
    %v3666 = vpop.permute.xlu0 %3665
    %3667 = vrot.lane.b32.xlu0 %v3516, 32
    %v3668 = vpop.permute.xlu0 %3667
    %3669 = vrot.lane.b32.xlu0 %v3518, 32
    %v3670 = vpop.permute.xlu0 %3669
    %3671 = vrot.lane.b32.xlu0 %v3521, 32
    %v3672 = vpop.permute.xlu0 %3671
    %3673 = vrot.lane.b32.xlu0 %v3523, 32
    %v3674 = vpop.permute.xlu0 %3673
    %3675 = vrot.lane.b32.xlu0 %v3526, 32
    %v3676 = vpop.permute.xlu0 %3675
    %3677 = vrot.lane.b32.xlu0 %v3528, 32
    %v3678 = vpop.permute.xlu0 %3677
    %3679 = vrot.lane.b32.xlu0 %v3531, 32
    %v3680 = vpop.permute.xlu0 %3679
    %3681 = vrot.lane.b32.xlu0 %v3533, 32
    %v3682 = vpop.permute.xlu0 %3681
    %3683 = vrot.lane.b32.xlu0 %v3536, 32
    %v3684 = vpop.permute.xlu0 %3683
    %3685 = vrot.lane.b32.xlu0 %v3538, 32
    %v3686 = vpop.permute.xlu0 %3685
    %3687 = vrot.lane.b32.xlu0 %v3541, 32
    %v3688 = vpop.permute.xlu0 %3687
    %3689 = vrot.lane.b32.xlu0 %v3543, 32
    %v3690 = vpop.permute.xlu0 %3689
    %3691 = vrot.lane.b32.xlu0 %v3546, 32
    %v3692 = vpop.permute.xlu0 %3691
    %3693 = vrot.lane.b32.xlu0 %v3548, 32
    %v3694 = vpop.permute.xlu0 %3693
    %3695 = vrot.lane.b32.xlu0 %v3551, 32
    %v3696 = vpop.permute.xlu0 %3695
    %3697 = vrot.lane.b32.xlu0 %v3553, 32
    %v3698 = vpop.permute.xlu0 %3697
    %3699 = vrot.lane.b32.xlu0 %v3556, 32
    %v3700 = vpop.permute.xlu0 %3699
    %3701 = vrot.lane.b32.xlu0 %v3558, 32
    %v3702 = vpop.permute.xlu0 %3701
    %3703 = vrot.lane.b32.xlu0 %v3561, 32
    %v3704 = vpop.permute.xlu0 %3703
    %3705 = vrot.lane.b32.xlu0 %v3563, 32
    %v3706 = vpop.permute.xlu0 %3705
    %3707 = vrot.lane.b32.xlu0 %v3566, 32
    %v3708 = vpop.permute.xlu0 %3707
    %3709 = vrot.lane.b32.xlu0 %v3568, 32
    %v3710 = vpop.permute.xlu0 %3709
    %3711 = vrot.lane.b32.xlu0 %v3571, 32
    %v3712 = vpop.permute.xlu0 %3711
    %3713 = vrot.lane.b32.xlu0 %v3573, 32
    %v3714 = vpop.permute.xlu0 %3713
    %3715 = vrot.lane.b32.xlu0 %v3576, 32
    %v3716 = vpop.permute.xlu0 %3715
    %3717 = vrot.lane.b32.xlu0 %v3578, 32
    %v3718 = vpop.permute.xlu0 %3717
    %3719 = vrot.lane.b32.xlu0 %v3581, 32
    %v3720 = vpop.permute.xlu0 %3719
    %3721 = vrot.lane.b32.xlu0 %v3583, 32
    %v3722 = vpop.permute.xlu0 %3721
    %3723 = vrot.lane.b32.xlu0 %v3586, 32
    %v3724 = vpop.permute.xlu0 %3723
    %3725 = vrot.lane.b32.xlu0 %v3588, 32
    %v3726 = vpop.permute.xlu0 %3725
    %3727 = vrot.lane.b32.xlu0 %v3591, 32
    %v3728 = vpop.permute.xlu0 %3727
    %3729 = vrot.lane.b32.xlu0 %v3593, 32
    %v3730 = vpop.permute.xlu0 %3729
    %3731 = vrot.lane.b32.xlu0 %v3596, 32
    %v3732 = vpop.permute.xlu0 %3731
    %3733 = vrot.lane.b32.xlu0 %v3598, 32
    %v3734 = vpop.permute.xlu0 %3733
    %3735 = vrot.lane.b32.xlu0 %v3601, 32
    %v3736 = vpop.permute.xlu0 %3735
    %3737 = vrot.lane.b32.xlu0 %v3603, 32
    %v3738 = vpop.permute.xlu0 %3737
    %3739 = vrot.lane.b32.xlu0 %v3606, 32
    %v3740 = vpop.permute.xlu0 %3739
    %3741 = vrot.lane.b32.xlu0 %v3608, 32
    %v3742 = vpop.permute.xlu0 %3741
    %3743 = vrot.lane.b32.xlu0 %v3611, 32
    %v3744 = vpop.permute.xlu0 %3743
    %3745 = vrot.lane.b32.xlu0 %v3613, 32
    %v3746 = vpop.permute.xlu0 %3745
    %3747 = vrot.lane.b32.xlu0 %v3616, 32
    %v3748 = vpop.permute.xlu0 %3747
    %3749 = vrot.lane.b32.xlu0 %v3618, 32
    %v3750 = vpop.permute.xlu0 %3749
    %3751 = vrot.lane.b32.xlu0 %v3621, 32
    %v3752 = vpop.permute.xlu0 %3751
    %3753 = vrot.lane.b32.xlu0 %v3623, 32
    %v3754 = vpop.permute.xlu0 %3753
    %3755 = vrot.lane.b32.xlu0 %v3626, 32
    %v3756 = vpop.permute.xlu0 %3755
    %3757 = vrot.lane.b32.xlu0 %v3628, 32
    %v3758 = vpop.permute.xlu0 %3757
    %3759 = vrot.lane.b32.xlu0 %v3631, 32
    %v3760 = vpop.permute.xlu0 %3759
    %3761 = vrot.lane.b32.xlu0 %v3633, 32
    %v3762 = vpop.permute.xlu0 %3761
    %3763 = vrot.lane.b32.xlu0 %v3636, 32
    %v3764 = vpop.permute.xlu0 %3763
    %3765 = vrot.lane.b32.xlu0 %v3638, 32
    %v3766 = vpop.permute.xlu0 %3765
    %v3831 = vsel %vm603, %v756, %v1303
    %v3832 = vsel %vm603, %v757, %v1305
    %v3833 = vsel %vm603, %v759, %v1307
    %v3834 = vsel %vm603, %v760, %v1309
    %v3835 = vsel %vm603, %v762, %v1311
    %v3836 = vsel %vm603, %v763, %v1313
    %v3837 = vsel %vm603, %v765, %v1315
    %v3838 = vsel %vm603, %v766, %v1317
    %v3839 = vsel %vm603, %v768, %v1319
    %v3840 = vsel %vm603, %v769, %v1321
    %v3841 = vsel %vm603, %v771, %v1323
    %v3842 = vsel %vm603, %v772, %v1325
    %v3843 = vsel %vm603, %v774, %v1327
    %v3844 = vsel %vm603, %v775, %v1329
    %v3845 = vsel %vm603, %v777, %v1331
    %v3846 = vsel %vm603, %v778, %v1333
    %v3847 = vsel %vm603, %v780, %v1335
    %v3848 = vsel %vm603, %v781, %v1337
    %v3849 = vsel %vm603, %v783, %v1339
    %v3850 = vsel %vm603, %v784, %v1341
    %v3851 = vsel %vm603, %v786, %v1343
    %v3852 = vsel %vm603, %v787, %v1345
    %v3853 = vsel %vm603, %v789, %v1347
    %v3854 = vsel %vm603, %v790, %v1349
    %v3855 = vsel %vm603, %v792, %v1351
    %v3856 = vsel %vm603, %v793, %v1353
    %v3857 = vsel %vm603, %v795, %v1355
    %v3858 = vsel %vm603, %v796, %v1357
    %v3859 = vsel %vm603, %v798, %v1359
    %v3860 = vsel %vm603, %v799, %v1361
    %v3861 = vsel %vm603, %v801, %v1363
    %v3862 = vsel %vm603, %v802, %v1365
    %v3863 = vsel %vm603, %v804, %v1367
    %v3864 = vsel %vm603, %v805, %v1369
    %v3865 = vsel %vm603, %v807, %v1371
    %v3866 = vsel %vm603, %v808, %v1373
    %v3867 = vsel %vm603, %v810, %v1375
    %v3868 = vsel %vm603, %v811, %v1377
    %v3869 = vsel %vm603, %v813, %v1379
    %v3870 = vsel %vm603, %v814, %v1381
    %v3871 = vsel %vm603, %v816, %v1383
    %v3872 = vsel %vm603, %v817, %v1385
    %v3873 = vsel %vm603, %v819, %v1387
    %v3874 = vsel %vm603, %v820, %v1389
    %v3875 = vsel %vm603, %v822, %v1391
    %v3876 = vsel %vm603, %v823, %v1393
    %v3877 = vsel %vm603, %v825, %v1395
    %v3878 = vsel %vm603, %v826, %v1397
    %v3879 = vsel %vm603, %v828, %v1399
    %v3880 = vsel %vm603, %v829, %v1401
    %v3881 = vsel %vm603, %v831, %v1403
    %v3882 = vsel %vm603, %v832, %v1405
    %v3883 = vsel %vm603, %v834, %v1407
    %v3884 = vsel %vm603, %v835, %v1409
    %v3885 = vsel %vm603, %v837, %v1411
    %v3886 = vsel %vm603, %v838, %v1413
    %v3887 = vsel %vm603, %v840, %v1415
    %v3888 = vsel %vm603, %v841, %v1417
    %v3889 = vsel %vm603, %v843, %v1419
    %v3890 = vsel %vm603, %v844, %v1421
    %v3891 = vsel %vm603, %v846, %v1423
    %v3892 = vsel %vm603, %v847, %v1425
    %v3893 = vsel %vm603, %v849, %v1427
    %v3894 = vsel %vm603, %v850, %v1429
    %vm3895 = vcmask 64512
    %v3896 = vsel %vm3895, %v3831, %v1656
    %v3897 = vsel %vm3895, %v3832, %v1658
    %v3898 = vsel %vm3895, %v3833, %v1660
    %v3899 = vsel %vm3895, %v3834, %v1662
    %v3900 = vsel %vm3895, %v3835, %v1664
    %v3901 = vsel %vm3895, %v3836, %v1666
    %v3902 = vsel %vm3895, %v3837, %v1668
    %v3903 = vsel %vm3895, %v3838, %v1670
    %v3904 = vsel %vm3895, %v3839, %v1672
    %v3905 = vsel %vm3895, %v3840, %v1674
    %v3906 = vsel %vm3895, %v3841, %v1676
    %v3907 = vsel %vm3895, %v3842, %v1678
    %v3908 = vsel %vm3895, %v3843, %v1680
    %v3909 = vsel %vm3895, %v3844, %v1682
    %v3910 = vsel %vm3895, %v3845, %v1684
    %v3911 = vsel %vm3895, %v3846, %v1686
    %v3912 = vsel %vm3895, %v3847, %v1688
    %v3913 = vsel %vm3895, %v3848, %v1690
    %v3914 = vsel %vm3895, %v3849, %v1692
    %v3915 = vsel %vm3895, %v3850, %v1694
    %v3916 = vsel %vm3895, %v3851, %v1696
    %v3917 = vsel %vm3895, %v3852, %v1698
    %v3918 = vsel %vm3895, %v3853, %v1700
    %v3919 = vsel %vm3895, %v3854, %v1702
    %v3920 = vsel %vm3895, %v3855, %v1704
    %v3921 = vsel %vm3895, %v3856, %v1706
    %v3922 = vsel %vm3895, %v3857, %v1708
    %v3923 = vsel %vm3895, %v3858, %v1710
    %v3924 = vsel %vm3895, %v3859, %v1712
    %v3925 = vsel %vm3895, %v3860, %v1714
    %v3926 = vsel %vm3895, %v3861, %v1716
    %v3927 = vsel %vm3895, %v3862, %v1718
    %v3928 = vsel %vm3895, %v3863, %v1720
    %v3929 = vsel %vm3895, %v3864, %v1722
    %v3930 = vsel %vm3895, %v3865, %v1724
    %v3931 = vsel %vm3895, %v3866, %v1726
    %v3932 = vsel %vm3895, %v3867, %v1728
    %v3933 = vsel %vm3895, %v3868, %v1730
    %v3934 = vsel %vm3895, %v3869, %v1732
    %v3935 = vsel %vm3895, %v3870, %v1734
    %v3936 = vsel %vm3895, %v3871, %v1736
    %v3937 = vsel %vm3895, %v3872, %v1738
    %v3938 = vsel %vm3895, %v3873, %v1740
    %v3939 = vsel %vm3895, %v3874, %v1742
    %v3940 = vsel %vm3895, %v3875, %v1744
    %v3941 = vsel %vm3895, %v3876, %v1746
    %v3942 = vsel %vm3895, %v3877, %v1748
    %v3943 = vsel %vm3895, %v3878, %v1750
    %v3944 = vsel %vm3895, %v3879, %v1752
    %v3945 = vsel %vm3895, %v3880, %v1754
    %v3946 = vsel %vm3895, %v3881, %v1756
    %v3947 = vsel %vm3895, %v3882, %v1758
    %v3948 = vsel %vm3895, %v3883, %v1760
    %v3949 = vsel %vm3895, %v3884, %v1762
    %v3950 = vsel %vm3895, %v3885, %v1764
    %v3951 = vsel %vm3895, %v3886, %v1766
    %v3952 = vsel %vm3895, %v3887, %v1768
    %v3953 = vsel %vm3895, %v3888, %v1770
    %v3954 = vsel %vm3895, %v3889, %v1772
    %v3955 = vsel %vm3895, %v3890, %v1774
    %v3956 = vsel %vm3895, %v3891, %v1776
    %v3957 = vsel %vm3895, %v3892, %v1778
    %v3958 = vsel %vm3895, %v3893, %v1780
    %v3959 = vsel %vm3895, %v3894, %v1782
    %vm3960 = vcmask 97280
    %v3961 = vsel %vm3960, %v3896, %v1912
    %v3962 = vsel %vm3960, %v3897, %v1914
    %v3963 = vsel %vm3960, %v3898, %v1916
    %v3964 = vsel %vm3960, %v3899, %v1918
    %v3965 = vsel %vm3960, %v3900, %v1920
    %v3966 = vsel %vm3960, %v3901, %v1922
    %v3967 = vsel %vm3960, %v3902, %v1924
    %v3968 = vsel %vm3960, %v3903, %v1926
    %v3969 = vsel %vm3960, %v3904, %v1928
    %v3970 = vsel %vm3960, %v3905, %v1930
    %v3971 = vsel %vm3960, %v3906, %v1932
    %v3972 = vsel %vm3960, %v3907, %v1934
    %v3973 = vsel %vm3960, %v3908, %v1936
    %v3974 = vsel %vm3960, %v3909, %v1938
    %v3975 = vsel %vm3960, %v3910, %v1940
    %v3976 = vsel %vm3960, %v3911, %v1942
    %v3977 = vsel %vm3960, %v3912, %v1944
    %v3978 = vsel %vm3960, %v3913, %v1946
    %v3979 = vsel %vm3960, %v3914, %v1948
    %v3980 = vsel %vm3960, %v3915, %v1950
    %v3981 = vsel %vm3960, %v3916, %v1952
    %v3982 = vsel %vm3960, %v3917, %v1954
    %v3983 = vsel %vm3960, %v3918, %v1956
    %v3984 = vsel %vm3960, %v3919, %v1958
    %v3985 = vsel %vm3960, %v3920, %v1960
    %v3986 = vsel %vm3960, %v3921, %v1962
    %v3987 = vsel %vm3960, %v3922, %v1964
    %v3988 = vsel %vm3960, %v3923, %v1966
    %v3989 = vsel %vm3960, %v3924, %v1968
    %v3990 = vsel %vm3960, %v3925, %v1970
    %v3991 = vsel %vm3960, %v3926, %v1972
    %v3992 = vsel %vm3960, %v3927, %v1974
    %v3993 = vsel %vm3960, %v3928, %v1976
    %v3994 = vsel %vm3960, %v3929, %v1978
    %v3995 = vsel %vm3960, %v3930, %v1980
    %v3996 = vsel %vm3960, %v3931, %v1982
    %v3997 = vsel %vm3960, %v3932, %v1984
    %v3998 = vsel %vm3960, %v3933, %v1986
    %v3999 = vsel %vm3960, %v3934, %v1988
    %v4000 = vsel %vm3960, %v3935, %v1990
    %v4001 = vsel %vm3960, %v3936, %v1992
    %v4002 = vsel %vm3960, %v3937, %v1994
    %v4003 = vsel %vm3960, %v3938, %v1996
    %v4004 = vsel %vm3960, %v3939, %v1998
    %v4005 = vsel %vm3960, %v3940, %v2000
    %v4006 = vsel %vm3960, %v3941, %v2002
    %v4007 = vsel %vm3960, %v3942, %v2004
    %v4008 = vsel %vm3960, %v3943, %v2006
    %v4009 = vsel %vm3960, %v3944, %v2008
    %v4010 = vsel %vm3960, %v3945, %v2010
    %v4011 = vsel %vm3960, %v3946, %v2012
    %v4012 = vsel %vm3960, %v3947, %v2014
    %v4013 = vsel %vm3960, %v3948, %v2016
    %v4014 = vsel %vm3960, %v3949, %v2018
    %v4015 = vsel %vm3960, %v3950, %v2020
    %v4016 = vsel %vm3960, %v3951, %v2022
    %v4017 = vsel %vm3960, %v3952, %v2024
    %v4018 = vsel %vm3960, %v3953, %v2026
    %v4019 = vsel %vm3960, %v3954, %v2028
    %v4020 = vsel %vm3960, %v3955, %v2030
    %v4021 = vsel %vm3960, %v3956, %v2032
    %v4022 = vsel %vm3960, %v3957, %v2034
    %v4023 = vsel %vm3960, %v3958, %v2036
    %v4024 = vsel %vm3960, %v3959, %v2038
    %v4025 = vsel %vm153, %v3961, %v2296
    %v4026 = vsel %vm153, %v3962, %v2298
    %v4027 = vsel %vm153, %v3963, %v2300
    %v4028 = vsel %vm153, %v3964, %v2302
    %v4029 = vsel %vm153, %v3965, %v2304
    %v4030 = vsel %vm153, %v3966, %v2306
    %v4031 = vsel %vm153, %v3967, %v2308
    %v4032 = vsel %vm153, %v3968, %v2310
    %v4033 = vsel %vm153, %v3969, %v2312
    %v4034 = vsel %vm153, %v3970, %v2314
    %v4035 = vsel %vm153, %v3971, %v2316
    %v4036 = vsel %vm153, %v3972, %v2318
    %v4037 = vsel %vm153, %v3973, %v2320
    %v4038 = vsel %vm153, %v3974, %v2322
    %v4039 = vsel %vm153, %v3975, %v2324
    %v4040 = vsel %vm153, %v3976, %v2326
    %v4041 = vsel %vm153, %v3977, %v2328
    %v4042 = vsel %vm153, %v3978, %v2330
    %v4043 = vsel %vm153, %v3979, %v2332
    %v4044 = vsel %vm153, %v3980, %v2334
    %v4045 = vsel %vm153, %v3981, %v2336
    %v4046 = vsel %vm153, %v3982, %v2338
    %v4047 = vsel %vm153, %v3983, %v2340
    %v4048 = vsel %vm153, %v3984, %v2342
    %v4049 = vsel %vm153, %v3985, %v2344
    %v4050 = vsel %vm153, %v3986, %v2346
    %v4051 = vsel %vm153, %v3987, %v2348
    %v4052 = vsel %vm153, %v3988, %v2350
    %v4053 = vsel %vm153, %v3989, %v2352
    %v4054 = vsel %vm153, %v3990, %v2354
    %v4055 = vsel %vm153, %v3991, %v2356
    %v4056 = vsel %vm153, %v3992, %v2358
    %v4057 = vsel %vm153, %v3993, %v2360
    %v4058 = vsel %vm153, %v3994, %v2362
    %v4059 = vsel %vm153, %v3995, %v2364
    %v4060 = vsel %vm153, %v3996, %v2366
    %v4061 = vsel %vm153, %v3997, %v2368
    %v4062 = vsel %vm153, %v3998, %v2370
    %v4063 = vsel %vm153, %v3999, %v2372
    %v4064 = vsel %vm153, %v4000, %v2374
    %v4065 = vsel %vm153, %v4001, %v2376
    %v4066 = vsel %vm153, %v4002, %v2378
    %v4067 = vsel %vm153, %v4003, %v2380
    %v4068 = vsel %vm153, %v4004, %v2382
    %v4069 = vsel %vm153, %v4005, %v2384
    %v4070 = vsel %vm153, %v4006, %v2386
    %v4071 = vsel %vm153, %v4007, %v2388
    %v4072 = vsel %vm153, %v4008, %v2390
    %v4073 = vsel %vm153, %v4009, %v2392
    %v4074 = vsel %vm153, %v4010, %v2394
    %v4075 = vsel %vm153, %v4011, %v2396
    %v4076 = vsel %vm153, %v4012, %v2398
    %v4077 = vsel %vm153, %v4013, %v2400
    %v4078 = vsel %vm153, %v4014, %v2402
    %v4079 = vsel %vm153, %v4015, %v2404
    %v4080 = vsel %vm153, %v4016, %v2406
    %v4081 = vsel %vm153, %v4017, %v2408
    %v4082 = vsel %vm153, %v4018, %v2410
    %v4083 = vsel %vm153, %v4019, %v2412
    %v4084 = vsel %vm153, %v4020, %v2414
    %v4085 = vsel %vm153, %v4021, %v2416
    %v4086 = vsel %vm153, %v4022, %v2418
    %v4087 = vsel %vm153, %v4023, %v2420
    %v4088 = vsel %vm153, %v4024, %v2422
    %vm4089 = vcmask 162816
    %v4090 = vsel %vm4089, %v4025, %v2648
    %v4091 = vsel %vm4089, %v4026, %v2650
    %v4092 = vsel %vm4089, %v4027, %v2652
    %v4093 = vsel %vm4089, %v4028, %v2654
    %v4094 = vsel %vm4089, %v4029, %v2656
    %v4095 = vsel %vm4089, %v4030, %v2658
    %v4096 = vsel %vm4089, %v4031, %v2660
    %v4097 = vsel %vm4089, %v4032, %v2662
    %v4098 = vsel %vm4089, %v4033, %v2664
    %v4099 = vsel %vm4089, %v4034, %v2666
    %v4100 = vsel %vm4089, %v4035, %v2668
    %v4101 = vsel %vm4089, %v4036, %v2670
    %v4102 = vsel %vm4089, %v4037, %v2672
    %v4103 = vsel %vm4089, %v4038, %v2674
    %v4104 = vsel %vm4089, %v4039, %v2676
    %v4105 = vsel %vm4089, %v4040, %v2678
    %v4106 = vsel %vm4089, %v4041, %v2680
    %v4107 = vsel %vm4089, %v4042, %v2682
    %v4108 = vsel %vm4089, %v4043, %v2684
    %v4109 = vsel %vm4089, %v4044, %v2686
    %v4110 = vsel %vm4089, %v4045, %v2688
    %v4111 = vsel %vm4089, %v4046, %v2690
    %v4112 = vsel %vm4089, %v4047, %v2692
    %v4113 = vsel %vm4089, %v4048, %v2694
    %v4114 = vsel %vm4089, %v4049, %v2696
    %v4115 = vsel %vm4089, %v4050, %v2698
    %v4116 = vsel %vm4089, %v4051, %v2700
    %v4117 = vsel %vm4089, %v4052, %v2702
    %v4118 = vsel %vm4089, %v4053, %v2704
    %v4119 = vsel %vm4089, %v4054, %v2706
    %v4120 = vsel %vm4089, %v4055, %v2708
    %v4121 = vsel %vm4089, %v4056, %v2710
    %v4122 = vsel %vm4089, %v4057, %v2712
    %v4123 = vsel %vm4089, %v4058, %v2714
    %v4124 = vsel %vm4089, %v4059, %v2716
    %v4125 = vsel %vm4089, %v4060, %v2718
    %v4126 = vsel %vm4089, %v4061, %v2720
    %v4127 = vsel %vm4089, %v4062, %v2722
    %v4128 = vsel %vm4089, %v4063, %v2724
    %v4129 = vsel %vm4089, %v4064, %v2726
    %v4130 = vsel %vm4089, %v4065, %v2728
    %v4131 = vsel %vm4089, %v4066, %v2730
    %v4132 = vsel %vm4089, %v4067, %v2732
    %v4133 = vsel %vm4089, %v4068, %v2734
    %v4134 = vsel %vm4089, %v4069, %v2736
    %v4135 = vsel %vm4089, %v4070, %v2738
    %v4136 = vsel %vm4089, %v4071, %v2740
    %v4137 = vsel %vm4089, %v4072, %v2742
    %v4138 = vsel %vm4089, %v4073, %v2744
    %v4139 = vsel %vm4089, %v4074, %v2746
    %v4140 = vsel %vm4089, %v4075, %v2748
    %v4141 = vsel %vm4089, %v4076, %v2750
    %v4142 = vsel %vm4089, %v4077, %v2752
    %v4143 = vsel %vm4089, %v4078, %v2754
    %v4144 = vsel %vm4089, %v4079, %v2756
    %v4145 = vsel %vm4089, %v4080, %v2758
    %v4146 = vsel %vm4089, %v4081, %v2760
    %v4147 = vsel %vm4089, %v4082, %v2762
    %v4148 = vsel %vm4089, %v4083, %v2764
    %v4149 = vsel %vm4089, %v4084, %v2766
    %v4150 = vsel %vm4089, %v4085, %v2768
    %v4151 = vsel %vm4089, %v4086, %v2770
    %v4152 = vsel %vm4089, %v4087, %v2772
    %v4153 = vsel %vm4089, %v4088, %v2774
    %vm4154 = vcmask 195584
    %v4155 = vsel %vm4154, %v4090, %v2904
    %v4156 = vsel %vm4154, %v4091, %v2906
    %v4157 = vsel %vm4154, %v4092, %v2908
    %v4158 = vsel %vm4154, %v4093, %v2910
    %v4159 = vsel %vm4154, %v4094, %v2912
    %v4160 = vsel %vm4154, %v4095, %v2914
    %v4161 = vsel %vm4154, %v4096, %v2916
    %v4162 = vsel %vm4154, %v4097, %v2918
    %v4163 = vsel %vm4154, %v4098, %v2920
    %v4164 = vsel %vm4154, %v4099, %v2922
    %v4165 = vsel %vm4154, %v4100, %v2924
    %v4166 = vsel %vm4154, %v4101, %v2926
    %v4167 = vsel %vm4154, %v4102, %v2928
    %v4168 = vsel %vm4154, %v4103, %v2930
    %v4169 = vsel %vm4154, %v4104, %v2932
    %v4170 = vsel %vm4154, %v4105, %v2934
    %v4171 = vsel %vm4154, %v4106, %v2936
    %v4172 = vsel %vm4154, %v4107, %v2938
    %v4173 = vsel %vm4154, %v4108, %v2940
    %v4174 = vsel %vm4154, %v4109, %v2942
    %v4175 = vsel %vm4154, %v4110, %v2944
    %v4176 = vsel %vm4154, %v4111, %v2946
    %v4177 = vsel %vm4154, %v4112, %v2948
    %v4178 = vsel %vm4154, %v4113, %v2950
    %v4179 = vsel %vm4154, %v4114, %v2952
    %v4180 = vsel %vm4154, %v4115, %v2954
    %v4181 = vsel %vm4154, %v4116, %v2956
    %v4182 = vsel %vm4154, %v4117, %v2958
    %v4183 = vsel %vm4154, %v4118, %v2960
    %v4184 = vsel %vm4154, %v4119, %v2962
    %v4185 = vsel %vm4154, %v4120, %v2964
    %v4186 = vsel %vm4154, %v4121, %v2966
    %v4187 = vsel %vm4154, %v4122, %v2968
    %v4188 = vsel %vm4154, %v4123, %v2970
    %v4189 = vsel %vm4154, %v4124, %v2972
    %v4190 = vsel %vm4154, %v4125, %v2974
    %v4191 = vsel %vm4154, %v4126, %v2976
    %v4192 = vsel %vm4154, %v4127, %v2978
    %v4193 = vsel %vm4154, %v4128, %v2980
    %v4194 = vsel %vm4154, %v4129, %v2982
    %v4195 = vsel %vm4154, %v4130, %v2984
    %v4196 = vsel %vm4154, %v4131, %v2986
    %v4197 = vsel %vm4154, %v4132, %v2988
    %v4198 = vsel %vm4154, %v4133, %v2990
    %v4199 = vsel %vm4154, %v4134, %v2992
    %v4200 = vsel %vm4154, %v4135, %v2994
    %v4201 = vsel %vm4154, %v4136, %v2996
    %v4202 = vsel %vm4154, %v4137, %v2998
    %v4203 = vsel %vm4154, %v4138, %v3000
    %v4204 = vsel %vm4154, %v4139, %v3002
    %v4205 = vsel %vm4154, %v4140, %v3004
    %v4206 = vsel %vm4154, %v4141, %v3006
    %v4207 = vsel %vm4154, %v4142, %v3008
    %v4208 = vsel %vm4154, %v4143, %v3010
    %v4209 = vsel %vm4154, %v4144, %v3012
    %v4210 = vsel %vm4154, %v4145, %v3014
    %v4211 = vsel %vm4154, %v4146, %v3016
    %v4212 = vsel %vm4154, %v4147, %v3018
    %v4213 = vsel %vm4154, %v4148, %v3020
    %v4214 = vsel %vm4154, %v4149, %v3022
    %v4215 = vsel %vm4154, %v4150, %v3024
    %v4216 = vsel %vm4154, %v4151, %v3026
    %v4217 = vsel %vm4154, %v4152, %v3028
    %v4218 = vsel %vm4154, %v4153, %v3030
    %vm4219 = vcmask 228352
    %v4220 = vsel %vm4219, %v4155, %v3288
    %v4221 = vsel %vm4219, %v4156, %v3290
    %v4222 = vsel %vm4219, %v4157, %v3292
    %v4223 = vsel %vm4219, %v4158, %v3294
    %v4224 = vsel %vm4219, %v4159, %v3296
    %v4225 = vsel %vm4219, %v4160, %v3298
    %v4226 = vsel %vm4219, %v4161, %v3300
    %v4227 = vsel %vm4219, %v4162, %v3302
    %v4228 = vsel %vm4219, %v4163, %v3304
    %v4229 = vsel %vm4219, %v4164, %v3306
    %v4230 = vsel %vm4219, %v4165, %v3308
    %v4231 = vsel %vm4219, %v4166, %v3310
    %v4232 = vsel %vm4219, %v4167, %v3312
    %v4233 = vsel %vm4219, %v4168, %v3314
    %v4234 = vsel %vm4219, %v4169, %v3316
    %v4235 = vsel %vm4219, %v4170, %v3318
    %v4236 = vsel %vm4219, %v4171, %v3320
    %v4237 = vsel %vm4219, %v4172, %v3322
    %v4238 = vsel %vm4219, %v4173, %v3324
    %v4239 = vsel %vm4219, %v4174, %v3326
    %v4240 = vsel %vm4219, %v4175, %v3328
    %v4241 = vsel %vm4219, %v4176, %v3330
    %v4242 = vsel %vm4219, %v4177, %v3332
    %v4243 = vsel %vm4219, %v4178, %v3334
    %v4244 = vsel %vm4219, %v4179, %v3336
    %v4245 = vsel %vm4219, %v4180, %v3338
    %v4246 = vsel %vm4219, %v4181, %v3340
    %v4247 = vsel %vm4219, %v4182, %v3342
    %v4248 = vsel %vm4219, %v4183, %v3344
    %v4249 = vsel %vm4219, %v4184, %v3346
    %v4250 = vsel %vm4219, %v4185, %v3348
    %v4251 = vsel %vm4219, %v4186, %v3350
    %v4252 = vsel %vm4219, %v4187, %v3352
    %v4253 = vsel %vm4219, %v4188, %v3354
    %v4254 = vsel %vm4219, %v4189, %v3356
    %v4255 = vsel %vm4219, %v4190, %v3358
    %v4256 = vsel %vm4219, %v4191, %v3360
    %v4257 = vsel %vm4219, %v4192, %v3362
    %v4258 = vsel %vm4219, %v4193, %v3364
    %v4259 = vsel %vm4219, %v4194, %v3366
    %v4260 = vsel %vm4219, %v4195, %v3368
    %v4261 = vsel %vm4219, %v4196, %v3370
    %v4262 = vsel %vm4219, %v4197, %v3372
    %v4263 = vsel %vm4219, %v4198, %v3374
    %v4264 = vsel %vm4219, %v4199, %v3376
    %v4265 = vsel %vm4219, %v4200, %v3378
    %v4266 = vsel %vm4219, %v4201, %v3380
    %v4267 = vsel %vm4219, %v4202, %v3382
    %v4268 = vsel %vm4219, %v4203, %v3384
    %v4269 = vsel %vm4219, %v4204, %v3386
    %v4270 = vsel %vm4219, %v4205, %v3388
    %v4271 = vsel %vm4219, %v4206, %v3390
    %v4272 = vsel %vm4219, %v4207, %v3392
    %v4273 = vsel %vm4219, %v4208, %v3394
    %v4274 = vsel %vm4219, %v4209, %v3396
    %v4275 = vsel %vm4219, %v4210, %v3398
    %v4276 = vsel %vm4219, %v4211, %v3400
    %v4277 = vsel %vm4219, %v4212, %v3402
    %v4278 = vsel %vm4219, %v4213, %v3404
    %v4279 = vsel %vm4219, %v4214, %v3406
    %v4280 = vsel %vm4219, %v4215, %v3408
    %v4281 = vsel %vm4219, %v4216, %v3410
    %v4282 = vsel %vm4219, %v4217, %v3412
    %v4283 = vsel %vm4219, %v4218, %v3414
    %vm4284 = vcmask 261120
    %v4285 = vsel %vm4284, %v4220, %v3640
    %v4286 = vsel %vm4284, %v4221, %v3642
    %v4287 = vsel %vm4284, %v4222, %v3644
    %v4288 = vsel %vm4284, %v4223, %v3646
    %v4289 = vsel %vm4284, %v4224, %v3648
    %v4290 = vsel %vm4284, %v4225, %v3650
    %v4291 = vsel %vm4284, %v4226, %v3652
    %v4292 = vsel %vm4284, %v4227, %v3654
    %v4293 = vsel %vm4284, %v4228, %v3656
    %v4294 = vsel %vm4284, %v4229, %v3658
    %v4295 = vsel %vm4284, %v4230, %v3660
    %v4296 = vsel %vm4284, %v4231, %v3662
    %v4297 = vsel %vm4284, %v4232, %v3664
    %v4298 = vsel %vm4284, %v4233, %v3666
    %v4299 = vsel %vm4284, %v4234, %v3668
    %v4300 = vsel %vm4284, %v4235, %v3670
    %v4301 = vsel %vm4284, %v4236, %v3672
    %v4302 = vsel %vm4284, %v4237, %v3674
    %v4303 = vsel %vm4284, %v4238, %v3676
    %v4304 = vsel %vm4284, %v4239, %v3678
    %v4305 = vsel %vm4284, %v4240, %v3680
    %v4306 = vsel %vm4284, %v4241, %v3682
    %v4307 = vsel %vm4284, %v4242, %v3684
    %v4308 = vsel %vm4284, %v4243, %v3686
    %v4309 = vsel %vm4284, %v4244, %v3688
    %v4310 = vsel %vm4284, %v4245, %v3690
    %v4311 = vsel %vm4284, %v4246, %v3692
    %v4312 = vsel %vm4284, %v4247, %v3694
    %v4313 = vsel %vm4284, %v4248, %v3696
    %v4314 = vsel %vm4284, %v4249, %v3698
    %v4315 = vsel %vm4284, %v4250, %v3700
    %v4316 = vsel %vm4284, %v4251, %v3702
    %v4317 = vsel %vm4284, %v4252, %v3704
    %v4318 = vsel %vm4284, %v4253, %v3706
    %v4319 = vsel %vm4284, %v4254, %v3708
    %v4320 = vsel %vm4284, %v4255, %v3710
    %v4321 = vsel %vm4284, %v4256, %v3712
    %v4322 = vsel %vm4284, %v4257, %v3714
    %v4323 = vsel %vm4284, %v4258, %v3716
    %v4324 = vsel %vm4284, %v4259, %v3718
    %v4325 = vsel %vm4284, %v4260, %v3720
    %v4326 = vsel %vm4284, %v4261, %v3722
    %v4327 = vsel %vm4284, %v4262, %v3724
    %v4328 = vsel %vm4284, %v4263, %v3726
    %v4329 = vsel %vm4284, %v4264, %v3728
    %v4330 = vsel %vm4284, %v4265, %v3730
    %v4331 = vsel %vm4284, %v4266, %v3732
    %v4332 = vsel %vm4284, %v4267, %v3734
    %v4333 = vsel %vm4284, %v4268, %v3736
    %v4334 = vsel %vm4284, %v4269, %v3738
    %v4335 = vsel %vm4284, %v4270, %v3740
    %v4336 = vsel %vm4284, %v4271, %v3742
    %v4337 = vsel %vm4284, %v4272, %v3744
    %v4338 = vsel %vm4284, %v4273, %v3746
    %v4339 = vsel %vm4284, %v4274, %v3748
    %v4340 = vsel %vm4284, %v4275, %v3750
    %v4341 = vsel %vm4284, %v4276, %v3752
    %v4342 = vsel %vm4284, %v4277, %v3754
    %v4343 = vsel %vm4284, %v4278, %v3756
    %v4344 = vsel %vm4284, %v4279, %v3758
    %v4345 = vsel %vm4284, %v4280, %v3760
    %v4346 = vsel %vm4284, %v4281, %v3762
    %v4347 = vsel %vm4284, %v4282, %v3764
    %v4348 = vsel %vm4284, %v4283, %v3766
    %v4349 = vpack.c.bf16 %v4286, %v4285
    %v4350 = vpack.c.bf16 %v4288, %v4287
    %v4351 = vpack.c.bf16 %v4290, %v4289
    %v4352 = vpack.c.bf16 %v4292, %v4291
    %v4353 = vpack.c.bf16 %v4294, %v4293
    %v4354 = vpack.c.bf16 %v4296, %v4295
    %v4355 = vpack.c.bf16 %v4298, %v4297
    %v4356 = vpack.c.bf16 %v4300, %v4299
    %v4357 = vpack.c.bf16 %v4302, %v4301
    %v4358 = vpack.c.bf16 %v4304, %v4303
    %v4359 = vpack.c.bf16 %v4306, %v4305
    %v4360 = vpack.c.bf16 %v4308, %v4307
    %v4361 = vpack.c.bf16 %v4310, %v4309
    %v4362 = vpack.c.bf16 %v4312, %v4311
    %v4363 = vpack.c.bf16 %v4314, %v4313
    %v4364 = vpack.c.bf16 %v4316, %v4315
    %v4365 = vpack.c.bf16 %v4318, %v4317
    %v4366 = vpack.c.bf16 %v4320, %v4319
    %v4367 = vpack.c.bf16 %v4322, %v4321
    %v4368 = vpack.c.bf16 %v4324, %v4323
    %v4369 = vpack.c.bf16 %v4326, %v4325
    %v4370 = vpack.c.bf16 %v4328, %v4327
    %v4371 = vpack.c.bf16 %v4330, %v4329
    %v4372 = vpack.c.bf16 %v4332, %v4331
    %v4373 = vpack.c.bf16 %v4334, %v4333
    %v4374 = vpack.c.bf16 %v4336, %v4335
    %v4375 = vpack.c.bf16 %v4338, %v4337
    %v4376 = vpack.c.bf16 %v4340, %v4339
    %v4377 = vpack.c.bf16 %v4342, %v4341
    %v4378 = vpack.c.bf16 %v4344, %v4343
    %v4379 = vpack.c.bf16 %v4346, %v4345
    %v4380 = vpack.c.bf16 %v4348, %v4347
    %v4381 = vld [vmem:[%s2] sm:$0xf]
    %v4382 = vld [vmem:[%s2 + $0x4] sm:$0xf]
    %v4383 = vld [vmem:[%s2 + $0x8] sm:$0xf]
    %v4384 = vld [vmem:[%s2 + $0xc] sm:$0xf]
    %v4385 = vld [vmem:[%s2 + $0x10] sm:$0x3]
    %v4386 = vld [vmem:[%s5] sm:$0x1]
    %v4388 = vlaneseq
    %v4389 = vshrl.u32 %v4388, 7
    %v4390 = vsub.s32 0, %v4389
    %v4391 = vrot.slane %v4386, %v4390
    %v4398 = vunpack.c.l.b16 %v4381
    %v4399 = vunpack.c.l.b16 %v4382
    %v4400 = vunpack.c.l.b16 %v4383
    %v4401 = vunpack.c.l.b16 %v4384
    %v4402 = vunpack.c.l.b16 %v4385
    %v4403 = vpack.c.b16 %v4399, %v4398
    %v4404 = vpack.c.b16 %v4401, %v4400
    %v4405 = vpack.c.b16 %v4402, %v4402
    %vm4408 = vcmask 293888
    %v4410 = vsel %vm4408, %v4349, 0
    %v4413 = vsel %vm4408, %v4350, 0
    %v4416 = vsel %vm4408, %v4351, 0
    %v4419 = vsel %vm4408, %v4352, 0
    %v4422 = vsel %vm4408, %v4353, 0
    %v4425 = vsel %vm4408, %v4354, 0
    %v4428 = vsel %vm4408, %v4355, 0
    %v4431 = vsel %vm4408, %v4356, 0
    %v4434 = vsel %vm4408, %v4357, 0
    %v4437 = vsel %vm4408, %v4358, 0
    %v4440 = vsel %vm4408, %v4359, 0
    %v4443 = vsel %vm4408, %v4360, 0
    %v4446 = vsel %vm4408, %v4361, 0
    %v4449 = vsel %vm4408, %v4362, 0
    %v4452 = vsel %vm4408, %v4363, 0
    %v4455 = vsel %vm4408, %v4364, 0
    %v4458 = vsel %vm4408, %v4365, 0
    %v4461 = vsel %vm4408, %v4366, 0
    %v4464 = vsel %vm4408, %v4367, 0
    %v4467 = vsel %vm4408, %v4368, 0
    %v4470 = vsel %vm4408, %v4369, 0
    %v4473 = vsel %vm4408, %v4370, 0
    %v4476 = vsel %vm4408, %v4371, 0
    %v4479 = vsel %vm4408, %v4372, 0
    %v4482 = vsel %vm4408, %v4373, 0
    %v4485 = vsel %vm4408, %v4374, 0
    %v4488 = vsel %vm4408, %v4375, 0
    %v4491 = vsel %vm4408, %v4376, 0
    %v4494 = vsel %vm4408, %v4377, 0
    %v4497 = vsel %vm4408, %v4378, 0
    %v4500 = vsel %vm4408, %v4379, 0
    %v4503 = vsel %vm4408, %v4380, 0
    %vm4505 = vcmask 1041408
    %v4507 = vsel %vm4505, %v4405, 0
    %4509 = vmatprep.subr.bf16.mxu0 0
    %4510 = vmatpush1.bf16.msra.mxu0 %v4403
    %4511 = vmatprep.subr.bf16.mxu0 0
    %4512 = vmatpush1.bf16.msra.mxu0 %v4404
    %4513 = vmatprep.subr.bf16.mxu0 0
    %4514 = vmatpush1.bf16.msra.mxu0 %v4507
    %4515 = vmatprep.subr.bf16.mxu0 0
    %4516 = vmatpush1.bf16.msra.mxu0 0
    %4517 = vmatprep.subr.bf16.mxu0 0
    %4518 = vmatpush1.bf16.msra.mxu0 0
    %4519 = vmatprep.subr.bf16.mxu0 0
    %4520 = vmatpush1.bf16.msra.mxu0 0
    %4521 = vmatprep.subr.bf16.mxu0 0
    %4522 = vmatpush1.bf16.msra.mxu0 0
    %4523 = vmatprep.subr.bf16.mxu0 0
    %4524 = vmatpush1.bf16.msra.mxu0 0
    %4525 = vmatprep.subr.bf16.mxu0 0
    %4526 = vmatpush1.bf16.msra.mxu0 0
    %4527 = vmatprep.subr.bf16.mxu0 0
    %4528 = vmatpush1.bf16.msra.mxu0 0
    %4529 = vmatprep.subr.bf16.mxu0 0
    %4530 = vmatpush1.bf16.msra.mxu0 0
    %4531 = vmatprep.subr.bf16.mxu0 0
    %4532 = vmatpush1.bf16.msra.mxu0 0
    %4533 = vmatprep.subr.bf16.mxu0 0
    %4534 = vmatpush1.bf16.msra.mxu0 0
    %4535 = vmatprep.subr.bf16.mxu0 0
    %4536 = vmatpush1.bf16.msra.mxu0 0
    %4537 = vmatprep.subr.bf16.mxu0 0
    %4538 = vmatpush1.bf16.msra.mxu0 0
    %4539 = vmatprep.subr.bf16.mxu0 0
    %4540 = vmatpush1.bf16.msra.mxu0 0
    %4541 = vmatprep.mubr.bf16.mxu0 0
    %4542 = vmatmul.mubr.bf16.gmra.mrb[0].mxu0 %v4410
    %v4543 = vpop.f32.mrb[0].mxu0
    %v4544 = vadd.f32 %v4391, %v4543
    %v4545 = vpop.f32.mrb[0].mxu0
    %v4546 = vpop.f32.mrb[0].mxu0
    %v4547 = vadd.f32 %v4391, %v4546
    %v4548 = vpop.f32.mrb[0].mxu0
    %4549 = vmatprep.mubr.bf16.mxu0 0
    %4550 = vmatmul.mubr.bf16.gmra.mrb[0].mxu0 %v4413
    %v4551 = vpop.f32.mrb[0].mxu0
    %v4552 = vadd.f32 %v4391, %v4551
    %v4553 = vpop.f32.mrb[0].mxu0
    %v4554 = vpop.f32.mrb[0].mxu0
    %v4555 = vadd.f32 %v4391, %v4554
    %v4556 = vpop.f32.mrb[0].mxu0
    %4557 = vmatprep.mubr.bf16.mxu0 0
    %4558 = vmatmul.mubr.bf16.gmra.mrb[0].mxu0 %v4416
    %v4559 = vpop.f32.mrb[0].mxu0
    %v4560 = vadd.f32 %v4391, %v4559
    %v4561 = vpop.f32.mrb[0].mxu0
    %v4562 = vpop.f32.mrb[0].mxu0
    %v4563 = vadd.f32 %v4391, %v4562
    %v4564 = vpop.f32.mrb[0].mxu0
    %4565 = vmatprep.mubr.bf16.mxu0 0
    %4566 = vmatmul.mubr.bf16.gmra.mrb[0].mxu0 %v4419
    %v4567 = vpop.f32.mrb[0].mxu0
    %v4568 = vadd.f32 %v4391, %v4567
    %v4569 = vpop.f32.mrb[0].mxu0
    %v4570 = vpop.f32.mrb[0].mxu0
    %v4571 = vadd.f32 %v4391, %v4570
    %v4572 = vpop.f32.mrb[0].mxu0
    %4573 = vmatprep.mubr.bf16.mxu0 0
    %4574 = vmatmul.mubr.bf16.gmra.mrb[0].mxu0 %v4422
    %v4575 = vpop.f32.mrb[0].mxu0
    %v4576 = vadd.f32 %v4391, %v4575
    %v4577 = vpop.f32.mrb[0].mxu0
    %v4578 = vpop.f32.mrb[0].mxu0
    %v4579 = vadd.f32 %v4391, %v4578
    %v4580 = vpop.f32.mrb[0].mxu0
    %4581 = vmatprep.mubr.bf16.mxu0 0
    %4582 = vmatmul.mubr.bf16.gmra.mrb[0].mxu0 %v4425
    %v4583 = vpop.f32.mrb[0].mxu0
    %v4584 = vadd.f32 %v4391, %v4583
    %v4585 = vpop.f32.mrb[0].mxu0
    %v4586 = vpop.f32.mrb[0].mxu0
    %v4587 = vadd.f32 %v4391, %v4586
    %v4588 = vpop.f32.mrb[0].mxu0
    %4589 = vmatprep.mubr.bf16.mxu0 0
    %4590 = vmatmul.mubr.bf16.gmra.mrb[0].mxu0 %v4428
    %v4591 = vpop.f32.mrb[0].mxu0
    %v4592 = vadd.f32 %v4391, %v4591
    %v4593 = vpop.f32.mrb[0].mxu0
    %v4594 = vpop.f32.mrb[0].mxu0
    %v4595 = vadd.f32 %v4391, %v4594
    %v4596 = vpop.f32.mrb[0].mxu0
    %4597 = vmatprep.mubr.bf16.mxu0 0
    %4598 = vmatmul.mubr.bf16.gmra.mrb[0].mxu0 %v4431
    %v4599 = vpop.f32.mrb[0].mxu0
    %v4600 = vadd.f32 %v4391, %v4599
    %v4601 = vpop.f32.mrb[0].mxu0
    %v4602 = vpop.f32.mrb[0].mxu0
    %v4603 = vadd.f32 %v4391, %v4602
    %v4604 = vpop.f32.mrb[0].mxu0
    %4605 = vmatprep.mubr.bf16.mxu0 0
    %4606 = vmatmul.mubr.bf16.gmra.mrb[0].mxu0 %v4434
    %v4607 = vpop.f32.mrb[0].mxu0
    %v4608 = vadd.f32 %v4391, %v4607
    %v4609 = vpop.f32.mrb[0].mxu0
    %v4610 = vpop.f32.mrb[0].mxu0
    %v4611 = vadd.f32 %v4391, %v4610
    %v4612 = vpop.f32.mrb[0].mxu0
    %4613 = vmatprep.mubr.bf16.mxu0 0
    %4614 = vmatmul.mubr.bf16.gmra.mrb[0].mxu0 %v4437
    %v4615 = vpop.f32.mrb[0].mxu0
    %v4616 = vadd.f32 %v4391, %v4615
    %v4617 = vpop.f32.mrb[0].mxu0
    %v4618 = vpop.f32.mrb[0].mxu0
    %v4619 = vadd.f32 %v4391, %v4618
    %v4620 = vpop.f32.mrb[0].mxu0
    %4621 = vmatprep.mubr.bf16.mxu0 0
    %4622 = vmatmul.mubr.bf16.gmra.mrb[0].mxu0 %v4440
    %v4623 = vpop.f32.mrb[0].mxu0
    %v4624 = vadd.f32 %v4391, %v4623
    %v4625 = vpop.f32.mrb[0].mxu0
    %v4626 = vpop.f32.mrb[0].mxu0
    %v4627 = vadd.f32 %v4391, %v4626
    %v4628 = vpop.f32.mrb[0].mxu0
    %4629 = vmatprep.mubr.bf16.mxu0 0
    %4630 = vmatmul.mubr.bf16.gmra.mrb[0].mxu0 %v4443
    %v4631 = vpop.f32.mrb[0].mxu0
    %v4632 = vadd.f32 %v4391, %v4631
    %v4633 = vpop.f32.mrb[0].mxu0
    %v4634 = vpop.f32.mrb[0].mxu0
    %v4635 = vadd.f32 %v4391, %v4634
    %v4636 = vpop.f32.mrb[0].mxu0
    %4637 = vmatprep.mubr.bf16.mxu0 0
    %4638 = vmatmul.mubr.bf16.gmra.mrb[0].mxu0 %v4446
    %v4639 = vpop.f32.mrb[0].mxu0
    %v4640 = vadd.f32 %v4391, %v4639
    %v4641 = vpop.f32.mrb[0].mxu0
    %v4642 = vpop.f32.mrb[0].mxu0
    %v4643 = vadd.f32 %v4391, %v4642
    %v4644 = vpop.f32.mrb[0].mxu0
    %4645 = vmatprep.mubr.bf16.mxu0 0
    %4646 = vmatmul.mubr.bf16.gmra.mrb[0].mxu0 %v4449
    %v4647 = vpop.f32.mrb[0].mxu0
    %v4648 = vadd.f32 %v4391, %v4647
    %v4649 = vpop.f32.mrb[0].mxu0
    %v4650 = vpop.f32.mrb[0].mxu0
    %v4651 = vadd.f32 %v4391, %v4650
    %v4652 = vpop.f32.mrb[0].mxu0
    %4653 = vmatprep.mubr.bf16.mxu0 0
    %4654 = vmatmul.mubr.bf16.gmra.mrb[0].mxu0 %v4452
    %v4655 = vpop.f32.mrb[0].mxu0
    %v4656 = vadd.f32 %v4391, %v4655
    %v4657 = vpop.f32.mrb[0].mxu0
    %v4658 = vpop.f32.mrb[0].mxu0
    %v4659 = vadd.f32 %v4391, %v4658
    %v4660 = vpop.f32.mrb[0].mxu0
    %4661 = vmatprep.mubr.bf16.mxu0 0
    %4662 = vmatmul.mubr.bf16.gmra.mrb[0].mxu0 %v4455
    %v4663 = vpop.f32.mrb[0].mxu0
    %v4664 = vadd.f32 %v4391, %v4663
    %v4665 = vpop.f32.mrb[0].mxu0
    %v4666 = vpop.f32.mrb[0].mxu0
    %v4667 = vadd.f32 %v4391, %v4666
    %v4668 = vpop.f32.mrb[0].mxu0
    %4669 = vmatprep.mubr.bf16.mxu0 0
    %4670 = vmatmul.mubr.bf16.gmra.mrb[0].mxu0 %v4458
    %v4671 = vpop.f32.mrb[0].mxu0
    %v4672 = vadd.f32 %v4391, %v4671
    %v4673 = vpop.f32.mrb[0].mxu0
    %v4674 = vpop.f32.mrb[0].mxu0
    %v4675 = vadd.f32 %v4391, %v4674
    %v4676 = vpop.f32.mrb[0].mxu0
    %4677 = vmatprep.mubr.bf16.mxu0 0
    %4678 = vmatmul.mubr.bf16.gmra.mrb[0].mxu0 %v4461
    %v4679 = vpop.f32.mrb[0].mxu0
    %v4680 = vadd.f32 %v4391, %v4679
    %v4681 = vpop.f32.mrb[0].mxu0
    %v4682 = vpop.f32.mrb[0].mxu0
    %v4683 = vadd.f32 %v4391, %v4682
    %v4684 = vpop.f32.mrb[0].mxu0
    %4685 = vmatprep.mubr.bf16.mxu0 0
    %4686 = vmatmul.mubr.bf16.gmra.mrb[0].mxu0 %v4464
    %v4687 = vpop.f32.mrb[0].mxu0
    %v4688 = vadd.f32 %v4391, %v4687
    %v4689 = vpop.f32.mrb[0].mxu0
    %v4690 = vpop.f32.mrb[0].mxu0
    %v4691 = vadd.f32 %v4391, %v4690
    %v4692 = vpop.f32.mrb[0].mxu0
    %4693 = vmatprep.mubr.bf16.mxu0 0
    %4694 = vmatmul.mubr.bf16.gmra.mrb[0].mxu0 %v4467
    %v4695 = vpop.f32.mrb[0].mxu0
    %v4696 = vadd.f32 %v4391, %v4695
    %v4697 = vpop.f32.mrb[0].mxu0
    %v4698 = vpop.f32.mrb[0].mxu0
    %v4699 = vadd.f32 %v4391, %v4698
    %v4700 = vpop.f32.mrb[0].mxu0
    %4701 = vmatprep.mubr.bf16.mxu0 0
    %4702 = vmatmul.mubr.bf16.gmra.mrb[0].mxu0 %v4470
    %v4703 = vpop.f32.mrb[0].mxu0
    %v4704 = vadd.f32 %v4391, %v4703
    %v4705 = vpop.f32.mrb[0].mxu0
    %v4706 = vpop.f32.mrb[0].mxu0
    %v4707 = vadd.f32 %v4391, %v4706
    %v4708 = vpop.f32.mrb[0].mxu0
    %4709 = vmatprep.mubr.bf16.mxu0 0
    %4710 = vmatmul.mubr.bf16.gmra.mrb[0].mxu0 %v4473
    %v4711 = vpop.f32.mrb[0].mxu0
    %v4712 = vadd.f32 %v4391, %v4711
    %v4713 = vpop.f32.mrb[0].mxu0
    %v4714 = vpop.f32.mrb[0].mxu0
    %v4715 = vadd.f32 %v4391, %v4714
    %v4716 = vpop.f32.mrb[0].mxu0
    %4717 = vmatprep.mubr.bf16.mxu0 0
    %4718 = vmatmul.mubr.bf16.gmra.mrb[0].mxu0 %v4476
    %v4719 = vpop.f32.mrb[0].mxu0
    %v4720 = vadd.f32 %v4391, %v4719
    %v4721 = vpop.f32.mrb[0].mxu0
    %v4722 = vpop.f32.mrb[0].mxu0
    %v4723 = vadd.f32 %v4391, %v4722
    %v4724 = vpop.f32.mrb[0].mxu0
    %4725 = vmatprep.mubr.bf16.mxu0 0
    %4726 = vmatmul.mubr.bf16.gmra.mrb[0].mxu0 %v4479
    %v4727 = vpop.f32.mrb[0].mxu0
    %v4728 = vadd.f32 %v4391, %v4727
    %v4729 = vpop.f32.mrb[0].mxu0
    %v4730 = vpop.f32.mrb[0].mxu0
    %v4731 = vadd.f32 %v4391, %v4730
    %v4732 = vpop.f32.mrb[0].mxu0
    %4733 = vmatprep.mubr.bf16.mxu0 0
    %4734 = vmatmul.mubr.bf16.gmra.mrb[0].mxu0 %v4482
    %v4735 = vpop.f32.mrb[0].mxu0
    %v4736 = vadd.f32 %v4391, %v4735
    %v4737 = vpop.f32.mrb[0].mxu0
    %v4738 = vpop.f32.mrb[0].mxu0
    %v4739 = vadd.f32 %v4391, %v4738
    %v4740 = vpop.f32.mrb[0].mxu0
    %4741 = vmatprep.mubr.bf16.mxu0 0
    %4742 = vmatmul.mubr.bf16.gmra.mrb[0].mxu0 %v4485
    %v4743 = vpop.f32.mrb[0].mxu0
    %v4744 = vadd.f32 %v4391, %v4743
    %v4745 = vpop.f32.mrb[0].mxu0
    %v4746 = vpop.f32.mrb[0].mxu0
    %v4747 = vadd.f32 %v4391, %v4746
    %v4748 = vpop.f32.mrb[0].mxu0
    %4749 = vmatprep.mubr.bf16.mxu0 0
    %4750 = vmatmul.mubr.bf16.gmra.mrb[0].mxu0 %v4488
    %v4751 = vpop.f32.mrb[0].mxu0
    %v4752 = vadd.f32 %v4391, %v4751
    %v4753 = vpop.f32.mrb[0].mxu0
    %v4754 = vpop.f32.mrb[0].mxu0
    %v4755 = vadd.f32 %v4391, %v4754
    %v4756 = vpop.f32.mrb[0].mxu0
    %4757 = vmatprep.mubr.bf16.mxu0 0
    %4758 = vmatmul.mubr.bf16.gmra.mrb[0].mxu0 %v4491
    %v4759 = vpop.f32.mrb[0].mxu0
    %v4760 = vadd.f32 %v4391, %v4759
    %v4761 = vpop.f32.mrb[0].mxu0
    %v4762 = vpop.f32.mrb[0].mxu0
    %v4763 = vadd.f32 %v4391, %v4762
    %v4764 = vpop.f32.mrb[0].mxu0
    %4765 = vmatprep.mubr.bf16.mxu0 0
    %4766 = vmatmul.mubr.bf16.gmra.mrb[0].mxu0 %v4494
    %v4767 = vpop.f32.mrb[0].mxu0
    %v4768 = vadd.f32 %v4391, %v4767
    %v4769 = vpop.f32.mrb[0].mxu0
    %v4770 = vpop.f32.mrb[0].mxu0
    %v4771 = vadd.f32 %v4391, %v4770
    %v4772 = vpop.f32.mrb[0].mxu0
    %4773 = vmatprep.mubr.bf16.mxu0 0
    %4774 = vmatmul.mubr.bf16.gmra.mrb[0].mxu0 %v4497
    %v4775 = vpop.f32.mrb[0].mxu0
    %v4776 = vadd.f32 %v4391, %v4775
    %v4777 = vpop.f32.mrb[0].mxu0
    %v4778 = vpop.f32.mrb[0].mxu0
    %v4779 = vadd.f32 %v4391, %v4778
    %v4780 = vpop.f32.mrb[0].mxu0
    %4781 = vmatprep.mubr.bf16.mxu0 0
    %4782 = vmatmul.mubr.bf16.gmra.mrb[0].mxu0 %v4500
    %v4783 = vpop.f32.mrb[0].mxu0
    %v4784 = vadd.f32 %v4391, %v4783
    %v4785 = vpop.f32.mrb[0].mxu0
    %v4786 = vpop.f32.mrb[0].mxu0
    %v4787 = vadd.f32 %v4391, %v4786
    %v4788 = vpop.f32.mrb[0].mxu0
    %4789 = vmatprep.mubr.bf16.mxu0 0
    %4790 = vmatmul.mubr.bf16.gmra.mrb[0].mxu0 %v4503
    %v4791 = vpop.f32.mrb[0].mxu0
    %v4792 = vadd.f32 %v4391, %v4791
    %v4793 = vpop.f32.mrb[0].mxu0
    %v4794 = vpop.f32.mrb[0].mxu0
    %v4795 = vadd.f32 %v4391, %v4794
    %v4796 = vpop.f32.mrb[0].mxu0
    %4797 = vdwg.mxu0
    %v4798 = vmax.f32 %v4544, 0.0
    %v4799 = vmax.f32 %v4547, 0.0
    %v4800 = vmax.f32 %v4552, 0.0
    %v4801 = vmax.f32 %v4555, 0.0
    %v4802 = vmax.f32 %v4560, 0.0
    %v4803 = vmax.f32 %v4563, 0.0
    %v4804 = vmax.f32 %v4568, 0.0
    %v4805 = vmax.f32 %v4571, 0.0
    %v4806 = vmax.f32 %v4576, 0.0
    %v4807 = vmax.f32 %v4579, 0.0
    %v4808 = vmax.f32 %v4584, 0.0
    %v4809 = vmax.f32 %v4587, 0.0
    %v4810 = vmax.f32 %v4592, 0.0
    %v4811 = vmax.f32 %v4595, 0.0
    %v4812 = vmax.f32 %v4600, 0.0
    %v4813 = vmax.f32 %v4603, 0.0
    %v4814 = vmax.f32 %v4608, 0.0
    %v4815 = vmax.f32 %v4611, 0.0
    %v4816 = vmax.f32 %v4616, 0.0
    %v4817 = vmax.f32 %v4619, 0.0
    %v4818 = vmax.f32 %v4624, 0.0
    %v4819 = vmax.f32 %v4627, 0.0
    %v4820 = vmax.f32 %v4632, 0.0
    %v4821 = vmax.f32 %v4635, 0.0
    %v4822 = vmax.f32 %v4640, 0.0
    %v4823 = vmax.f32 %v4643, 0.0
    %v4824 = vmax.f32 %v4648, 0.0
    %v4825 = vmax.f32 %v4651, 0.0
    %v4826 = vmax.f32 %v4656, 0.0
    %v4827 = vmax.f32 %v4659, 0.0
    %v4828 = vmax.f32 %v4664, 0.0
    %v4829 = vmax.f32 %v4667, 0.0
    %v4830 = vmax.f32 %v4672, 0.0
    %v4831 = vmax.f32 %v4675, 0.0
    %v4832 = vmax.f32 %v4680, 0.0
    %v4833 = vmax.f32 %v4683, 0.0
    %v4834 = vmax.f32 %v4688, 0.0
    %v4835 = vmax.f32 %v4691, 0.0
    %v4836 = vmax.f32 %v4696, 0.0
    %v4837 = vmax.f32 %v4699, 0.0
    %v4838 = vmax.f32 %v4704, 0.0
    %v4839 = vmax.f32 %v4707, 0.0
    %v4840 = vmax.f32 %v4712, 0.0
    %v4841 = vmax.f32 %v4715, 0.0
    %v4842 = vmax.f32 %v4720, 0.0
    %v4843 = vmax.f32 %v4723, 0.0
    %v4844 = vmax.f32 %v4728, 0.0
    %v4845 = vmax.f32 %v4731, 0.0
    %v4846 = vmax.f32 %v4736, 0.0
    %v4847 = vmax.f32 %v4739, 0.0
    %v4848 = vmax.f32 %v4744, 0.0
    %v4849 = vmax.f32 %v4747, 0.0
    %v4850 = vmax.f32 %v4752, 0.0
    %v4851 = vmax.f32 %v4755, 0.0
    %v4852 = vmax.f32 %v4760, 0.0
    %v4853 = vmax.f32 %v4763, 0.0
    %v4854 = vmax.f32 %v4768, 0.0
    %v4855 = vmax.f32 %v4771, 0.0
    %v4856 = vmax.f32 %v4776, 0.0
    %v4857 = vmax.f32 %v4779, 0.0
    %v4858 = vmax.f32 %v4784, 0.0
    %v4859 = vmax.f32 %v4787, 0.0
    %v4860 = vmax.f32 %v4792, 0.0
    %v4861 = vmax.f32 %v4795, 0.0
    %v4862 = vpack.c.bf16 %v4799, %v4798
    %v4863 = vpack.c.bf16 %v4801, %v4800
    %v4864 = vpack.c.bf16 %v4803, %v4802
    %v4865 = vpack.c.bf16 %v4805, %v4804
    %v4866 = vpack.c.bf16 %v4807, %v4806
    %v4867 = vpack.c.bf16 %v4809, %v4808
    %v4868 = vpack.c.bf16 %v4811, %v4810
    %v4869 = vpack.c.bf16 %v4813, %v4812
    %v4870 = vpack.c.bf16 %v4815, %v4814
    %v4871 = vpack.c.bf16 %v4817, %v4816
    %v4872 = vpack.c.bf16 %v4819, %v4818
    %v4873 = vpack.c.bf16 %v4821, %v4820
    %v4874 = vpack.c.bf16 %v4823, %v4822
    %v4875 = vpack.c.bf16 %v4825, %v4824
    %v4876 = vpack.c.bf16 %v4827, %v4826
    %v4877 = vpack.c.bf16 %v4829, %v4828
    %v4878 = vpack.c.bf16 %v4831, %v4830
    %v4879 = vpack.c.bf16 %v4833, %v4832
    %v4880 = vpack.c.bf16 %v4835, %v4834
    %v4881 = vpack.c.bf16 %v4837, %v4836
    %v4882 = vpack.c.bf16 %v4839, %v4838
    %v4883 = vpack.c.bf16 %v4841, %v4840
    %v4884 = vpack.c.bf16 %v4843, %v4842
    %v4885 = vpack.c.bf16 %v4845, %v4844
    %v4886 = vpack.c.bf16 %v4847, %v4846
    %v4887 = vpack.c.bf16 %v4849, %v4848
    %v4888 = vpack.c.bf16 %v4851, %v4850
    %v4889 = vpack.c.bf16 %v4853, %v4852
    %v4890 = vpack.c.bf16 %v4855, %v4854
    %v4891 = vpack.c.bf16 %v4857, %v4856
    %v4892 = vpack.c.bf16 %v4859, %v4858
    %v4893 = vpack.c.bf16 %v4861, %v4860
    %v4894 = vld [vmem:[%s3] sm:$0x3]
    %v4895 = vld [vmem:[%s6] sm:$0x1]
    %v4897 = vlaneseq
    %v4898 = vshrl.u32 %v4897, 7
    %v4899 = vsub.s32 0, %v4898
    %v4900 = vrot.slane %v4895, %v4899
    %v4903 = vsel %vm603, %v4862, 0
    %v4906 = vsel %vm603, %v4863, 0
    %v4909 = vsel %vm603, %v4864, 0
    %v4912 = vsel %vm603, %v4865, 0
    %v4915 = vsel %vm603, %v4866, 0
    %v4918 = vsel %vm603, %v4867, 0
    %v4921 = vsel %vm603, %v4868, 0
    %v4924 = vsel %vm603, %v4869, 0
    %v4927 = vsel %vm603, %v4870, 0
    %v4930 = vsel %vm603, %v4871, 0
    %v4933 = vsel %vm603, %v4872, 0
    %v4936 = vsel %vm603, %v4873, 0
    %v4939 = vsel %vm603, %v4874, 0
    %v4942 = vsel %vm603, %v4875, 0
    %v4945 = vsel %vm603, %v4876, 0
    %v4948 = vsel %vm603, %v4877, 0
    %v4951 = vsel %vm603, %v4878, 0
    %v4954 = vsel %vm603, %v4879, 0
    %v4957 = vsel %vm603, %v4880, 0
    %v4960 = vsel %vm603, %v4881, 0
    %v4963 = vsel %vm603, %v4882, 0
    %v4966 = vsel %vm603, %v4883, 0
    %v4969 = vsel %vm603, %v4884, 0
    %v4972 = vsel %vm603, %v4885, 0
    %v4975 = vsel %vm603, %v4886, 0
    %v4978 = vsel %vm603, %v4887, 0
    %v4981 = vsel %vm603, %v4888, 0
    %v4984 = vsel %vm603, %v4889, 0
    %v4987 = vsel %vm603, %v4890, 0
    %v4990 = vsel %vm603, %v4891, 0
    %v4993 = vsel %vm603, %v4892, 0
    %v4996 = vsel %vm603, %v4893, 0
    %v4999 = vsel %vm4505, %v4894, 0
    %5001 = vmatprep.subr.bf16.mxu0 0
    %5002 = vmatpush1.bf16.msra.mxu0 %v4999
    %5003 = vmatprep.subr.bf16.mxu0 0
    %5004 = vmatpush1.bf16.msra.mxu0 0
    %5005 = vmatprep.subr.bf16.mxu0 0
    %5006 = vmatpush1.bf16.msra.mxu0 0
    %5007 = vmatprep.subr.bf16.mxu0 0
    %5008 = vmatpush1.bf16.msra.mxu0 0
    %5009 = vmatprep.subr.bf16.mxu0 0
    %5010 = vmatpush1.bf16.msra.mxu0 0
    %5011 = vmatprep.subr.bf16.mxu0 0
    %5012 = vmatpush1.bf16.msra.mxu0 0
    %5013 = vmatprep.subr.bf16.mxu0 0
    %5014 = vmatpush1.bf16.msra.mxu0 0
    %5015 = vmatprep.subr.bf16.mxu0 0
    %5016 = vmatpush1.bf16.msra.mxu0 0
    %5017 = vmatprep.subr.bf16.mxu0 0
    %5018 = vmatpush1.bf16.msra.mxu0 0
    %5019 = vmatprep.subr.bf16.mxu0 0
    %5020 = vmatpush1.bf16.msra.mxu0 0
    %5021 = vmatprep.subr.bf16.mxu0 0
    %5022 = vmatpush1.bf16.msra.mxu0 0
    %5023 = vmatprep.subr.bf16.mxu0 0
    %5024 = vmatpush1.bf16.msra.mxu0 0
    %5025 = vmatprep.subr.bf16.mxu0 0
    %5026 = vmatpush1.bf16.msra.mxu0 0
    %5027 = vmatprep.subr.bf16.mxu0 0
    %5028 = vmatpush1.bf16.msra.mxu0 0
    %5029 = vmatprep.subr.bf16.mxu0 0
    %5030 = vmatpush1.bf16.msra.mxu0 0
    %5031 = vmatprep.subr.bf16.mxu0 0
    %5032 = vmatpush1.bf16.msra.mxu0 0
    %5033 = vmatprep.mubr.bf16.mxu0 0
    %5034 = vmatmul.mubr.bf16.gmra.mrb[0].mxu0 %v4903
    %v5035 = vpop.f32.mrb[0].mxu0
    %v5036 = vadd.f32 %v4900, %v5035
    %v5037 = vpop.f32.mrb[0].mxu0
    %v5038 = vpop.f32.mrb[0].mxu0
    %v5039 = vadd.f32 %v4900, %v5038
    %v5040 = vpop.f32.mrb[0].mxu0
    %5041 = vmatprep.mubr.bf16.mxu0 0
    %5042 = vmatmul.mubr.bf16.gmra.mrb[0].mxu0 %v4906
    %v5043 = vpop.f32.mrb[0].mxu0
    %v5044 = vadd.f32 %v4900, %v5043
    %v5045 = vpop.f32.mrb[0].mxu0
    %v5046 = vpop.f32.mrb[0].mxu0
    %v5047 = vadd.f32 %v4900, %v5046
    %v5048 = vpop.f32.mrb[0].mxu0
    %5049 = vmatprep.mubr.bf16.mxu0 0
    %5050 = vmatmul.mubr.bf16.gmra.mrb[0].mxu0 %v4909
    %v5051 = vpop.f32.mrb[0].mxu0
    %v5052 = vadd.f32 %v4900, %v5051
    %v5053 = vpop.f32.mrb[0].mxu0
    %v5054 = vpop.f32.mrb[0].mxu0
    %v5055 = vadd.f32 %v4900, %v5054
    %v5056 = vpop.f32.mrb[0].mxu0
    %5057 = vmatprep.mubr.bf16.mxu0 0
    %5058 = vmatmul.mubr.bf16.gmra.mrb[0].mxu0 %v4912
    %v5059 = vpop.f32.mrb[0].mxu0
    %v5060 = vadd.f32 %v4900, %v5059
    %v5061 = vpop.f32.mrb[0].mxu0
    %v5062 = vpop.f32.mrb[0].mxu0
    %v5063 = vadd.f32 %v4900, %v5062
    %v5064 = vpop.f32.mrb[0].mxu0
    %5065 = vmatprep.mubr.bf16.mxu0 0
    %5066 = vmatmul.mubr.bf16.gmra.mrb[0].mxu0 %v4915
    %v5067 = vpop.f32.mrb[0].mxu0
    %v5068 = vadd.f32 %v4900, %v5067
    %v5069 = vpop.f32.mrb[0].mxu0
    %v5070 = vpop.f32.mrb[0].mxu0
    %v5071 = vadd.f32 %v4900, %v5070
    %v5072 = vpop.f32.mrb[0].mxu0
    %5073 = vmatprep.mubr.bf16.mxu0 0
    %5074 = vmatmul.mubr.bf16.gmra.mrb[0].mxu0 %v4918
    %v5075 = vpop.f32.mrb[0].mxu0
    %v5076 = vadd.f32 %v4900, %v5075
    %v5077 = vpop.f32.mrb[0].mxu0
    %v5078 = vpop.f32.mrb[0].mxu0
    %v5079 = vadd.f32 %v4900, %v5078
    %v5080 = vpop.f32.mrb[0].mxu0
    %5081 = vmatprep.mubr.bf16.mxu0 0
    %5082 = vmatmul.mubr.bf16.gmra.mrb[0].mxu0 %v4921
    %v5083 = vpop.f32.mrb[0].mxu0
    %v5084 = vadd.f32 %v4900, %v5083
    %v5085 = vpop.f32.mrb[0].mxu0
    %v5086 = vpop.f32.mrb[0].mxu0
    %v5087 = vadd.f32 %v4900, %v5086
    %v5088 = vpop.f32.mrb[0].mxu0
    %5089 = vmatprep.mubr.bf16.mxu0 0
    %5090 = vmatmul.mubr.bf16.gmra.mrb[0].mxu0 %v4924
    %v5091 = vpop.f32.mrb[0].mxu0
    %v5092 = vadd.f32 %v4900, %v5091
    %v5093 = vpop.f32.mrb[0].mxu0
    %v5094 = vpop.f32.mrb[0].mxu0
    %v5095 = vadd.f32 %v4900, %v5094
    %v5096 = vpop.f32.mrb[0].mxu0
    %5097 = vmatprep.mubr.bf16.mxu0 0
    %5098 = vmatmul.mubr.bf16.gmra.mrb[0].mxu0 %v4927
    %v5099 = vpop.f32.mrb[0].mxu0
    %v5100 = vadd.f32 %v4900, %v5099
    %v5101 = vpop.f32.mrb[0].mxu0
    %v5102 = vpop.f32.mrb[0].mxu0
    %v5103 = vadd.f32 %v4900, %v5102
    %v5104 = vpop.f32.mrb[0].mxu0
    %5105 = vmatprep.mubr.bf16.mxu0 0
    %5106 = vmatmul.mubr.bf16.gmra.mrb[0].mxu0 %v4930
    %v5107 = vpop.f32.mrb[0].mxu0
    %v5108 = vadd.f32 %v4900, %v5107
    %v5109 = vpop.f32.mrb[0].mxu0
    %v5110 = vpop.f32.mrb[0].mxu0
    %v5111 = vadd.f32 %v4900, %v5110
    %v5112 = vpop.f32.mrb[0].mxu0
    %5113 = vmatprep.mubr.bf16.mxu0 0
    %5114 = vmatmul.mubr.bf16.gmra.mrb[0].mxu0 %v4933
    %v5115 = vpop.f32.mrb[0].mxu0
    %v5116 = vadd.f32 %v4900, %v5115
    %v5117 = vpop.f32.mrb[0].mxu0
    %v5118 = vpop.f32.mrb[0].mxu0
    %v5119 = vadd.f32 %v4900, %v5118
    %v5120 = vpop.f32.mrb[0].mxu0
    %5121 = vmatprep.mubr.bf16.mxu0 0
    %5122 = vmatmul.mubr.bf16.gmra.mrb[0].mxu0 %v4936
    %v5123 = vpop.f32.mrb[0].mxu0
    %v5124 = vadd.f32 %v4900, %v5123
    %v5125 = vpop.f32.mrb[0].mxu0
    %v5126 = vpop.f32.mrb[0].mxu0
    %v5127 = vadd.f32 %v4900, %v5126
    %v5128 = vpop.f32.mrb[0].mxu0
    %5129 = vmatprep.mubr.bf16.mxu0 0
    %5130 = vmatmul.mubr.bf16.gmra.mrb[0].mxu0 %v4939
    %v5131 = vpop.f32.mrb[0].mxu0
    %v5132 = vadd.f32 %v4900, %v5131
    %v5133 = vpop.f32.mrb[0].mxu0
    %v5134 = vpop.f32.mrb[0].mxu0
    %v5135 = vadd.f32 %v4900, %v5134
    %v5136 = vpop.f32.mrb[0].mxu0
    %5137 = vmatprep.mubr.bf16.mxu0 0
    %5138 = vmatmul.mubr.bf16.gmra.mrb[0].mxu0 %v4942
    %v5139 = vpop.f32.mrb[0].mxu0
    %v5140 = vadd.f32 %v4900, %v5139
    %v5141 = vpop.f32.mrb[0].mxu0
    %v5142 = vpop.f32.mrb[0].mxu0
    %v5143 = vadd.f32 %v4900, %v5142
    %v5144 = vpop.f32.mrb[0].mxu0
    %5145 = vmatprep.mubr.bf16.mxu0 0
    %5146 = vmatmul.mubr.bf16.gmra.mrb[0].mxu0 %v4945
    %v5147 = vpop.f32.mrb[0].mxu0
    %v5148 = vadd.f32 %v4900, %v5147
    %v5149 = vpop.f32.mrb[0].mxu0
    %v5150 = vpop.f32.mrb[0].mxu0
    %v5151 = vadd.f32 %v4900, %v5150
    %v5152 = vpop.f32.mrb[0].mxu0
    %5153 = vmatprep.mubr.bf16.mxu0 0
    %5154 = vmatmul.mubr.bf16.gmra.mrb[0].mxu0 %v4948
    %v5155 = vpop.f32.mrb[0].mxu0
    %v5156 = vadd.f32 %v4900, %v5155
    %v5157 = vpop.f32.mrb[0].mxu0
    %v5158 = vpop.f32.mrb[0].mxu0
    %v5159 = vadd.f32 %v4900, %v5158
    %v5160 = vpop.f32.mrb[0].mxu0
    %5161 = vmatprep.mubr.bf16.mxu0 0
    %5162 = vmatmul.mubr.bf16.gmra.mrb[0].mxu0 %v4951
    %v5163 = vpop.f32.mrb[0].mxu0
    %v5164 = vadd.f32 %v4900, %v5163
    %v5165 = vpop.f32.mrb[0].mxu0
    %v5166 = vpop.f32.mrb[0].mxu0
    %v5167 = vadd.f32 %v4900, %v5166
    %v5168 = vpop.f32.mrb[0].mxu0
    %5169 = vmatprep.mubr.bf16.mxu0 0
    %5170 = vmatmul.mubr.bf16.gmra.mrb[0].mxu0 %v4954
    %v5171 = vpop.f32.mrb[0].mxu0
    %v5172 = vadd.f32 %v4900, %v5171
    %v5173 = vpop.f32.mrb[0].mxu0
    %v5174 = vpop.f32.mrb[0].mxu0
    %v5175 = vadd.f32 %v4900, %v5174
    %v5176 = vpop.f32.mrb[0].mxu0
    %5177 = vmatprep.mubr.bf16.mxu0 0
    %5178 = vmatmul.mubr.bf16.gmra.mrb[0].mxu0 %v4957
    %v5179 = vpop.f32.mrb[0].mxu0
    %v5180 = vadd.f32 %v4900, %v5179
    %v5181 = vpop.f32.mrb[0].mxu0
    %v5182 = vpop.f32.mrb[0].mxu0
    %v5183 = vadd.f32 %v4900, %v5182
    %v5184 = vpop.f32.mrb[0].mxu0
    %5185 = vmatprep.mubr.bf16.mxu0 0
    %5186 = vmatmul.mubr.bf16.gmra.mrb[0].mxu0 %v4960
    %v5187 = vpop.f32.mrb[0].mxu0
    %v5188 = vadd.f32 %v4900, %v5187
    %v5189 = vpop.f32.mrb[0].mxu0
    %v5190 = vpop.f32.mrb[0].mxu0
    %v5191 = vadd.f32 %v4900, %v5190
    %v5192 = vpop.f32.mrb[0].mxu0
    %5193 = vmatprep.mubr.bf16.mxu0 0
    %5194 = vmatmul.mubr.bf16.gmra.mrb[0].mxu0 %v4963
    %v5195 = vpop.f32.mrb[0].mxu0
    %v5196 = vadd.f32 %v4900, %v5195
    %v5197 = vpop.f32.mrb[0].mxu0
    %v5198 = vpop.f32.mrb[0].mxu0
    %v5199 = vadd.f32 %v4900, %v5198
    %v5200 = vpop.f32.mrb[0].mxu0
    %5201 = vmatprep.mubr.bf16.mxu0 0
    %5202 = vmatmul.mubr.bf16.gmra.mrb[0].mxu0 %v4966
    %v5203 = vpop.f32.mrb[0].mxu0
    %v5204 = vadd.f32 %v4900, %v5203
    %v5205 = vpop.f32.mrb[0].mxu0
    %v5206 = vpop.f32.mrb[0].mxu0
    %v5207 = vadd.f32 %v4900, %v5206
    %v5208 = vpop.f32.mrb[0].mxu0
    %5209 = vmatprep.mubr.bf16.mxu0 0
    %5210 = vmatmul.mubr.bf16.gmra.mrb[0].mxu0 %v4969
    %v5211 = vpop.f32.mrb[0].mxu0
    %v5212 = vadd.f32 %v4900, %v5211
    %v5213 = vpop.f32.mrb[0].mxu0
    %v5214 = vpop.f32.mrb[0].mxu0
    %v5215 = vadd.f32 %v4900, %v5214
    %v5216 = vpop.f32.mrb[0].mxu0
    %5217 = vmatprep.mubr.bf16.mxu0 0
    %5218 = vmatmul.mubr.bf16.gmra.mrb[0].mxu0 %v4972
    %v5219 = vpop.f32.mrb[0].mxu0
    %v5220 = vadd.f32 %v4900, %v5219
    %v5221 = vpop.f32.mrb[0].mxu0
    %v5222 = vpop.f32.mrb[0].mxu0
    %v5223 = vadd.f32 %v4900, %v5222
    %v5224 = vpop.f32.mrb[0].mxu0
    %5225 = vmatprep.mubr.bf16.mxu0 0
    %5226 = vmatmul.mubr.bf16.gmra.mrb[0].mxu0 %v4975
    %v5227 = vpop.f32.mrb[0].mxu0
    %v5228 = vadd.f32 %v4900, %v5227
    %v5229 = vpop.f32.mrb[0].mxu0
    %v5230 = vpop.f32.mrb[0].mxu0
    %v5231 = vadd.f32 %v4900, %v5230
    %v5232 = vpop.f32.mrb[0].mxu0
    %5233 = vmatprep.mubr.bf16.mxu0 0
    %5234 = vmatmul.mubr.bf16.gmra.mrb[0].mxu0 %v4978
    %v5235 = vpop.f32.mrb[0].mxu0
    %v5236 = vadd.f32 %v4900, %v5235
    %v5237 = vpop.f32.mrb[0].mxu0
    %v5238 = vpop.f32.mrb[0].mxu0
    %v5239 = vadd.f32 %v4900, %v5238
    %v5240 = vpop.f32.mrb[0].mxu0
    %5241 = vmatprep.mubr.bf16.mxu0 0
    %5242 = vmatmul.mubr.bf16.gmra.mrb[0].mxu0 %v4981
    %v5243 = vpop.f32.mrb[0].mxu0
    %v5244 = vadd.f32 %v4900, %v5243
    %v5245 = vpop.f32.mrb[0].mxu0
    %v5246 = vpop.f32.mrb[0].mxu0
    %v5247 = vadd.f32 %v4900, %v5246
    %v5248 = vpop.f32.mrb[0].mxu0
    %5249 = vmatprep.mubr.bf16.mxu0 0
    %5250 = vmatmul.mubr.bf16.gmra.mrb[0].mxu0 %v4984
    %v5251 = vpop.f32.mrb[0].mxu0
    %v5252 = vadd.f32 %v4900, %v5251
    %v5253 = vpop.f32.mrb[0].mxu0
    %v5254 = vpop.f32.mrb[0].mxu0
    %v5255 = vadd.f32 %v4900, %v5254
    %v5256 = vpop.f32.mrb[0].mxu0
    %5257 = vmatprep.mubr.bf16.mxu0 0
    %5258 = vmatmul.mubr.bf16.gmra.mrb[0].mxu0 %v4987
    %v5259 = vpop.f32.mrb[0].mxu0
    %v5260 = vadd.f32 %v4900, %v5259
    %v5261 = vpop.f32.mrb[0].mxu0
    %v5262 = vpop.f32.mrb[0].mxu0
    %v5263 = vadd.f32 %v4900, %v5262
    %v5264 = vpop.f32.mrb[0].mxu0
    %5265 = vmatprep.mubr.bf16.mxu0 0
    %5266 = vmatmul.mubr.bf16.gmra.mrb[0].mxu0 %v4990
    %v5267 = vpop.f32.mrb[0].mxu0
    %v5268 = vadd.f32 %v4900, %v5267
    %v5269 = vpop.f32.mrb[0].mxu0
    %v5270 = vpop.f32.mrb[0].mxu0
    %v5271 = vadd.f32 %v4900, %v5270
    %v5272 = vpop.f32.mrb[0].mxu0
    %5273 = vmatprep.mubr.bf16.mxu0 0
    %5274 = vmatmul.mubr.bf16.gmra.mrb[0].mxu0 %v4993
    %v5275 = vpop.f32.mrb[0].mxu0
    %v5276 = vadd.f32 %v4900, %v5275
    %v5277 = vpop.f32.mrb[0].mxu0
    %v5278 = vpop.f32.mrb[0].mxu0
    %v5279 = vadd.f32 %v4900, %v5278
    %v5280 = vpop.f32.mrb[0].mxu0
    %5281 = vmatprep.mubr.bf16.mxu0 0
    %5282 = vmatmul.mubr.bf16.gmra.mrb[0].mxu0 %v4996
    %v5283 = vpop.f32.mrb[0].mxu0
    %v5284 = vadd.f32 %v4900, %v5283
    %v5285 = vpop.f32.mrb[0].mxu0
    %v5286 = vpop.f32.mrb[0].mxu0
    %v5287 = vadd.f32 %v4900, %v5286
    %v5288 = vpop.f32.mrb[0].mxu0
    %5289 = vdwg.mxu0
    %v5290 = vadd.f32 %v5036, %v42
    %v5291 = vadd.f32 %v5039, %v43
    %v5292 = vadd.f32 %v5044, %v44
    %v5293 = vadd.f32 %v5047, %v45
    %v5294 = vadd.f32 %v5052, %v46
    %v5295 = vadd.f32 %v5055, %v47
    %v5296 = vadd.f32 %v5060, %v48
    %v5297 = vadd.f32 %v5063, %v49
    %v5298 = vadd.f32 %v5068, %v50
    %v5299 = vadd.f32 %v5071, %v51
    %v5300 = vadd.f32 %v5076, %v52
    %v5301 = vadd.f32 %v5079, %v53
    %v5302 = vadd.f32 %v5084, %v54
    %v5303 = vadd.f32 %v5087, %v55
    %v5304 = vadd.f32 %v5092, %v56
    %v5305 = vadd.f32 %v5095, %v57
    %v5306 = vadd.f32 %v5100, %v58
    %v5307 = vadd.f32 %v5103, %v59
    %v5308 = vadd.f32 %v5108, %v60
    %v5309 = vadd.f32 %v5111, %v61
    %v5310 = vadd.f32 %v5116, %v62
    %v5311 = vadd.f32 %v5119, %v63
    %v5312 = vadd.f32 %v5124, %v64
    %v5313 = vadd.f32 %v5127, %v65
    %v5314 = vadd.f32 %v5132, %v66
    %v5315 = vadd.f32 %v5135, %v67
    %v5316 = vadd.f32 %v5140, %v68
    %v5317 = vadd.f32 %v5143, %v69
    %v5318 = vadd.f32 %v5148, %v70
    %v5319 = vadd.f32 %v5151, %v71
    %v5320 = vadd.f32 %v5156, %v72
    %v5321 = vadd.f32 %v5159, %v73
    %v5322 = vadd.f32 %v5164, %v74
    %v5323 = vadd.f32 %v5167, %v75
    %v5324 = vadd.f32 %v5172, %v76
    %v5325 = vadd.f32 %v5175, %v77
    %v5326 = vadd.f32 %v5180, %v78
    %v5327 = vadd.f32 %v5183, %v79
    %v5328 = vadd.f32 %v5188, %v80
    %v5329 = vadd.f32 %v5191, %v81
    %v5330 = vadd.f32 %v5196, %v82
    %v5331 = vadd.f32 %v5199, %v83
    %v5332 = vadd.f32 %v5204, %v84
    %v5333 = vadd.f32 %v5207, %v85
    %v5334 = vadd.f32 %v5212, %v86
    %v5335 = vadd.f32 %v5215, %v87
    %v5336 = vadd.f32 %v5220, %v88
    %v5337 = vadd.f32 %v5223, %v89
    %v5338 = vadd.f32 %v5228, %v90
    %v5339 = vadd.f32 %v5231, %v91
    %v5340 = vadd.f32 %v5236, %v92
    %v5341 = vadd.f32 %v5239, %v93
    %v5342 = vadd.f32 %v5244, %v94
    %v5343 = vadd.f32 %v5247, %v95
    %v5344 = vadd.f32 %v5252, %v96
    %v5345 = vadd.f32 %v5255, %v97
    %v5346 = vadd.f32 %v5260, %v98
    %v5347 = vadd.f32 %v5263, %v99
    %v5348 = vadd.f32 %v5268, %v100
    %v5349 = vadd.f32 %v5271, %v101
    %v5350 = vadd.f32 %v5276, %v102
    %v5351 = vadd.f32 %v5279, %v103
    %v5352 = vadd.f32 %v5284, %v104
    %v5353 = vadd.f32 %v5287, %v105
    %v5354 = vmax.f32 %v5290, 0.0
    %v5355 = vmax.f32 %v5291, 0.0
    %v5356 = vmax.f32 %v5292, 0.0
    %v5357 = vmax.f32 %v5293, 0.0
    %v5358 = vmax.f32 %v5294, 0.0
    %v5359 = vmax.f32 %v5295, 0.0
    %v5360 = vmax.f32 %v5296, 0.0
    %v5361 = vmax.f32 %v5297, 0.0
    %v5362 = vmax.f32 %v5298, 0.0
    %v5363 = vmax.f32 %v5299, 0.0
    %v5364 = vmax.f32 %v5300, 0.0
    %v5365 = vmax.f32 %v5301, 0.0
    %v5366 = vmax.f32 %v5302, 0.0
    %v5367 = vmax.f32 %v5303, 0.0
    %v5368 = vmax.f32 %v5304, 0.0
    %v5369 = vmax.f32 %v5305, 0.0
    %v5370 = vmax.f32 %v5306, 0.0
    %v5371 = vmax.f32 %v5307, 0.0
    %v5372 = vmax.f32 %v5308, 0.0
    %v5373 = vmax.f32 %v5309, 0.0
    %v5374 = vmax.f32 %v5310, 0.0
    %v5375 = vmax.f32 %v5311, 0.0
    %v5376 = vmax.f32 %v5312, 0.0
    %v5377 = vmax.f32 %v5313, 0.0
    %v5378 = vmax.f32 %v5314, 0.0
    %v5379 = vmax.f32 %v5315, 0.0
    %v5380 = vmax.f32 %v5316, 0.0
    %v5381 = vmax.f32 %v5317, 0.0
    %v5382 = vmax.f32 %v5318, 0.0
    %v5383 = vmax.f32 %v5319, 0.0
    %v5384 = vmax.f32 %v5320, 0.0
    %v5385 = vmax.f32 %v5321, 0.0
    %v5386 = vmax.f32 %v5322, 0.0
    %v5387 = vmax.f32 %v5323, 0.0
    %v5388 = vmax.f32 %v5324, 0.0
    %v5389 = vmax.f32 %v5325, 0.0
    %v5390 = vmax.f32 %v5326, 0.0
    %v5391 = vmax.f32 %v5327, 0.0
    %v5392 = vmax.f32 %v5328, 0.0
    %v5393 = vmax.f32 %v5329, 0.0
    %v5394 = vmax.f32 %v5330, 0.0
    %v5395 = vmax.f32 %v5331, 0.0
    %v5396 = vmax.f32 %v5332, 0.0
    %v5397 = vmax.f32 %v5333, 0.0
    %v5398 = vmax.f32 %v5334, 0.0
    %v5399 = vmax.f32 %v5335, 0.0
    %v5400 = vmax.f32 %v5336, 0.0
    %v5401 = vmax.f32 %v5337, 0.0
    %v5402 = vmax.f32 %v5338, 0.0
    %v5403 = vmax.f32 %v5339, 0.0
    %v5404 = vmax.f32 %v5340, 0.0
    %v5405 = vmax.f32 %v5341, 0.0
    %v5406 = vmax.f32 %v5342, 0.0
    %v5407 = vmax.f32 %v5343, 0.0
    %v5408 = vmax.f32 %v5344, 0.0
    %v5409 = vmax.f32 %v5345, 0.0
    %v5410 = vmax.f32 %v5346, 0.0
    %v5411 = vmax.f32 %v5347, 0.0
    %v5412 = vmax.f32 %v5348, 0.0
    %v5413 = vmax.f32 %v5349, 0.0
    %v5414 = vmax.f32 %v5350, 0.0
    %v5415 = vmax.f32 %v5351, 0.0
    %v5416 = vmax.f32 %v5352, 0.0
    %v5417 = vmax.f32 %v5353, 0.0
    %5418 = vst.msk [vmem:[#allocation6] sm:$0xff] %vm153, %v5354
    %5419 = vst.msk [vmem:[#allocation6 + $0x8] sm:$0xff] %vm153, %v5355
    %5420 = vst.msk [vmem:[#allocation6 + $0x10] sm:$0xff] %vm153, %v5356
    %5421 = vst.msk [vmem:[#allocation6 + $0x18] sm:$0xff] %vm153, %v5357
    %5422 = vst.msk [vmem:[#allocation6 + $0x20] sm:$0xff] %vm153, %v5358
    %5423 = vst.msk [vmem:[#allocation6 + $0x28] sm:$0xff] %vm153, %v5359
    %5424 = vst.msk [vmem:[#allocation6 + $0x30] sm:$0xff] %vm153, %v5360
    %5425 = vst.msk [vmem:[#allocation6 + $0x38] sm:$0xff] %vm153, %v5361
    %5426 = vst.msk [vmem:[#allocation6 + $0x40] sm:$0xff] %vm153, %v5362
    %5427 = vst.msk [vmem:[#allocation6 + $0x48] sm:$0xff] %vm153, %v5363
    %5428 = vst.msk [vmem:[#allocation6 + $0x50] sm:$0xff] %vm153, %v5364
    %5429 = vst.msk [vmem:[#allocation6 + $0x58] sm:$0xff] %vm153, %v5365
    %5430 = vst.msk [vmem:[#allocation6 + $0x60] sm:$0xff] %vm153, %v5366
    %5431 = vst.msk [vmem:[#allocation6 + $0x68] sm:$0xff] %vm153, %v5367
    %5432 = vst.msk [vmem:[#allocation6 + $0x70] sm:$0xff] %vm153, %v5368
    %5433 = vst.msk [vmem:[#allocation6 + $0x78] sm:$0xff] %vm153, %v5369
    %5434 = vst.msk [vmem:[#allocation6 + $0x80] sm:$0xff] %vm153, %v5370
    %5435 = vst.msk [vmem:[#allocation6 + $0x88] sm:$0xff] %vm153, %v5371
    %5436 = vst.msk [vmem:[#allocation6 + $0x90] sm:$0xff] %vm153, %v5372
    %5437 = vst.msk [vmem:[#allocation6 + $0x98] sm:$0xff] %vm153, %v5373
    %5438 = vst.msk [vmem:[#allocation6 + $0xa0] sm:$0xff] %vm153, %v5374
    %5439 = vst.msk [vmem:[#allocation6 + $0xa8] sm:$0xff] %vm153, %v5375
    %5440 = vst.msk [vmem:[#allocation6 + $0xb0] sm:$0xff] %vm153, %v5376
    %5441 = vst.msk [vmem:[#allocation6 + $0xb8] sm:$0xff] %vm153, %v5377
    %5442 = vst.msk [vmem:[#allocation6 + $0xc0] sm:$0xff] %vm153, %v5378
    %5443 = vst.msk [vmem:[#allocation6 + $0xc8] sm:$0xff] %vm153, %v5379
    %5444 = vst.msk [vmem:[#allocation6 + $0xd0] sm:$0xff] %vm153, %v5380
    %5445 = vst.msk [vmem:[#allocation6 + $0xd8] sm:$0xff] %vm153, %v5381
    %5446 = vst.msk [vmem:[#allocation6 + $0xe0] sm:$0xff] %vm153, %v5382
    %5447 = vst.msk [vmem:[#allocation6 + $0xe8] sm:$0xff] %vm153, %v5383
    %5448 = vst.msk [vmem:[#allocation6 + $0xf0] sm:$0xff] %vm153, %v5384
    %5449 = vst.msk [vmem:[#allocation6 + $0xf8] sm:$0xff] %vm153, %v5385
    %5450 = vst.msk [vmem:[#allocation6 + $0x100] sm:$0xff] %vm153, %v5386
    %5451 = vst.msk [vmem:[#allocation6 + $0x108] sm:$0xff] %vm153, %v5387
    %5452 = vst.msk [vmem:[#allocation6 + $0x110] sm:$0xff] %vm153, %v5388
    %5453 = vst.msk [vmem:[#allocation6 + $0x118] sm:$0xff] %vm153, %v5389
    %5454 = vst.msk [vmem:[#allocation6 + $0x120] sm:$0xff] %vm153, %v5390
    %5455 = vst.msk [vmem:[#allocation6 + $0x128] sm:$0xff] %vm153, %v5391
    %5456 = vst.msk [vmem:[#allocation6 + $0x130] sm:$0xff] %vm153, %v5392
    %5457 = vst.msk [vmem:[#allocation6 + $0x138] sm:$0xff] %vm153, %v5393
    %5458 = vst.msk [vmem:[#allocation6 + $0x140] sm:$0xff] %vm153, %v5394
    %5459 = vst.msk [vmem:[#allocation6 + $0x148] sm:$0xff] %vm153, %v5395
    %5460 = vst.msk [vmem:[#allocation6 + $0x150] sm:$0xff] %vm153, %v5396
    %5461 = vst.msk [vmem:[#allocation6 + $0x158] sm:$0xff] %vm153, %v5397
    %5462 = vst.msk [vmem:[#allocation6 + $0x160] sm:$0xff] %vm153, %v5398
    %5463 = vst.msk [vmem:[#allocation6 + $0x168] sm:$0xff] %vm153, %v5399
    %5464 = vst.msk [vmem:[#allocation6 + $0x170] sm:$0xff] %vm153, %v5400
    %5465 = vst.msk [vmem:[#allocation6 + $0x178] sm:$0xff] %vm153, %v5401
    %5466 = vst.msk [vmem:[#allocation6 + $0x180] sm:$0xff] %vm153, %v5402
    %5467 = vst.msk [vmem:[#allocation6 + $0x188] sm:$0xff] %vm153, %v5403
    %5468 = vst.msk [vmem:[#allocation6 + $0x190] sm:$0xff] %vm153, %v5404
    %5469 = vst.msk [vmem:[#allocation6 + $0x198] sm:$0xff] %vm153, %v5405
    %5470 = vst.msk [vmem:[#allocation6 + $0x1a0] sm:$0xff] %vm153, %v5406
    %5471 = vst.msk [vmem:[#allocation6 + $0x1a8] sm:$0xff] %vm153, %v5407
    %5472 = vst.msk [vmem:[#allocation6 + $0x1b0] sm:$0xff] %vm153, %v5408
    %5473 = vst.msk [vmem:[#allocation6 + $0x1b8] sm:$0xff] %vm153, %v5409
    %5474 = vst.msk [vmem:[#allocation6 + $0x1c0] sm:$0xff] %vm153, %v5410
    %5475 = vst.msk [vmem:[#allocation6 + $0x1c8] sm:$0xff] %vm153, %v5411
    %5476 = vst.msk [vmem:[#allocation6 + $0x1d0] sm:$0xff] %vm153, %v5412
    %5477 = vst.msk [vmem:[#allocation6 + $0x1d8] sm:$0xff] %vm153, %v5413
    %5478 = vst.msk [vmem:[#allocation6 + $0x1e0] sm:$0xff] %vm153, %v5414
    %5479 = vst.msk [vmem:[#allocation6 + $0x1e8] sm:$0xff] %vm153, %v5415
    %5480 = vst.msk [vmem:[#allocation6 + $0x1f0] sm:$0xff] %vm153, %v5416
    %5481 = vst.msk [vmem:[#allocation6 + $0x1f8] sm:$0xff] %vm153, %v5417
    // Predicated region
    $region34: #{tpu_custom_call.1} parent=1 // pred_check
      _
    $region35: #{tpu_custom_call.1} parent=1 // pred_check_branch
      %5483 = sbr.rel (0) target = $region37
    $region36: #{tpu_custom_call.1} parent=1 // pred_region
      %s5485 = ssub.s32 8192, 8192
      %5486 = vsyncadd [#allocation5], %s5485
      %s5487 = sshll.u32 [#allocation6], 4
      %s5488 = int_to_ptr.vmem [resolvable:$true] %s5487
      %5493 = dma.vmem_to_hbm [thread:$0]  %s5488, 8192, %s7, [#allocation5], 128, 128, 8
    $region37: #{tpu_custom_call.1} parent=1 // pred_fallthru
      _
    // Predicated region
    $region38: #{tpu_custom_call.1} parent=1 // pred_check
      _
    $region39: #{tpu_custom_call.1} parent=1 // pred_check_branch
      %5495 = sbr.rel (0) target = $region41
    $region40: #{tpu_custom_call.1} parent=1 // pred_region
      %5496 = dma.done [#allocation5], 8192
    $region41: #{tpu_custom_call.1} parent=1 // pred_fallthru
      _
    %5497 = vsyncpa [#allocation4], 1
    %5498 = vsyncpa [#allocation5], 1

</llo_original>
